<compile_context>
chip_gen: v7x
topology: tpu7x:2x2x1
jax: 0.10.0
libtpu: 0.0.40
codegen_flags: <defaults>
</compile_context>

<pallas_src>
import jax
import jax.numpy as jnp
from jax.experimental import pallas as pl
from jax.experimental.pallas import tpu as pltpu

_LN_EPS = 1e-6  # ShiftblockTransformer uses partial(nn.LayerNorm, eps=1e-6)


# ----------------------------- in-kernel math ------------------------------
def _layernorm(x, gamma, beta):
    mu = jnp.mean(x, axis=-1, keepdims=True)
    var = jnp.mean((x - mu) ** 2, axis=-1, keepdims=True)
    return (x - mu) * jax.lax.rsqrt(var + _LN_EPS) * gamma + beta


def _gelu_tanh(x):
    # tanh-form GELU: tanh goes to the EUP slot instead of a long VALU erf
    # polynomial (max abs deviation from exact-erf GELU ~1e-3).
    c = 0.7978845608028654  # sqrt(2/pi)
    return 0.5 * x * (1.0 + jnp.tanh(c * (x + 0.044715 * x * x * x)))


def _softmax_last(s):
    m = jnp.max(s, axis=-1, keepdims=True)
    e = jnp.exp(s - m)
    return e * pl.reciprocal(jnp.sum(e, axis=-1, keepdims=True), approx=True)


# --------------------------------- kernel ----------------------------------
def make_sblock_kernel(num_heads):
    H = num_heads

    def kernel(x_ref, g1_ref, b1_ref, wqkv_ref, bqkv_ref, wproj_ref, bproj_ref,
               g2_ref, b2_ref, w1_ref, bm1_ref, w2_ref, bm2_ref,
               o_ref, qkv_scr, head_scr):
        xg = x_ref[...]                               # (G, S, C) f32
        G, S, C = xg.shape
        Dh = C // H
        R = G * S
        x = xg.reshape(R, C)                          # all dense matmuls on R rows

        # ------------------- attention branch: x + Attn(LN1(x)) -------------
        xn = _layernorm(x, g1_ref[0], b1_ref[0]).astype(jnp.bfloat16)

        # Single full-lane QKV matmul for all heads (scale + bias folded into
        # the q columns host-side); staged in a bf16 VMEM scratch so per-head
        # slices are cheap ref loads rather than extra MXU passes.
        qkv = jnp.dot(xn, wqkv_ref[...],
                      preferred_element_type=jnp.float32) + bqkv_ref[0]
        qkv_scr[...] = qkv.astype(jnp.bfloat16)       # (R, 3C)

        # Static unroll over heads (H in {1,2,4,8}); each head's temporaries
        # (s, p, o) die at the scratch store, so the live set stays one head.
        # (A fori_loop would force dynamic lane offsets h*Dh, which lower
        # poorly; static offsets are handled as cheap masked loads/stores.)
        for h in range(H):
            q = qkv_scr[:, h * Dh:(h + 1) * Dh].reshape(G, S, Dh)
            k = qkv_scr[:, C + h * Dh:C + (h + 1) * Dh].reshape(G, S, Dh)
            v = qkv_scr[:, 2 * C + h * Dh:2 * C + (h + 1) * Dh].reshape(G, S, Dh)
            # per-segment attention, batched over the G segments of this tile
            # TODO(synk): for very large S (v7x 64 MiB VMEM) switch to
            # flash-style KV tiling / online softmax instead of full (G,S,S).
            s = jnp.einsum('gqd,gkd->gqk', q, k,
                           preferred_element_type=jnp.float32)   # (G, S, S)
            p = _softmax_last(s).astype(jnp.bfloat16)
            o = jnp.einsum('gqk,gkd->gqd', p, v,
                           preferred_element_type=jnp.float32)   # (G, S, Dh)
            head_scr[:, h * Dh:(h + 1) * Dh] = (
                o.reshape(R, Dh).astype(jnp.bfloat16))

        # One fused output-projection matmul over all heads.
        attn = jnp.dot(head_scr[...], wproj_ref[...],
                       preferred_element_type=jnp.float32) + bproj_ref[0]
        x = x + attn

        # ----------------------- MLP branch: x + MLP(LN2(x)) ----------------
        xn2 = _layernorm(x, g2_ref[0], b2_ref[0]).astype(jnp.bfloat16)
        h1 = jnp.dot(xn2, w1_ref[...],
                     preferred_element_type=jnp.float32) + bm1_ref[0]
        h1 = _gelu_tanh(h1).astype(jnp.bfloat16)
        mlp = jnp.dot(h1, w2_ref[...],
                      preferred_element_type=jnp.float32) + bm2_ref[0]

        # TODO(synk): if production C < 128, present the activation I/O as a
        # lane-dense slab to avoid masked vst on the final store.
        o_ref[...] = (x + mlp).reshape(G, S, C).astype(o_ref.dtype)

    return kernel


# ------------------------------ spec helpers --------------------------------
def _const_spec(shape, single_buffer):
    nd = len(shape)
    idx = lambda i, _nd=nd: (0,) * _nd
    if single_buffer:
        # constant index_map -> double-buffering is pure VMEM waste
        return pl.BlockSpec(shape, idx, pipeline_mode=pl.Buffered(1))
    return pl.BlockSpec(shape, idx)


def _vmem_limit_bytes():
    """Physical VMEM minus headroom for Mosaic internal scratch / I/O."""
    try:
        cap = pltpu.get_tpu_info().vmem_capacity_bytes
    except Exception:
        cap = 64 * 1024 * 1024            # conservative (v7x-sized) fallback
    return max(cap - 16 * 1024 * 1024, 32 * 1024 * 1024)


def _choose_group(n_seg, seg_len, dim, hidden, act_budget_bytes,
                  target_rows=256, min_steps=2):
    """Segments per grid step: large enough to reach ~target_rows of MXU work,
    but (a) within the VMEM activation budget (MLP hidden + score tiles) and
    (b) keeping >= min_steps grid steps so the 'parallel' axis can shard
    across both TensorCores on v7x."""
    def step_bytes(g):
        r = g * seg_len
        return (4 * r * dim * 4                      # double-buffered in/out f32
                + r * 3 * dim * 2 + r * dim * 2      # bf16 qkv / head scratches
                + g * seg_len * seg_len * 6          # f32 scores + bf16 probs
                + r * hidden * 6)                    # f32 h1 + bf16 copy

    divisors = [g for g in range(1, n_seg + 1) if n_seg % g == 0]
    allowed = [g for g in divisors
               if step_bytes(g) <= act_budget_bytes
               and (n_seg // g >= min_steps or n_seg < min_steps)]
    if not allowed:
        allowed = [1]
    hit = [g for g in allowed if g * seg_len >= target_rows]
    return min(hit) if hit else max(allowed)


# ------------------------- one-time weight preprocessing --------------------
def prepare_params(params, *, num_heads):
    """Fold the softmax scale into the q weights/bias and cast matmul weights
    to bf16. Done ONCE (eagerly) so the casts/folds are not re-emitted as XLA
    ops on every forward call."""
    C = params["wqkv"].shape[0]
    Dh = C // num_heads
    scale = Dh ** (-0.5)                  # qk_scale default: head_dim ** -0.5
    f32, bf16 = jnp.float32, jnp.bfloat16

    qscale = jnp.concatenate([jnp.full((C,), scale, f32),
                              jnp.ones((2 * C,), f32)])
    wqkv = (params["wqkv"].astype(f32) * qscale[None, :]).astype(bf16)
    bqkv = (params["bqkv"].astype(f32) * qscale[None, :]).astype(f32)

    return {
        "g1": params["g1"], "b1": params["b1"],
        "wqkv": wqkv, "bqkv": bqkv,
        "wproj": params["wproj"].astype(bf16), "bproj": params["bproj"],
        "g2": params["g2"], "b2": params["b2"],
        "w1": params["w1"].astype(bf16), "bm1": params["bm1"],
        "w2": params["w2"].astype(bf16), "bm2": params["bm2"],
    }


# -------------------------------- wrapper -----------------------------------
def sblock_forward(x, w, *, num_heads, block=-1):
    B, L, C = x.shape
    S = L if block == -1 else block
    assert (B * L) % S == 0, "block must evenly divide the token count"
    assert C % num_heads == 0
    n_seg = (B * L) // S
    hidden = w["w1"].shape[1]

    vmem_limit = _vmem_limit_bytes()
    w_bytes = sum(int(v.size) * v.dtype.itemsize for v in w.values())
    act_budget = max(int(0.6 * (vmem_limit - w_bytes)), 1 << 20)
    G = _choose_group(n_seg, S, C, hidden, act_budget)
    n_steps = n_seg // G
    R = G * S

    xs = x.reshape(n_seg, S, C)
    weights = (w["g1"], w["b1"], w["wqkv"], w["bqkv"], w["wproj"], w["bproj"],
               w["g2"], w["b2"], w["w1"], w["bm1"], w["w2"], w["bm2"])

    def run(single_buffer_weights):
        return pl.pallas_call(
            make_sblock_kernel(num_heads),
            out_shape=jax.ShapeDtypeStruct((n_seg, S, C), x.dtype),
            grid=(n_steps,),
            in_specs=[pl.BlockSpec((G, S, C), lambda i: (i, 0, 0))]
                     + [_const_spec(t.shape, single_buffer_weights)
                        for t in weights],
            out_specs=pl.BlockSpec((G, S, C), lambda i: (i, 0, 0)),
            scratch_shapes=[pltpu.VMEM((R, 3 * C), jnp.bfloat16),   # qkv stage
                            pltpu.VMEM((R, C), jnp.bfloat16)],      # head outs
            compiler_params=pltpu.CompilerParams(
                dimension_semantics=("parallel",),
                vmem_limit_bytes=vmem_limit),
        )(xs, *weights)

    try:
        out = run(True)
    except Exception:
        # pl.Buffered(1) single-buffered weights not supported on this
        # jax/libtpu -> fall back to default (double-buffered) weight specs.
        out = run(False)
    return out.reshape(B, L, C)


# ------------------------- deterministic parameters -------------------------
def init_params(key, dim, mlp_ratio=4.0):
    hidden = int(dim * mlp_ratio)
    ks = jax.random.split(key, 9)
    f32 = jnp.float32
    return {
        "g1": (1.0 + 0.01 * jax.random.normal(ks[0], (1, dim))).astype(f32),
        "b1": (0.01 * jax.random.normal(ks[1], (1, dim))).astype(f32),
        "g2": (1.0 + 0.01 * jax.random.normal(ks[2], (1, dim))).astype(f32),
        "b2": (0.01 * jax.random.normal(ks[3], (1, dim))).astype(f32),
        "wqkv": (0.05 * jax.random.normal(ks[4], (dim, 3 * dim))).astype(f32),
        "bqkv": (0.01 * jax.random.normal(ks[8], (1, 3 * dim))).astype(f32),
        "wproj": (0.05 * jax.random.normal(ks[5], (dim, dim))).astype(f32),
        "bproj": jnp.zeros((1, dim), f32),
        "w1": (0.05 * jax.random.normal(ks[6], (dim, hidden))).astype(f32),
        "bm1": jnp.zeros((1, hidden), f32),
        "w2": (0.05 * jax.random.normal(ks[7], (hidden, dim))).astype(f32),
        "bm2": jnp.zeros((1, dim), f32),
    }


# ----------------------------- pure-JAX reference ---------------------------
def sblock_reference(x, p, *, num_heads, block=-1):
    def ln(t, g, b):
        mu = t.mean(-1, keepdims=True)
        var = ((t - mu) ** 2).mean(-1, keepdims=True)
        return (t - mu) / jnp.sqrt(var + _LN_EPS) * g + b

    B, L, C = x.shape
    S = L if block == -1 else block
    H, Dh = num_heads, C // num_heads

    xn = ln(x, p["g1"][0], p["b1"][0]).reshape(-1, S, C)
    qkv = (xn @ p["wqkv"] + p["bqkv"][0]).reshape(-1, S, 3, H, Dh)
    qkv = qkv.transpose(2, 0, 3, 1, 4)
    q, k, v = qkv[0], qkv[1], qkv[2]
    attn = jax.nn.softmax((q @ jnp.swapaxes(k, -2, -1)) * Dh ** -0.5, axis=-1)
    a = (attn @ v).transpose(0, 2, 1, 3).reshape(-1, S, C)
    a = a @ p["wproj"] + p["bproj"][0]
    x = x + a.reshape(B, L, C)

    xn2 = ln(x, p["g2"][0], p["b2"][0])
    h = jax.nn.gelu(xn2 @ p["w1"] + p["bm1"][0], approximate=False)
    return x + (h @ p["w2"] + p["bm2"][0])


# ----------------------------------- main ------------------------------------
if __name__ == "__main__":
    ks = jax.random.split(jax.random.PRNGKey(0), 4)

    # config 1: SBlock(dim=32, num_heads=8), block=-1 (whole-sequence attention)
    x1 = jax.random.normal(ks[0], (2, 8, 32), dtype=jnp.float32)
    p1 = init_params(ks[1], 32, mlp_ratio=4.0)
    w1 = prepare_params(p1, num_heads=8)
    o1 = jax.block_until_ready(sblock_forward(x1, w1, num_heads=8, block=-1))
    r1 = sblock_reference(x1, p1, num_heads=8, block=-1)
    assert o1.shape == x1.shape
    assert jnp.allclose(o1, r1, atol=2e-2, rtol=2e-2), (
        float(jnp.max(jnp.abs(o1 - r1))))

    # config 2: stage-1-like SBlock(dim=64, num_heads=1, block=64)
    x2 = jax.random.normal(ks[2], (2, 128, 64), dtype=jnp.float32)
    p2 = init_params(ks[3], 64, mlp_ratio=4.0)
    w2 = prepare_params(p2, num_heads=1)
    o2 = jax.block_until_ready(sblock_forward(x2, w2, num_heads=1, block=64))
    r2 = sblock_reference(x2, p2, num_heads=1, block=64)
    assert o2.shape == x2.shape
    assert jnp.allclose(o2, r2, atol=2e-2, rtol=2e-2), (
        float(jnp.max(jnp.abs(o2 - r2))))

    print("KERNEL_OK")
</pallas_src>

<mosaic_0001>
module attributes {stable_mosaic.version = 11 : i64} {
  func.func @kernel(%arg0: i32, %arg1: memref<1x8x32xf32, #tpu.memory_space<vmem>>, %arg2: memref<1x32xf32, #tpu.memory_space<vmem>>, %arg3: memref<1x32xf32, #tpu.memory_space<vmem>>, %arg4: memref<32x96xbf16, #tpu.memory_space<vmem>>, %arg5: memref<1x96xf32, #tpu.memory_space<vmem>>, %arg6: memref<32x32xbf16, #tpu.memory_space<vmem>>, %arg7: memref<1x32xf32, #tpu.memory_space<vmem>>, %arg8: memref<1x32xf32, #tpu.memory_space<vmem>>, %arg9: memref<1x32xf32, #tpu.memory_space<vmem>>, %arg10: memref<32x128xbf16, #tpu.memory_space<vmem>>, %arg11: memref<1x128xf32, #tpu.memory_space<vmem>>, %arg12: memref<128x32xbf16, #tpu.memory_space<vmem>>, %arg13: memref<1x32xf32, #tpu.memory_space<vmem>>, %arg14: memref<1x8x32xf32, #tpu.memory_space<vmem>>, %arg15: memref<8x96xbf16, #tpu.memory_space<vmem>>, %arg16: memref<8x32xbf16, #tpu.memory_space<vmem>>) attributes {dimension_semantics = [#tpu.dimension_semantics<parallel>], iteration_bounds = array<i64: 2>, scalar_prefetch = 0 : i64, scratch_operands = 2 : i64, tpu.core_type = #tpu.core_type<tc>, window_params = [{transform_indices = @transform_0, window_bounds = array<i64: 1, 8, 32>}, {pipeline_mode = #tpu.pipeline_mode<synchronous>, transform_indices = @transform_1, window_bounds = array<i64: 1, 32>}, {pipeline_mode = #tpu.pipeline_mode<synchronous>, transform_indices = @transform_2, window_bounds = array<i64: 1, 32>}, {pipeline_mode = #tpu.pipeline_mode<synchronous>, transform_indices = @transform_3, window_bounds = array<i64: 32, 96>}, {pipeline_mode = #tpu.pipeline_mode<synchronous>, transform_indices = @transform_4, window_bounds = array<i64: 1, 96>}, {pipeline_mode = #tpu.pipeline_mode<synchronous>, transform_indices = @transform_5, window_bounds = array<i64: 32, 32>}, {pipeline_mode = #tpu.pipeline_mode<synchronous>, transform_indices = @transform_6, window_bounds = array<i64: 1, 32>}, {pipeline_mode = #tpu.pipeline_mode<synchronous>, transform_indices = @transform_7, window_bounds = array<i64: 1, 32>}, {pipeline_mode = #tpu.pipeline_mode<synchronous>, transform_indices = @transform_8, window_bounds = array<i64: 1, 32>}, {pipeline_mode = #tpu.pipeline_mode<synchronous>, transform_indices = @transform_9, window_bounds = array<i64: 32, 128>}, {pipeline_mode = #tpu.pipeline_mode<synchronous>, transform_indices = @transform_10, window_bounds = array<i64: 1, 128>}, {pipeline_mode = #tpu.pipeline_mode<synchronous>, transform_indices = @transform_11, window_bounds = array<i64: 128, 32>}, {pipeline_mode = #tpu.pipeline_mode<synchronous>, transform_indices = @transform_12, window_bounds = array<i64: 1, 32>}, {transform_indices = @transform_13, window_bounds = array<i64: 1, 8, 32>}]} {
    %c0 = arith.constant 0 : index
    %c0_0 = arith.constant 0 : index
    %c0_1 = arith.constant 0 : index
    %0 = vector.load %arg1[%c0, %c0_0, %c0_1] : memref<1x8x32xf32, #tpu.memory_space<vmem>>, vector<1x8x32xf32>
    %1 = vector.shape_cast %0 : vector<1x8x32xf32> to vector<8x32xf32>
    %c0_2 = arith.constant 0 : index
    %c0_3 = arith.constant 0 : index
    %2 = vector.load %arg2[%c0_2, %c0_3] : memref<1x32xf32, #tpu.memory_space<vmem>>, vector<1x32xf32>
    %3 = vector.shape_cast %2 : vector<1x32xf32> to vector<32xf32>
    %c0_4 = arith.constant 0 : index
    %c0_5 = arith.constant 0 : index
    %4 = vector.load %arg3[%c0_4, %c0_5] : memref<1x32xf32, #tpu.memory_space<vmem>>, vector<1x32xf32>
    %5 = vector.shape_cast %4 : vector<1x32xf32> to vector<32xf32>
    %cst = arith.constant dense<0.000000e+00> : vector<8xf32>
    %6 = vector.multi_reduction <add>, %1, %cst [1] : vector<8x32xf32> to vector<8xf32>
    %7 = vector.shape_cast %6 : vector<8xf32> to vector<8x1xf32>
    %cst_6 = arith.constant 3.200000e+01 : f32
    %8 = vector.broadcast %cst_6 : f32 to vector<8x1xf32>
    %9 = arith.divf %7, %8 : vector<8x1xf32>
    %10 = vector.broadcast %9 : vector<8x1xf32> to vector<8x32xf32>
    %11 = arith.subf %1, %10 : vector<8x32xf32>
    %12 = arith.mulf %11, %11 : vector<8x32xf32>
    %cst_7 = arith.constant dense<0.000000e+00> : vector<8xf32>
    %13 = vector.multi_reduction <add>, %12, %cst_7 [1] : vector<8x32xf32> to vector<8xf32>
    %14 = vector.shape_cast %13 : vector<8xf32> to vector<8x1xf32>
    %cst_8 = arith.constant 3.200000e+01 : f32
    %15 = vector.broadcast %cst_8 : f32 to vector<8x1xf32>
    %16 = arith.divf %14, %15 : vector<8x1xf32>
    %17 = vector.broadcast %9 : vector<8x1xf32> to vector<8x32xf32>
    %18 = arith.subf %1, %17 : vector<8x32xf32>
    %cst_9 = arith.constant 9.99999997E-7 : f32
    %19 = vector.broadcast %cst_9 : f32 to vector<8x1xf32>
    %20 = arith.addf %16, %19 : vector<8x1xf32>
    %21 = math.rsqrt %20 : vector<8x1xf32>
    %22 = vector.broadcast %21 : vector<8x1xf32> to vector<8x32xf32>
    %23 = arith.mulf %18, %22 : vector<8x32xf32>
    %24 = vector.shape_cast %3 : vector<32xf32> to vector<1x32xf32>
    %25 = vector.broadcast %24 : vector<1x32xf32> to vector<8x32xf32>
    %26 = arith.mulf %23, %25 : vector<8x32xf32>
    %27 = vector.shape_cast %5 : vector<32xf32> to vector<1x32xf32>
    %28 = vector.broadcast %27 : vector<1x32xf32> to vector<8x32xf32>
    %29 = arith.addf %26, %28 : vector<8x32xf32>
    %30 = arith.truncf %29 : vector<8x32xf32> to vector<8x32xbf16>
    %c0_10 = arith.constant 0 : index
    %c0_11 = arith.constant 0 : index
    %31 = vector.load %arg4[%c0_10, %c0_11] : memref<32x96xbf16, #tpu.memory_space<vmem>>, vector<32x96xbf16>
    %cst_12 = arith.constant dense<0.000000e+00> : vector<8x96xf32>
    %32 = tpu.matmul %30, %31, %cst_12 {dimension_numbers = #tpu.dot_dimension_numbers<[1], [0], [0], [1], [0, 0, 1, 1], [], []>} : vector<8x32xbf16>, vector<32x96xbf16>, vector<8x96xf32> -> vector<8x96xf32>
    %c0_13 = arith.constant 0 : index
    %c0_14 = arith.constant 0 : index
    %33 = vector.load %arg5[%c0_13, %c0_14] : memref<1x96xf32, #tpu.memory_space<vmem>>, vector<1x96xf32>
    %34 = vector.shape_cast %33 : vector<1x96xf32> to vector<96xf32>
    %35 = vector.shape_cast %34 : vector<96xf32> to vector<1x96xf32>
    %36 = vector.broadcast %35 : vector<1x96xf32> to vector<8x96xf32>
    %37 = arith.addf %32, %36 : vector<8x96xf32>
    %38 = arith.truncf %37 : vector<8x96xf32> to vector<8x96xbf16>
    %c0_15 = arith.constant 0 : index
    %c0_16 = arith.constant 0 : index
    %39 = vector.load %arg15[%c0_15, %c0_16] : memref<8x96xbf16, #tpu.memory_space<vmem>>, vector<8x96xbf16>
    tpu.vector_store %arg15[%c0_15, %c0_16], %38 {strides = array<i32>} : memref<8x96xbf16, #tpu.memory_space<vmem>>, vector<8x96xbf16>,
    %c0_17 = arith.constant 0 : index
    %c0_18 = arith.constant 0 : index
    %40 = vector.load %arg15[%c0_17, %c0_18] : memref<8x96xbf16, #tpu.memory_space<vmem>>, vector<8x4xbf16>
    %41 = vector.shape_cast %40 : vector<8x4xbf16> to vector<1x8x4xbf16>
    %c0_19 = arith.constant 0 : index
    %c32 = arith.constant 32 : index
    %42 = vector.load %arg15[%c0_19, %c32] : memref<8x96xbf16, #tpu.memory_space<vmem>>, vector<8x4xbf16>
    %43 = vector.shape_cast %42 : vector<8x4xbf16> to vector<1x8x4xbf16>
    %c0_20 = arith.constant 0 : index
    %c64 = arith.constant 64 : index
    %44 = vector.load %arg15[%c0_20, %c64] : memref<8x96xbf16, #tpu.memory_space<vmem>>, vector<8x4xbf16>
    %45 = vector.shape_cast %44 : vector<8x4xbf16> to vector<1x8x4xbf16>
    "tpu.trace_start"() <{level = 10 : i32, message = "gqd,gkd->gqk"}> : () -> ()
    %cst_21 = arith.constant dense<0.000000e+00> : vector<1x8x8xf32>
    %46 = tpu.matmul %41, %43, %cst_21 {dimension_numbers = #tpu.dot_dimension_numbers<[2], [2], [1], [1], [0, 0, 0, 1, 1, 1], [0], [0]>} : vector<1x8x4xbf16>, vector<1x8x4xbf16>, vector<1x8x8xf32> -> vector<1x8x8xf32>
    "tpu.trace_stop"() : () -> ()
    %cst_22 = arith.constant dense<0xFF800000> : vector<1x8xf32>
    %47 = vector.multi_reduction <maximumf>, %46, %cst_22 [2] : vector<1x8x8xf32> to vector<1x8xf32>
    %48 = vector.shape_cast %47 : vector<1x8xf32> to vector<1x8x1xf32>
    %49 = vector.broadcast %48 : vector<1x8x1xf32> to vector<1x8x8xf32>
    %50 = arith.subf %46, %49 : vector<1x8x8xf32>
    %51 = math.exp %50 : vector<1x8x8xf32>
    %cst_23 = arith.constant dense<0.000000e+00> : vector<1x8xf32>
    %52 = vector.multi_reduction <add>, %51, %cst_23 [2] : vector<1x8x8xf32> to vector<1x8xf32>
    %53 = vector.shape_cast %52 : vector<1x8xf32> to vector<1x8x1xf32>
    %54 = tpu.reciprocal %53 {approx = true} : vector<1x8x1xf32> -> vector<1x8x1xf32>
    %55 = vector.broadcast %54 : vector<1x8x1xf32> to vector<1x8x8xf32>
    %56 = arith.mulf %51, %55 : vector<1x8x8xf32>
    %57 = arith.truncf %56 : vector<1x8x8xf32> to vector<1x8x8xbf16>
    "tpu.trace_start"() <{level = 10 : i32, message = "gqk,gkd->gqd"}> : () -> ()
    %cst_24 = arith.constant dense<0.000000e+00> : vector<1x8x4xf32>
    %58 = tpu.matmul %57, %45, %cst_24 {dimension_numbers = #tpu.dot_dimension_numbers<[2], [1], [1], [2], [0, 0, 0, 1, 1, 2], [0], [0]>} : vector<1x8x8xbf16>, vector<1x8x4xbf16>, vector<1x8x4xf32> -> vector<1x8x4xf32>
    "tpu.trace_stop"() : () -> ()
    %59 = vector.shape_cast %58 : vector<1x8x4xf32> to vector<8x4xf32>
    %60 = arith.truncf %59 : vector<8x4xf32> to vector<8x4xbf16>
    %c0_25 = arith.constant 0 : index
    %c0_26 = arith.constant 0 : index
    %61 = vector.load %arg16[%c0_25, %c0_26] : memref<8x32xbf16, #tpu.memory_space<vmem>>, vector<8x4xbf16>
    tpu.vector_store %arg16[%c0_25, %c0_26], %60 {strides = array<i32>} : memref<8x32xbf16, #tpu.memory_space<vmem>>, vector<8x4xbf16>,
    %c0_27 = arith.constant 0 : index
    %c4 = arith.constant 4 : index
    %62 = vector.load %arg15[%c0_27, %c4] : memref<8x96xbf16, #tpu.memory_space<vmem>>, vector<8x4xbf16>
    %63 = vector.shape_cast %62 : vector<8x4xbf16> to vector<1x8x4xbf16>
    %c0_28 = arith.constant 0 : index
    %c36 = arith.constant 36 : index
    %64 = vector.load %arg15[%c0_28, %c36] : memref<8x96xbf16, #tpu.memory_space<vmem>>, vector<8x4xbf16>
    %65 = vector.shape_cast %64 : vector<8x4xbf16> to vector<1x8x4xbf16>
    %c0_29 = arith.constant 0 : index
    %c68 = arith.constant 68 : index
    %66 = vector.load %arg15[%c0_29, %c68] : memref<8x96xbf16, #tpu.memory_space<vmem>>, vector<8x4xbf16>
    %67 = vector.shape_cast %66 : vector<8x4xbf16> to vector<1x8x4xbf16>
    "tpu.trace_start"() <{level = 10 : i32, message = "gqd,gkd->gqk"}> : () -> ()
    %cst_30 = arith.constant dense<0.000000e+00> : vector<1x8x8xf32>
    %68 = tpu.matmul %63, %65, %cst_30 {dimension_numbers = #tpu.dot_dimension_numbers<[2], [2], [1], [1], [0, 0, 0, 1, 1, 1], [0], [0]>} : vector<1x8x4xbf16>, vector<1x8x4xbf16>, vector<1x8x8xf32> -> vector<1x8x8xf32>
    "tpu.trace_stop"() : () -> ()
    %cst_31 = arith.constant dense<0xFF800000> : vector<1x8xf32>
    %69 = vector.multi_reduction <maximumf>, %68, %cst_31 [2] : vector<1x8x8xf32> to vector<1x8xf32>
    %70 = vector.shape_cast %69 : vector<1x8xf32> to vector<1x8x1xf32>
    %71 = vector.broadcast %70 : vector<1x8x1xf32> to vector<1x8x8xf32>
    %72 = arith.subf %68, %71 : vector<1x8x8xf32>
    %73 = math.exp %72 : vector<1x8x8xf32>
    %cst_32 = arith.constant dense<0.000000e+00> : vector<1x8xf32>
    %74 = vector.multi_reduction <add>, %73, %cst_32 [2] : vector<1x8x8xf32> to vector<1x8xf32>
    %75 = vector.shape_cast %74 : vector<1x8xf32> to vector<1x8x1xf32>
    %76 = tpu.reciprocal %75 {approx = true} : vector<1x8x1xf32> -> vector<1x8x1xf32>
    %77 = vector.broadcast %76 : vector<1x8x1xf32> to vector<1x8x8xf32>
    %78 = arith.mulf %73, %77 : vector<1x8x8xf32>
    %79 = arith.truncf %78 : vector<1x8x8xf32> to vector<1x8x8xbf16>
    "tpu.trace_start"() <{level = 10 : i32, message = "gqk,gkd->gqd"}> : () -> ()
    %cst_33 = arith.constant dense<0.000000e+00> : vector<1x8x4xf32>
    %80 = tpu.matmul %79, %67, %cst_33 {dimension_numbers = #tpu.dot_dimension_numbers<[2], [1], [1], [2], [0, 0, 0, 1, 1, 2], [0], [0]>} : vector<1x8x8xbf16>, vector<1x8x4xbf16>, vector<1x8x4xf32> -> vector<1x8x4xf32>
    "tpu.trace_stop"() : () -> ()
    %81 = vector.shape_cast %80 : vector<1x8x4xf32> to vector<8x4xf32>
    %82 = arith.truncf %81 : vector<8x4xf32> to vector<8x4xbf16>
    %c0_34 = arith.constant 0 : index
    %c4_35 = arith.constant 4 : index
    %83 = vector.load %arg16[%c0_34, %c4_35] : memref<8x32xbf16, #tpu.memory_space<vmem>>, vector<8x4xbf16>
    tpu.vector_store %arg16[%c0_34, %c4_35], %82 {strides = array<i32>} : memref<8x32xbf16, #tpu.memory_space<vmem>>, vector<8x4xbf16>,
    %c0_36 = arith.constant 0 : index
    %c8 = arith.constant 8 : index
    %84 = vector.load %arg15[%c0_36, %c8] : memref<8x96xbf16, #tpu.memory_space<vmem>>, vector<8x4xbf16>
    %85 = vector.shape_cast %84 : vector<8x4xbf16> to vector<1x8x4xbf16>
    %c0_37 = arith.constant 0 : index
    %c40 = arith.constant 40 : index
    %86 = vector.load %arg15[%c0_37, %c40] : memref<8x96xbf16, #tpu.memory_space<vmem>>, vector<8x4xbf16>
    %87 = vector.shape_cast %86 : vector<8x4xbf16> to vector<1x8x4xbf16>
    %c0_38 = arith.constant 0 : index
    %c72 = arith.constant 72 : index
    %88 = vector.load %arg15[%c0_38, %c72] : memref<8x96xbf16, #tpu.memory_space<vmem>>, vector<8x4xbf16>
    %89 = vector.shape_cast %88 : vector<8x4xbf16> to vector<1x8x4xbf16>
    "tpu.trace_start"() <{level = 10 : i32, message = "gqd,gkd->gqk"}> : () -> ()
    %cst_39 = arith.constant dense<0.000000e+00> : vector<1x8x8xf32>
    %90 = tpu.matmul %85, %87, %cst_39 {dimension_numbers = #tpu.dot_dimension_numbers<[2], [2], [1], [1], [0, 0, 0, 1, 1, 1], [0], [0]>} : vector<1x8x4xbf16>, vector<1x8x4xbf16>, vector<1x8x8xf32> -> vector<1x8x8xf32>
    "tpu.trace_stop"() : () -> ()
    %cst_40 = arith.constant dense<0xFF800000> : vector<1x8xf32>
    %91 = vector.multi_reduction <maximumf>, %90, %cst_40 [2] : vector<1x8x8xf32> to vector<1x8xf32>
    %92 = vector.shape_cast %91 : vector<1x8xf32> to vector<1x8x1xf32>
    %93 = vector.broadcast %92 : vector<1x8x1xf32> to vector<1x8x8xf32>
    %94 = arith.subf %90, %93 : vector<1x8x8xf32>
    %95 = math.exp %94 : vector<1x8x8xf32>
    %cst_41 = arith.constant dense<0.000000e+00> : vector<1x8xf32>
    %96 = vector.multi_reduction <add>, %95, %cst_41 [2] : vector<1x8x8xf32> to vector<1x8xf32>
    %97 = vector.shape_cast %96 : vector<1x8xf32> to vector<1x8x1xf32>
    %98 = tpu.reciprocal %97 {approx = true} : vector<1x8x1xf32> -> vector<1x8x1xf32>
    %99 = vector.broadcast %98 : vector<1x8x1xf32> to vector<1x8x8xf32>
    %100 = arith.mulf %95, %99 : vector<1x8x8xf32>
    %101 = arith.truncf %100 : vector<1x8x8xf32> to vector<1x8x8xbf16>
    "tpu.trace_start"() <{level = 10 : i32, message = "gqk,gkd->gqd"}> : () -> ()
    %cst_42 = arith.constant dense<0.000000e+00> : vector<1x8x4xf32>
    %102 = tpu.matmul %101, %89, %cst_42 {dimension_numbers = #tpu.dot_dimension_numbers<[2], [1], [1], [2], [0, 0, 0, 1, 1, 2], [0], [0]>} : vector<1x8x8xbf16>, vector<1x8x4xbf16>, vector<1x8x4xf32> -> vector<1x8x4xf32>
    "tpu.trace_stop"() : () -> ()
    %103 = vector.shape_cast %102 : vector<1x8x4xf32> to vector<8x4xf32>
    %104 = arith.truncf %103 : vector<8x4xf32> to vector<8x4xbf16>
    %c0_43 = arith.constant 0 : index
    %c8_44 = arith.constant 8 : index
    %105 = vector.load %arg16[%c0_43, %c8_44] : memref<8x32xbf16, #tpu.memory_space<vmem>>, vector<8x4xbf16>
    tpu.vector_store %arg16[%c0_43, %c8_44], %104 {strides = array<i32>} : memref<8x32xbf16, #tpu.memory_space<vmem>>, vector<8x4xbf16>,
    %c0_45 = arith.constant 0 : index
    %c12 = arith.constant 12 : index
    %106 = vector.load %arg15[%c0_45, %c12] : memref<8x96xbf16, #tpu.memory_space<vmem>>, vector<8x4xbf16>
    %107 = vector.shape_cast %106 : vector<8x4xbf16> to vector<1x8x4xbf16>
    %c0_46 = arith.constant 0 : index
    %c44 = arith.constant 44 : index
    %108 = vector.load %arg15[%c0_46, %c44] : memref<8x96xbf16, #tpu.memory_space<vmem>>, vector<8x4xbf16>
    %109 = vector.shape_cast %108 : vector<8x4xbf16> to vector<1x8x4xbf16>
    %c0_47 = arith.constant 0 : index
    %c76 = arith.constant 76 : index
    %110 = vector.load %arg15[%c0_47, %c76] : memref<8x96xbf16, #tpu.memory_space<vmem>>, vector<8x4xbf16>
    %111 = vector.shape_cast %110 : vector<8x4xbf16> to vector<1x8x4xbf16>
    "tpu.trace_start"() <{level = 10 : i32, message = "gqd,gkd->gqk"}> : () -> ()
    %cst_48 = arith.constant dense<0.000000e+00> : vector<1x8x8xf32>
    %112 = tpu.matmul %107, %109, %cst_48 {dimension_numbers = #tpu.dot_dimension_numbers<[2], [2], [1], [1], [0, 0, 0, 1, 1, 1], [0], [0]>} : vector<1x8x4xbf16>, vector<1x8x4xbf16>, vector<1x8x8xf32> -> vector<1x8x8xf32>
    "tpu.trace_stop"() : () -> ()
    %cst_49 = arith.constant dense<0xFF800000> : vector<1x8xf32>
    %113 = vector.multi_reduction <maximumf>, %112, %cst_49 [2] : vector<1x8x8xf32> to vector<1x8xf32>
    %114 = vector.shape_cast %113 : vector<1x8xf32> to vector<1x8x1xf32>
    %115 = vector.broadcast %114 : vector<1x8x1xf32> to vector<1x8x8xf32>
    %116 = arith.subf %112, %115 : vector<1x8x8xf32>
    %117 = math.exp %116 : vector<1x8x8xf32>
    %cst_50 = arith.constant dense<0.000000e+00> : vector<1x8xf32>
    %118 = vector.multi_reduction <add>, %117, %cst_50 [2] : vector<1x8x8xf32> to vector<1x8xf32>
    %119 = vector.shape_cast %118 : vector<1x8xf32> to vector<1x8x1xf32>
    %120 = tpu.reciprocal %119 {approx = true} : vector<1x8x1xf32> -> vector<1x8x1xf32>
    %121 = vector.broadcast %120 : vector<1x8x1xf32> to vector<1x8x8xf32>
    %122 = arith.mulf %117, %121 : vector<1x8x8xf32>
    %123 = arith.truncf %122 : vector<1x8x8xf32> to vector<1x8x8xbf16>
    "tpu.trace_start"() <{level = 10 : i32, message = "gqk,gkd->gqd"}> : () -> ()
    %cst_51 = arith.constant dense<0.000000e+00> : vector<1x8x4xf32>
    %124 = tpu.matmul %123, %111, %cst_51 {dimension_numbers = #tpu.dot_dimension_numbers<[2], [1], [1], [2], [0, 0, 0, 1, 1, 2], [0], [0]>} : vector<1x8x8xbf16>, vector<1x8x4xbf16>, vector<1x8x4xf32> -> vector<1x8x4xf32>
    "tpu.trace_stop"() : () -> ()
    %125 = vector.shape_cast %124 : vector<1x8x4xf32> to vector<8x4xf32>
    %126 = arith.truncf %125 : vector<8x4xf32> to vector<8x4xbf16>
    %c0_52 = arith.constant 0 : index
    %c12_53 = arith.constant 12 : index
    %127 = vector.load %arg16[%c0_52, %c12_53] : memref<8x32xbf16, #tpu.memory_space<vmem>>, vector<8x4xbf16>
    tpu.vector_store %arg16[%c0_52, %c12_53], %126 {strides = array<i32>} : memref<8x32xbf16, #tpu.memory_space<vmem>>, vector<8x4xbf16>,
    %c0_54 = arith.constant 0 : index
    %c16 = arith.constant 16 : index
    %128 = vector.load %arg15[%c0_54, %c16] : memref<8x96xbf16, #tpu.memory_space<vmem>>, vector<8x4xbf16>
    %129 = vector.shape_cast %128 : vector<8x4xbf16> to vector<1x8x4xbf16>
    %c0_55 = arith.constant 0 : index
    %c48 = arith.constant 48 : index
    %130 = vector.load %arg15[%c0_55, %c48] : memref<8x96xbf16, #tpu.memory_space<vmem>>, vector<8x4xbf16>
    %131 = vector.shape_cast %130 : vector<8x4xbf16> to vector<1x8x4xbf16>
    %c0_56 = arith.constant 0 : index
    %c80 = arith.constant 80 : index
    %132 = vector.load %arg15[%c0_56, %c80] : memref<8x96xbf16, #tpu.memory_space<vmem>>, vector<8x4xbf16>
    %133 = vector.shape_cast %132 : vector<8x4xbf16> to vector<1x8x4xbf16>
    "tpu.trace_start"() <{level = 10 : i32, message = "gqd,gkd->gqk"}> : () -> ()
    %cst_57 = arith.constant dense<0.000000e+00> : vector<1x8x8xf32>
    %134 = tpu.matmul %129, %131, %cst_57 {dimension_numbers = #tpu.dot_dimension_numbers<[2], [2], [1], [1], [0, 0, 0, 1, 1, 1], [0], [0]>} : vector<1x8x4xbf16>, vector<1x8x4xbf16>, vector<1x8x8xf32> -> vector<1x8x8xf32>
    "tpu.trace_stop"() : () -> ()
    %cst_58 = arith.constant dense<0xFF800000> : vector<1x8xf32>
    %135 = vector.multi_reduction <maximumf>, %134, %cst_58 [2] : vector<1x8x8xf32> to vector<1x8xf32>
    %136 = vector.shape_cast %135 : vector<1x8xf32> to vector<1x8x1xf32>
    %137 = vector.broadcast %136 : vector<1x8x1xf32> to vector<1x8x8xf32>
    %138 = arith.subf %134, %137 : vector<1x8x8xf32>
    %139 = math.exp %138 : vector<1x8x8xf32>
    %cst_59 = arith.constant dense<0.000000e+00> : vector<1x8xf32>
    %140 = vector.multi_reduction <add>, %139, %cst_59 [2] : vector<1x8x8xf32> to vector<1x8xf32>
    %141 = vector.shape_cast %140 : vector<1x8xf32> to vector<1x8x1xf32>
    %142 = tpu.reciprocal %141 {approx = true} : vector<1x8x1xf32> -> vector<1x8x1xf32>
    %143 = vector.broadcast %142 : vector<1x8x1xf32> to vector<1x8x8xf32>
    %144 = arith.mulf %139, %143 : vector<1x8x8xf32>
    %145 = arith.truncf %144 : vector<1x8x8xf32> to vector<1x8x8xbf16>
    "tpu.trace_start"() <{level = 10 : i32, message = "gqk,gkd->gqd"}> : () -> ()
    %cst_60 = arith.constant dense<0.000000e+00> : vector<1x8x4xf32>
    %146 = tpu.matmul %145, %133, %cst_60 {dimension_numbers = #tpu.dot_dimension_numbers<[2], [1], [1], [2], [0, 0, 0, 1, 1, 2], [0], [0]>} : vector<1x8x8xbf16>, vector<1x8x4xbf16>, vector<1x8x4xf32> -> vector<1x8x4xf32>
    "tpu.trace_stop"() : () -> ()
    %147 = vector.shape_cast %146 : vector<1x8x4xf32> to vector<8x4xf32>
    %148 = arith.truncf %147 : vector<8x4xf32> to vector<8x4xbf16>
    %c0_61 = arith.constant 0 : index
    %c16_62 = arith.constant 16 : index
    %149 = vector.load %arg16[%c0_61, %c16_62] : memref<8x32xbf16, #tpu.memory_space<vmem>>, vector<8x4xbf16>
    tpu.vector_store %arg16[%c0_61, %c16_62], %148 {strides = array<i32>} : memref<8x32xbf16, #tpu.memory_space<vmem>>, vector<8x4xbf16>,
    %c0_63 = arith.constant 0 : index
    %c20 = arith.constant 20 : index
    %150 = vector.load %arg15[%c0_63, %c20] : memref<8x96xbf16, #tpu.memory_space<vmem>>, vector<8x4xbf16>
    %151 = vector.shape_cast %150 : vector<8x4xbf16> to vector<1x8x4xbf16>
    %c0_64 = arith.constant 0 : index
    %c52 = arith.constant 52 : index
    %152 = vector.load %arg15[%c0_64, %c52] : memref<8x96xbf16, #tpu.memory_space<vmem>>, vector<8x4xbf16>
    %153 = vector.shape_cast %152 : vector<8x4xbf16> to vector<1x8x4xbf16>
    %c0_65 = arith.constant 0 : index
    %c84 = arith.constant 84 : index
    %154 = vector.load %arg15[%c0_65, %c84] : memref<8x96xbf16, #tpu.memory_space<vmem>>, vector<8x4xbf16>
    %155 = vector.shape_cast %154 : vector<8x4xbf16> to vector<1x8x4xbf16>
    "tpu.trace_start"() <{level = 10 : i32, message = "gqd,gkd->gqk"}> : () -> ()
    %cst_66 = arith.constant dense<0.000000e+00> : vector<1x8x8xf32>
    %156 = tpu.matmul %151, %153, %cst_66 {dimension_numbers = #tpu.dot_dimension_numbers<[2], [2], [1], [1], [0, 0, 0, 1, 1, 1], [0], [0]>} : vector<1x8x4xbf16>, vector<1x8x4xbf16>, vector<1x8x8xf32> -> vector<1x8x8xf32>
    "tpu.trace_stop"() : () -> ()
    %cst_67 = arith.constant dense<0xFF800000> : vector<1x8xf32>
    %157 = vector.multi_reduction <maximumf>, %156, %cst_67 [2] : vector<1x8x8xf32> to vector<1x8xf32>
    %158 = vector.shape_cast %157 : vector<1x8xf32> to vector<1x8x1xf32>
    %159 = vector.broadcast %158 : vector<1x8x1xf32> to vector<1x8x8xf32>
    %160 = arith.subf %156, %159 : vector<1x8x8xf32>
    %161 = math.exp %160 : vector<1x8x8xf32>
    %cst_68 = arith.constant dense<0.000000e+00> : vector<1x8xf32>
    %162 = vector.multi_reduction <add>, %161, %cst_68 [2] : vector<1x8x8xf32> to vector<1x8xf32>
    %163 = vector.shape_cast %162 : vector<1x8xf32> to vector<1x8x1xf32>
    %164 = tpu.reciprocal %163 {approx = true} : vector<1x8x1xf32> -> vector<1x8x1xf32>
    %165 = vector.broadcast %164 : vector<1x8x1xf32> to vector<1x8x8xf32>
    %166 = arith.mulf %161, %165 : vector<1x8x8xf32>
    %167 = arith.truncf %166 : vector<1x8x8xf32> to vector<1x8x8xbf16>
    "tpu.trace_start"() <{level = 10 : i32, message = "gqk,gkd->gqd"}> : () -> ()
    %cst_69 = arith.constant dense<0.000000e+00> : vector<1x8x4xf32>
    %168 = tpu.matmul %167, %155, %cst_69 {dimension_numbers = #tpu.dot_dimension_numbers<[2], [1], [1], [2], [0, 0, 0, 1, 1, 2], [0], [0]>} : vector<1x8x8xbf16>, vector<1x8x4xbf16>, vector<1x8x4xf32> -> vector<1x8x4xf32>
    "tpu.trace_stop"() : () -> ()
    %169 = vector.shape_cast %168 : vector<1x8x4xf32> to vector<8x4xf32>
    %170 = arith.truncf %169 : vector<8x4xf32> to vector<8x4xbf16>
    %c0_70 = arith.constant 0 : index
    %c20_71 = arith.constant 20 : index
    %171 = vector.load %arg16[%c0_70, %c20_71] : memref<8x32xbf16, #tpu.memory_space<vmem>>, vector<8x4xbf16>
    tpu.vector_store %arg16[%c0_70, %c20_71], %170 {strides = array<i32>} : memref<8x32xbf16, #tpu.memory_space<vmem>>, vector<8x4xbf16>,
    %c0_72 = arith.constant 0 : index
    %c24 = arith.constant 24 : index
    %172 = vector.load %arg15[%c0_72, %c24] : memref<8x96xbf16, #tpu.memory_space<vmem>>, vector<8x4xbf16>
    %173 = vector.shape_cast %172 : vector<8x4xbf16> to vector<1x8x4xbf16>
    %c0_73 = arith.constant 0 : index
    %c56 = arith.constant 56 : index
    %174 = vector.load %arg15[%c0_73, %c56] : memref<8x96xbf16, #tpu.memory_space<vmem>>, vector<8x4xbf16>
    %175 = vector.shape_cast %174 : vector<8x4xbf16> to vector<1x8x4xbf16>
    %c0_74 = arith.constant 0 : index
    %c88 = arith.constant 88 : index
    %176 = vector.load %arg15[%c0_74, %c88] : memref<8x96xbf16, #tpu.memory_space<vmem>>, vector<8x4xbf16>
    %177 = vector.shape_cast %176 : vector<8x4xbf16> to vector<1x8x4xbf16>
    "tpu.trace_start"() <{level = 10 : i32, message = "gqd,gkd->gqk"}> : () -> ()
    %cst_75 = arith.constant dense<0.000000e+00> : vector<1x8x8xf32>
    %178 = tpu.matmul %173, %175, %cst_75 {dimension_numbers = #tpu.dot_dimension_numbers<[2], [2], [1], [1], [0, 0, 0, 1, 1, 1], [0], [0]>} : vector<1x8x4xbf16>, vector<1x8x4xbf16>, vector<1x8x8xf32> -> vector<1x8x8xf32>
    "tpu.trace_stop"() : () -> ()
    %cst_76 = arith.constant dense<0xFF800000> : vector<1x8xf32>
    %179 = vector.multi_reduction <maximumf>, %178, %cst_76 [2] : vector<1x8x8xf32> to vector<1x8xf32>
    %180 = vector.shape_cast %179 : vector<1x8xf32> to vector<1x8x1xf32>
    %181 = vector.broadcast %180 : vector<1x8x1xf32> to vector<1x8x8xf32>
    %182 = arith.subf %178, %181 : vector<1x8x8xf32>
    %183 = math.exp %182 : vector<1x8x8xf32>
    %cst_77 = arith.constant dense<0.000000e+00> : vector<1x8xf32>
    %184 = vector.multi_reduction <add>, %183, %cst_77 [2] : vector<1x8x8xf32> to vector<1x8xf32>
    %185 = vector.shape_cast %184 : vector<1x8xf32> to vector<1x8x1xf32>
    %186 = tpu.reciprocal %185 {approx = true} : vector<1x8x1xf32> -> vector<1x8x1xf32>
    %187 = vector.broadcast %186 : vector<1x8x1xf32> to vector<1x8x8xf32>
    %188 = arith.mulf %183, %187 : vector<1x8x8xf32>
    %189 = arith.truncf %188 : vector<1x8x8xf32> to vector<1x8x8xbf16>
    "tpu.trace_start"() <{level = 10 : i32, message = "gqk,gkd->gqd"}> : () -> ()
    %cst_78 = arith.constant dense<0.000000e+00> : vector<1x8x4xf32>
    %190 = tpu.matmul %189, %177, %cst_78 {dimension_numbers = #tpu.dot_dimension_numbers<[2], [1], [1], [2], [0, 0, 0, 1, 1, 2], [0], [0]>} : vector<1x8x8xbf16>, vector<1x8x4xbf16>, vector<1x8x4xf32> -> vector<1x8x4xf32>
    "tpu.trace_stop"() : () -> ()
    %191 = vector.shape_cast %190 : vector<1x8x4xf32> to vector<8x4xf32>
    %192 = arith.truncf %191 : vector<8x4xf32> to vector<8x4xbf16>
    %c0_79 = arith.constant 0 : index
    %c24_80 = arith.constant 24 : index
    %193 = vector.load %arg16[%c0_79, %c24_80] : memref<8x32xbf16, #tpu.memory_space<vmem>>, vector<8x4xbf16>
    tpu.vector_store %arg16[%c0_79, %c24_80], %192 {strides = array<i32>} : memref<8x32xbf16, #tpu.memory_space<vmem>>, vector<8x4xbf16>,
    %c0_81 = arith.constant 0 : index
    %c28 = arith.constant 28 : index
    %194 = vector.load %arg15[%c0_81, %c28] : memref<8x96xbf16, #tpu.memory_space<vmem>>, vector<8x4xbf16>
    %195 = vector.shape_cast %194 : vector<8x4xbf16> to vector<1x8x4xbf16>
    %c0_82 = arith.constant 0 : index
    %c60 = arith.constant 60 : index
    %196 = vector.load %arg15[%c0_82, %c60] : memref<8x96xbf16, #tpu.memory_space<vmem>>, vector<8x4xbf16>
    %197 = vector.shape_cast %196 : vector<8x4xbf16> to vector<1x8x4xbf16>
    %c0_83 = arith.constant 0 : index
    %c92 = arith.constant 92 : index
    %198 = vector.load %arg15[%c0_83, %c92] : memref<8x96xbf16, #tpu.memory_space<vmem>>, vector<8x4xbf16>
    %199 = vector.shape_cast %198 : vector<8x4xbf16> to vector<1x8x4xbf16>
    "tpu.trace_start"() <{level = 10 : i32, message = "gqd,gkd->gqk"}> : () -> ()
    %cst_84 = arith.constant dense<0.000000e+00> : vector<1x8x8xf32>
    %200 = tpu.matmul %195, %197, %cst_84 {dimension_numbers = #tpu.dot_dimension_numbers<[2], [2], [1], [1], [0, 0, 0, 1, 1, 1], [0], [0]>} : vector<1x8x4xbf16>, vector<1x8x4xbf16>, vector<1x8x8xf32> -> vector<1x8x8xf32>
    "tpu.trace_stop"() : () -> ()
    %cst_85 = arith.constant dense<0xFF800000> : vector<1x8xf32>
    %201 = vector.multi_reduction <maximumf>, %200, %cst_85 [2] : vector<1x8x8xf32> to vector<1x8xf32>
    %202 = vector.shape_cast %201 : vector<1x8xf32> to vector<1x8x1xf32>
    %203 = vector.broadcast %202 : vector<1x8x1xf32> to vector<1x8x8xf32>
    %204 = arith.subf %200, %203 : vector<1x8x8xf32>
    %205 = math.exp %204 : vector<1x8x8xf32>
    %cst_86 = arith.constant dense<0.000000e+00> : vector<1x8xf32>
    %206 = vector.multi_reduction <add>, %205, %cst_86 [2] : vector<1x8x8xf32> to vector<1x8xf32>
    %207 = vector.shape_cast %206 : vector<1x8xf32> to vector<1x8x1xf32>
    %208 = tpu.reciprocal %207 {approx = true} : vector<1x8x1xf32> -> vector<1x8x1xf32>
    %209 = vector.broadcast %208 : vector<1x8x1xf32> to vector<1x8x8xf32>
    %210 = arith.mulf %205, %209 : vector<1x8x8xf32>
    %211 = arith.truncf %210 : vector<1x8x8xf32> to vector<1x8x8xbf16>
    "tpu.trace_start"() <{level = 10 : i32, message = "gqk,gkd->gqd"}> : () -> ()
    %cst_87 = arith.constant dense<0.000000e+00> : vector<1x8x4xf32>
    %212 = tpu.matmul %211, %199, %cst_87 {dimension_numbers = #tpu.dot_dimension_numbers<[2], [1], [1], [2], [0, 0, 0, 1, 1, 2], [0], [0]>} : vector<1x8x8xbf16>, vector<1x8x4xbf16>, vector<1x8x4xf32> -> vector<1x8x4xf32>
    "tpu.trace_stop"() : () -> ()
    %213 = vector.shape_cast %212 : vector<1x8x4xf32> to vector<8x4xf32>
    %214 = arith.truncf %213 : vector<8x4xf32> to vector<8x4xbf16>
    %c0_88 = arith.constant 0 : index
    %c28_89 = arith.constant 28 : index
    %215 = vector.load %arg16[%c0_88, %c28_89] : memref<8x32xbf16, #tpu.memory_space<vmem>>, vector<8x4xbf16>
    tpu.vector_store %arg16[%c0_88, %c28_89], %214 {strides = array<i32>} : memref<8x32xbf16, #tpu.memory_space<vmem>>, vector<8x4xbf16>,
    %c0_90 = arith.constant 0 : index
    %c0_91 = arith.constant 0 : index
    %216 = vector.load %arg16[%c0_90, %c0_91] : memref<8x32xbf16, #tpu.memory_space<vmem>>, vector<8x32xbf16>
    %c0_92 = arith.constant 0 : index
    %c0_93 = arith.constant 0 : index
    %217 = vector.load %arg6[%c0_92, %c0_93] : memref<32x32xbf16, #tpu.memory_space<vmem>>, vector<32x32xbf16>
    %cst_94 = arith.constant dense<0.000000e+00> : vector<8x32xf32>
    %218 = tpu.matmul %216, %217, %cst_94 {dimension_numbers = #tpu.dot_dimension_numbers<[1], [0], [0], [1], [0, 0, 1, 1], [], []>} : vector<8x32xbf16>, vector<32x32xbf16>, vector<8x32xf32> -> vector<8x32xf32>
    %c0_95 = arith.constant 0 : index
    %c0_96 = arith.constant 0 : index
    %219 = vector.load %arg7[%c0_95, %c0_96] : memref<1x32xf32, #tpu.memory_space<vmem>>, vector<1x32xf32>
    %220 = vector.shape_cast %219 : vector<1x32xf32> to vector<32xf32>
    %221 = vector.shape_cast %220 : vector<32xf32> to vector<1x32xf32>
    %222 = vector.broadcast %221 : vector<1x32xf32> to vector<8x32xf32>
    %223 = arith.addf %218, %222 : vector<8x32xf32>
    %224 = arith.addf %1, %223 : vector<8x32xf32>
    %c0_97 = arith.constant 0 : index
    %c0_98 = arith.constant 0 : index
    %225 = vector.load %arg8[%c0_97, %c0_98] : memref<1x32xf32, #tpu.memory_space<vmem>>, vector<1x32xf32>
    %226 = vector.shape_cast %225 : vector<1x32xf32> to vector<32xf32>
    %c0_99 = arith.constant 0 : index
    %c0_100 = arith.constant 0 : index
    %227 = vector.load %arg9[%c0_99, %c0_100] : memref<1x32xf32, #tpu.memory_space<vmem>>, vector<1x32xf32>
    %228 = vector.shape_cast %227 : vector<1x32xf32> to vector<32xf32>
    %cst_101 = arith.constant dense<0.000000e+00> : vector<8xf32>
    %229 = vector.multi_reduction <add>, %224, %cst_101 [1] : vector<8x32xf32> to vector<8xf32>
    %230 = vector.shape_cast %229 : vector<8xf32> to vector<8x1xf32>
    %cst_102 = arith.constant 3.200000e+01 : f32
    %231 = vector.broadcast %cst_102 : f32 to vector<8x1xf32>
    %232 = arith.divf %230, %231 : vector<8x1xf32>
    %233 = vector.broadcast %232 : vector<8x1xf32> to vector<8x32xf32>
    %234 = arith.subf %224, %233 : vector<8x32xf32>
    %235 = arith.mulf %234, %234 : vector<8x32xf32>
    %cst_103 = arith.constant dense<0.000000e+00> : vector<8xf32>
    %236 = vector.multi_reduction <add>, %235, %cst_103 [1] : vector<8x32xf32> to vector<8xf32>
    %237 = vector.shape_cast %236 : vector<8xf32> to vector<8x1xf32>
    %cst_104 = arith.constant 3.200000e+01 : f32
    %238 = vector.broadcast %cst_104 : f32 to vector<8x1xf32>
    %239 = arith.divf %237, %238 : vector<8x1xf32>
    %240 = vector.broadcast %232 : vector<8x1xf32> to vector<8x32xf32>
    %241 = arith.subf %224, %240 : vector<8x32xf32>
    %cst_105 = arith.constant 9.99999997E-7 : f32
    %242 = vector.broadcast %cst_105 : f32 to vector<8x1xf32>
    %243 = arith.addf %239, %242 : vector<8x1xf32>
    %244 = math.rsqrt %243 : vector<8x1xf32>
    %245 = vector.broadcast %244 : vector<8x1xf32> to vector<8x32xf32>
    %246 = arith.mulf %241, %245 : vector<8x32xf32>
    %247 = vector.shape_cast %226 : vector<32xf32> to vector<1x32xf32>
    %248 = vector.broadcast %247 : vector<1x32xf32> to vector<8x32xf32>
    %249 = arith.mulf %246, %248 : vector<8x32xf32>
    %250 = vector.shape_cast %228 : vector<32xf32> to vector<1x32xf32>
    %251 = vector.broadcast %250 : vector<1x32xf32> to vector<8x32xf32>
    %252 = arith.addf %249, %251 : vector<8x32xf32>
    %253 = arith.truncf %252 : vector<8x32xf32> to vector<8x32xbf16>
    %c0_106 = arith.constant 0 : index
    %c0_107 = arith.constant 0 : index
    %254 = vector.load %arg10[%c0_106, %c0_107] : memref<32x128xbf16, #tpu.memory_space<vmem>>, vector<32x128xbf16>
    %cst_108 = arith.constant dense<0.000000e+00> : vector<8x128xf32>
    %255 = tpu.matmul %253, %254, %cst_108 {dimension_numbers = #tpu.dot_dimension_numbers<[1], [0], [0], [1], [0, 0, 1, 1], [], []>} : vector<8x32xbf16>, vector<32x128xbf16>, vector<8x128xf32> -> vector<8x128xf32>
    %c0_109 = arith.constant 0 : index
    %c0_110 = arith.constant 0 : index
    %256 = vector.load %arg11[%c0_109, %c0_110] : memref<1x128xf32, #tpu.memory_space<vmem>>, vector<1x128xf32>
    %257 = vector.shape_cast %256 : vector<1x128xf32> to vector<128xf32>
    %258 = vector.shape_cast %257 : vector<128xf32> to vector<1x128xf32>
    %259 = vector.broadcast %258 : vector<1x128xf32> to vector<8x128xf32>
    %260 = arith.addf %255, %259 : vector<8x128xf32>
    %cst_111 = arith.constant 5.000000e-01 : f32
    %261 = vector.broadcast %cst_111 : f32 to vector<8x128xf32>
    %262 = arith.mulf %261, %260 : vector<8x128xf32>
    %cst_112 = arith.constant 4.471500e-02 : f32
    %263 = vector.broadcast %cst_112 : f32 to vector<8x128xf32>
    %264 = arith.mulf %263, %260 : vector<8x128xf32>
    %265 = arith.mulf %264, %260 : vector<8x128xf32>
    %266 = arith.mulf %265, %260 : vector<8x128xf32>
    %267 = arith.addf %260, %266 : vector<8x128xf32>
    %cst_113 = arith.constant 0.797884583 : f32
    %268 = vector.broadcast %cst_113 : f32 to vector<8x128xf32>
    %269 = arith.mulf %268, %267 : vector<8x128xf32>
    %270 = math.tanh %269 : vector<8x128xf32>
    %cst_114 = arith.constant 1.000000e+00 : f32
    %271 = vector.broadcast %cst_114 : f32 to vector<8x128xf32>
    %272 = arith.addf %271, %270 : vector<8x128xf32>
    %273 = arith.mulf %262, %272 : vector<8x128xf32>
    %274 = arith.truncf %273 : vector<8x128xf32> to vector<8x128xbf16>
    %c0_115 = arith.constant 0 : index
    %c0_116 = arith.constant 0 : index
    %275 = vector.load %arg12[%c0_115, %c0_116] : memref<128x32xbf16, #tpu.memory_space<vmem>>, vector<128x32xbf16>
    %cst_117 = arith.constant dense<0.000000e+00> : vector<8x32xf32>
    %276 = tpu.matmul %274, %275, %cst_117 {dimension_numbers = #tpu.dot_dimension_numbers<[1], [0], [0], [1], [0, 0, 1, 1], [], []>} : vector<8x128xbf16>, vector<128x32xbf16>, vector<8x32xf32> -> vector<8x32xf32>
    %c0_118 = arith.constant 0 : index
    %c0_119 = arith.constant 0 : index
    %277 = vector.load %arg13[%c0_118, %c0_119] : memref<1x32xf32, #tpu.memory_space<vmem>>, vector<1x32xf32>
    %278 = vector.shape_cast %277 : vector<1x32xf32> to vector<32xf32>
    %279 = vector.shape_cast %278 : vector<32xf32> to vector<1x32xf32>
    %280 = vector.broadcast %279 : vector<1x32xf32> to vector<8x32xf32>
    %281 = arith.addf %276, %280 : vector<8x32xf32>
    %282 = arith.addf %224, %281 : vector<8x32xf32>
    %283 = vector.shape_cast %282 : vector<8x32xf32> to vector<1x8x32xf32>
    %c0_120 = arith.constant 0 : index
    %c0_121 = arith.constant 0 : index
    %c0_122 = arith.constant 0 : index
    %284 = vector.load %arg14[%c0_120, %c0_121, %c0_122] : memref<1x8x32xf32, #tpu.memory_space<vmem>>, vector<1x8x32xf32>
    tpu.vector_store %arg14[%c0_120, %c0_121, %c0_122], %283 {strides = array<i32>} : memref<1x8x32xf32, #tpu.memory_space<vmem>>, vector<1x8x32xf32>,
    return
  }
  func.func @transform_0(%arg0: i32) -> (i32, i32, i32) {
    %c0_i32 = arith.constant 0 : i32
    %c0_i32_0 = arith.constant 0 : i32
    %c0_i32_1 = arith.constant 0 : i32
    return %arg0, %c0_i32, %c0_i32_0 : i32, i32, i32
  }
  func.func @transform_1(%arg0: i32) -> (i32, i32) {
    %c0_i32 = arith.constant 0 : i32
    %c0_i32_0 = arith.constant 0 : i32
    %c0_i32_1 = arith.constant 0 : i32
    return %c0_i32, %c0_i32_0 : i32, i32
  }
  func.func @transform_2(%arg0: i32) -> (i32, i32) {
    %c0_i32 = arith.constant 0 : i32
    %c0_i32_0 = arith.constant 0 : i32
    %c0_i32_1 = arith.constant 0 : i32
    return %c0_i32, %c0_i32_0 : i32, i32
  }
  func.func @transform_3(%arg0: i32) -> (i32, i32) {
    %c0_i32 = arith.constant 0 : i32
    %c0_i32_0 = arith.constant 0 : i32
    %c0_i32_1 = arith.constant 0 : i32
    return %c0_i32, %c0_i32_0 : i32, i32
  }
  func.func @transform_4(%arg0: i32) -> (i32, i32) {
    %c0_i32 = arith.constant 0 : i32
    %c0_i32_0 = arith.constant 0 : i32
    %c0_i32_1 = arith.constant 0 : i32
    return %c0_i32, %c0_i32_0 : i32, i32
  }
  func.func @transform_5(%arg0: i32) -> (i32, i32) {
    %c0_i32 = arith.constant 0 : i32
    %c0_i32_0 = arith.constant 0 : i32
    %c0_i32_1 = arith.constant 0 : i32
    return %c0_i32, %c0_i32_0 : i32, i32
  }
  func.func @transform_6(%arg0: i32) -> (i32, i32) {
    %c0_i32 = arith.constant 0 : i32
    %c0_i32_0 = arith.constant 0 : i32
    %c0_i32_1 = arith.constant 0 : i32
    return %c0_i32, %c0_i32_0 : i32, i32
  }
  func.func @transform_7(%arg0: i32) -> (i32, i32) {
    %c0_i32 = arith.constant 0 : i32
    %c0_i32_0 = arith.constant 0 : i32
    %c0_i32_1 = arith.constant 0 : i32
    return %c0_i32, %c0_i32_0 : i32, i32
  }
  func.func @transform_8(%arg0: i32) -> (i32, i32) {
    %c0_i32 = arith.constant 0 : i32
    %c0_i32_0 = arith.constant 0 : i32
    %c0_i32_1 = arith.constant 0 : i32
    return %c0_i32, %c0_i32_0 : i32, i32
  }
  func.func @transform_9(%arg0: i32) -> (i32, i32) {
    %c0_i32 = arith.constant 0 : i32
    %c0_i32_0 = arith.constant 0 : i32
    %c0_i32_1 = arith.constant 0 : i32
    return %c0_i32, %c0_i32_0 : i32, i32
  }
  func.func @transform_10(%arg0: i32) -> (i32, i32) {
    %c0_i32 = arith.constant 0 : i32
    %c0_i32_0 = arith.constant 0 : i32
    %c0_i32_1 = arith.constant 0 : i32
    return %c0_i32, %c0_i32_0 : i32, i32
  }
  func.func @transform_11(%arg0: i32) -> (i32, i32) {
    %c0_i32 = arith.constant 0 : i32
    %c0_i32_0 = arith.constant 0 : i32
    %c0_i32_1 = arith.constant 0 : i32
    return %c0_i32, %c0_i32_0 : i32, i32
  }
  func.func @transform_12(%arg0: i32) -> (i32, i32) {
    %c0_i32 = arith.constant 0 : i32
    %c0_i32_0 = arith.constant 0 : i32
    %c0_i32_1 = arith.constant 0 : i32
    return %c0_i32, %c0_i32_0 : i32, i32
  }
  func.func @transform_13(%arg0: i32) -> (i32, i32, i32) {
    %c0_i32 = arith.constant 0 : i32
    %c0_i32_0 = arith.constant 0 : i32
    %c0_i32_1 = arith.constant 0 : i32
    return %arg0, %c0_i32, %c0_i32_0 : i32, i32, i32
  }
}

module attributes {stable_mosaic.version = 11 : i64} {
  func.func @kernel(%arg0: i32, %arg1: memref<1x8x32xf32, #tpu.memory_space<vmem>>, %arg2: memref<1x32xf32, #tpu.memory_space<vmem>>, %arg3: memref<1x32xf32, #tpu.memory_space<vmem>>, %arg4: memref<32x96xbf16, #tpu.memory_space<vmem>>, %arg5: memref<1x96xf32, #tpu.memory_space<vmem>>, %arg6: memref<32x32xbf16, #tpu.memory_space<vmem>>, %arg7: memref<1x32xf32, #tpu.memory_space<vmem>>, %arg8: memref<1x32xf32, #tpu.memory_space<vmem>>, %arg9: memref<1x32xf32, #tpu.memory_space<vmem>>, %arg10: memref<32x128xbf16, #tpu.memory_space<vmem>>, %arg11: memref<1x128xf32, #tpu.memory_space<vmem>>, %arg12: memref<128x32xbf16, #tpu.memory_space<vmem>>, %arg13: memref<1x32xf32, #tpu.memory_space<vmem>>, %arg14: memref<1x8x32xf32, #tpu.memory_space<vmem>>, %arg15: memref<8x96xbf16, #tpu.memory_space<vmem>>, %arg16: memref<8x32xbf16, #tpu.memory_space<vmem>>) attributes {dimension_semantics = [#tpu.dimension_semantics<parallel>], iteration_bounds = array<i64: 2>, scalar_prefetch = 0 : i64, scratch_operands = 2 : i64, tpu.core_type = #tpu.core_type<tc>, window_params = [{transform_indices = @transform_0, window_bounds = array<i64: 1, 8, 32>}, {pipeline_mode = #tpu.pipeline_mode<synchronous>, transform_indices = @transform_1, window_bounds = array<i64: 1, 32>}, {pipeline_mode = #tpu.pipeline_mode<synchronous>, transform_indices = @transform_2, window_bounds = array<i64: 1, 32>}, {pipeline_mode = #tpu.pipeline_mode<synchronous>, transform_indices = @transform_3, window_bounds = array<i64: 32, 96>}, {pipeline_mode = #tpu.pipeline_mode<synchronous>, transform_indices = @transform_4, window_bounds = array<i64: 1, 96>}, {pipeline_mode = #tpu.pipeline_mode<synchronous>, transform_indices = @transform_5, window_bounds = array<i64: 32, 32>}, {pipeline_mode = #tpu.pipeline_mode<synchronous>, transform_indices = @transform_6, window_bounds = array<i64: 1, 32>}, {pipeline_mode = #tpu.pipeline_mode<synchronous>, transform_indices = @transform_7, window_bounds = array<i64: 1, 32>}, {pipeline_mode = #tpu.pipeline_mode<synchronous>, transform_indices = @transform_8, window_bounds = array<i64: 1, 32>}, {pipeline_mode = #tpu.pipeline_mode<synchronous>, transform_indices = @transform_9, window_bounds = array<i64: 32, 128>}, {pipeline_mode = #tpu.pipeline_mode<synchronous>, transform_indices = @transform_10, window_bounds = array<i64: 1, 128>}, {pipeline_mode = #tpu.pipeline_mode<synchronous>, transform_indices = @transform_11, window_bounds = array<i64: 128, 32>}, {pipeline_mode = #tpu.pipeline_mode<synchronous>, transform_indices = @transform_12, window_bounds = array<i64: 1, 32>}, {transform_indices = @transform_13, window_bounds = array<i64: 1, 8, 32>}]} {
    %c0 = arith.constant 0 : index
    %c0_0 = arith.constant 0 : index
    %c0_1 = arith.constant 0 : index
    %0 = vector.load %arg1[%c0, %c0_0, %c0_1] : memref<1x8x32xf32, #tpu.memory_space<vmem>>, vector<1x8x32xf32>
    %1 = vector.shape_cast %0 : vector<1x8x32xf32> to vector<8x32xf32>
    %c0_2 = arith.constant 0 : index
    %c0_3 = arith.constant 0 : index
    %2 = vector.load %arg2[%c0_2, %c0_3] : memref<1x32xf32, #tpu.memory_space<vmem>>, vector<1x32xf32>
    %3 = vector.shape_cast %2 : vector<1x32xf32> to vector<32xf32>
    %c0_4 = arith.constant 0 : index
    %c0_5 = arith.constant 0 : index
    %4 = vector.load %arg3[%c0_4, %c0_5] : memref<1x32xf32, #tpu.memory_space<vmem>>, vector<1x32xf32>
    %5 = vector.shape_cast %4 : vector<1x32xf32> to vector<32xf32>
    %cst = arith.constant dense<0.000000e+00> : vector<8xf32>
    %6 = vector.multi_reduction <add>, %1, %cst [1] : vector<8x32xf32> to vector<8xf32>
    %7 = vector.shape_cast %6 : vector<8xf32> to vector<8x1xf32>
    %cst_6 = arith.constant 3.200000e+01 : f32
    %8 = vector.broadcast %cst_6 : f32 to vector<8x1xf32>
    %9 = arith.divf %7, %8 : vector<8x1xf32>
    %10 = vector.broadcast %9 : vector<8x1xf32> to vector<8x32xf32>
    %11 = arith.subf %1, %10 : vector<8x32xf32>
    %12 = arith.mulf %11, %11 : vector<8x32xf32>
    %cst_7 = arith.constant dense<0.000000e+00> : vector<8xf32>
    %13 = vector.multi_reduction <add>, %12, %cst_7 [1] : vector<8x32xf32> to vector<8xf32>
    %14 = vector.shape_cast %13 : vector<8xf32> to vector<8x1xf32>
    %cst_8 = arith.constant 3.200000e+01 : f32
    %15 = vector.broadcast %cst_8 : f32 to vector<8x1xf32>
    %16 = arith.divf %14, %15 : vector<8x1xf32>
    %17 = vector.broadcast %9 : vector<8x1xf32> to vector<8x32xf32>
    %18 = arith.subf %1, %17 : vector<8x32xf32>
    %cst_9 = arith.constant 9.99999997E-7 : f32
    %19 = vector.broadcast %cst_9 : f32 to vector<8x1xf32>
    %20 = arith.addf %16, %19 : vector<8x1xf32>
    %21 = math.rsqrt %20 : vector<8x1xf32>
    %22 = vector.broadcast %21 : vector<8x1xf32> to vector<8x32xf32>
    %23 = arith.mulf %18, %22 : vector<8x32xf32>
    %24 = vector.shape_cast %3 : vector<32xf32> to vector<1x32xf32>
    %25 = vector.broadcast %24 : vector<1x32xf32> to vector<8x32xf32>
    %26 = arith.mulf %23, %25 : vector<8x32xf32>
    %27 = vector.shape_cast %5 : vector<32xf32> to vector<1x32xf32>
    %28 = vector.broadcast %27 : vector<1x32xf32> to vector<8x32xf32>
    %29 = arith.addf %26, %28 : vector<8x32xf32>
    %30 = arith.truncf %29 : vector<8x32xf32> to vector<8x32xbf16>
    %c0_10 = arith.constant 0 : index
    %c0_11 = arith.constant 0 : index
    %31 = vector.load %arg4[%c0_10, %c0_11] : memref<32x96xbf16, #tpu.memory_space<vmem>>, vector<32x96xbf16>
    %cst_12 = arith.constant dense<0.000000e+00> : vector<8x96xf32>
    %32 = tpu.matmul %30, %31, %cst_12 {dimension_numbers = #tpu.dot_dimension_numbers<[1], [0], [0], [1], [0, 0, 1, 1], [], []>} : vector<8x32xbf16>, vector<32x96xbf16>, vector<8x96xf32> -> vector<8x96xf32>
    %c0_13 = arith.constant 0 : index
    %c0_14 = arith.constant 0 : index
    %33 = vector.load %arg5[%c0_13, %c0_14] : memref<1x96xf32, #tpu.memory_space<vmem>>, vector<1x96xf32>
    %34 = vector.shape_cast %33 : vector<1x96xf32> to vector<96xf32>
    %35 = vector.shape_cast %34 : vector<96xf32> to vector<1x96xf32>
    %36 = vector.broadcast %35 : vector<1x96xf32> to vector<8x96xf32>
    %37 = arith.addf %32, %36 : vector<8x96xf32>
    %38 = arith.truncf %37 : vector<8x96xf32> to vector<8x96xbf16>
    %c0_15 = arith.constant 0 : index
    %c0_16 = arith.constant 0 : index
    %39 = vector.load %arg15[%c0_15, %c0_16] : memref<8x96xbf16, #tpu.memory_space<vmem>>, vector<8x96xbf16>
    tpu.vector_store %arg15[%c0_15, %c0_16], %38 {strides = array<i32>} : memref<8x96xbf16, #tpu.memory_space<vmem>>, vector<8x96xbf16>,
    %c0_17 = arith.constant 0 : index
    %c0_18 = arith.constant 0 : index
    %40 = vector.load %arg15[%c0_17, %c0_18] : memref<8x96xbf16, #tpu.memory_space<vmem>>, vector<8x4xbf16>
    %41 = vector.shape_cast %40 : vector<8x4xbf16> to vector<1x8x4xbf16>
    %c0_19 = arith.constant 0 : index
    %c32 = arith.constant 32 : index
    %42 = vector.load %arg15[%c0_19, %c32] : memref<8x96xbf16, #tpu.memory_space<vmem>>, vector<8x4xbf16>
    %43 = vector.shape_cast %42 : vector<8x4xbf16> to vector<1x8x4xbf16>
    %c0_20 = arith.constant 0 : index
    %c64 = arith.constant 64 : index
    %44 = vector.load %arg15[%c0_20, %c64] : memref<8x96xbf16, #tpu.memory_space<vmem>>, vector<8x4xbf16>
    %45 = vector.shape_cast %44 : vector<8x4xbf16> to vector<1x8x4xbf16>
    "tpu.trace_start"() <{level = 10 : i32, message = "gqd,gkd->gqk"}> : () -> ()
    %cst_21 = arith.constant dense<0.000000e+00> : vector<1x8x8xf32>
    %46 = tpu.matmul %41, %43, %cst_21 {dimension_numbers = #tpu.dot_dimension_numbers<[2], [2], [1], [1], [0, 0, 0, 1, 1, 1], [0], [0]>} : vector<1x8x4xbf16>, vector<1x8x4xbf16>, vector<1x8x8xf32> -> vector<1x8x8xf32>
    "tpu.trace_stop"() : () -> ()
    %cst_22 = arith.constant dense<0xFF800000> : vector<1x8xf32>
    %47 = vector.multi_reduction <maximumf>, %46, %cst_22 [2] : vector<1x8x8xf32> to vector<1x8xf32>
    %48 = vector.shape_cast %47 : vector<1x8xf32> to vector<1x8x1xf32>
    %49 = vector.broadcast %48 : vector<1x8x1xf32> to vector<1x8x8xf32>
    %50 = arith.subf %46, %49 : vector<1x8x8xf32>
    %51 = math.exp %50 : vector<1x8x8xf32>
    %cst_23 = arith.constant dense<0.000000e+00> : vector<1x8xf32>
    %52 = vector.multi_reduction <add>, %51, %cst_23 [2] : vector<1x8x8xf32> to vector<1x8xf32>
    %53 = vector.shape_cast %52 : vector<1x8xf32> to vector<1x8x1xf32>
    %54 = tpu.reciprocal %53 {approx = true} : vector<1x8x1xf32> -> vector<1x8x1xf32>
    %55 = vector.broadcast %54 : vector<1x8x1xf32> to vector<1x8x8xf32>
    %56 = arith.mulf %51, %55 : vector<1x8x8xf32>
    %57 = arith.truncf %56 : vector<1x8x8xf32> to vector<1x8x8xbf16>
    "tpu.trace_start"() <{level = 10 : i32, message = "gqk,gkd->gqd"}> : () -> ()
    %cst_24 = arith.constant dense<0.000000e+00> : vector<1x8x4xf32>
    %58 = tpu.matmul %57, %45, %cst_24 {dimension_numbers = #tpu.dot_dimension_numbers<[2], [1], [1], [2], [0, 0, 0, 1, 1, 2], [0], [0]>} : vector<1x8x8xbf16>, vector<1x8x4xbf16>, vector<1x8x4xf32> -> vector<1x8x4xf32>
    "tpu.trace_stop"() : () -> ()
    %59 = vector.shape_cast %58 : vector<1x8x4xf32> to vector<8x4xf32>
    %60 = arith.truncf %59 : vector<8x4xf32> to vector<8x4xbf16>
    %c0_25 = arith.constant 0 : index
    %c0_26 = arith.constant 0 : index
    %61 = vector.load %arg16[%c0_25, %c0_26] : memref<8x32xbf16, #tpu.memory_space<vmem>>, vector<8x4xbf16>
    tpu.vector_store %arg16[%c0_25, %c0_26], %60 {strides = array<i32>} : memref<8x32xbf16, #tpu.memory_space<vmem>>, vector<8x4xbf16>,
    %c0_27 = arith.constant 0 : index
    %c4 = arith.constant 4 : index
    %62 = vector.load %arg15[%c0_27, %c4] : memref<8x96xbf16, #tpu.memory_space<vmem>>, vector<8x4xbf16>
    %63 = vector.shape_cast %62 : vector<8x4xbf16> to vector<1x8x4xbf16>
    %c0_28 = arith.constant 0 : index
    %c36 = arith.constant 36 : index
    %64 = vector.load %arg15[%c0_28, %c36] : memref<8x96xbf16, #tpu.memory_space<vmem>>, vector<8x4xbf16>
    %65 = vector.shape_cast %64 : vector<8x4xbf16> to vector<1x8x4xbf16>
    %c0_29 = arith.constant 0 : index
    %c68 = arith.constant 68 : index
    %66 = vector.load %arg15[%c0_29, %c68] : memref<8x96xbf16, #tpu.memory_space<vmem>>, vector<8x4xbf16>
    %67 = vector.shape_cast %66 : vector<8x4xbf16> to vector<1x8x4xbf16>
    "tpu.trace_start"() <{level = 10 : i32, message = "gqd,gkd->gqk"}> : () -> ()
    %cst_30 = arith.constant dense<0.000000e+00> : vector<1x8x8xf32>
    %68 = tpu.matmul %63, %65, %cst_30 {dimension_numbers = #tpu.dot_dimension_numbers<[2], [2], [1], [1], [0, 0, 0, 1, 1, 1], [0], [0]>} : vector<1x8x4xbf16>, vector<1x8x4xbf16>, vector<1x8x8xf32> -> vector<1x8x8xf32>
    "tpu.trace_stop"() : () -> ()
    %cst_31 = arith.constant dense<0xFF800000> : vector<1x8xf32>
    %69 = vector.multi_reduction <maximumf>, %68, %cst_31 [2] : vector<1x8x8xf32> to vector<1x8xf32>
    %70 = vector.shape_cast %69 : vector<1x8xf32> to vector<1x8x1xf32>
    %71 = vector.broadcast %70 : vector<1x8x1xf32> to vector<1x8x8xf32>
    %72 = arith.subf %68, %71 : vector<1x8x8xf32>
    %73 = math.exp %72 : vector<1x8x8xf32>
    %cst_32 = arith.constant dense<0.000000e+00> : vector<1x8xf32>
    %74 = vector.multi_reduction <add>, %73, %cst_32 [2] : vector<1x8x8xf32> to vector<1x8xf32>
    %75 = vector.shape_cast %74 : vector<1x8xf32> to vector<1x8x1xf32>
    %76 = tpu.reciprocal %75 {approx = true} : vector<1x8x1xf32> -> vector<1x8x1xf32>
    %77 = vector.broadcast %76 : vector<1x8x1xf32> to vector<1x8x8xf32>
    %78 = arith.mulf %73, %77 : vector<1x8x8xf32>
    %79 = arith.truncf %78 : vector<1x8x8xf32> to vector<1x8x8xbf16>
    "tpu.trace_start"() <{level = 10 : i32, message = "gqk,gkd->gqd"}> : () -> ()
    %cst_33 = arith.constant dense<0.000000e+00> : vector<1x8x4xf32>
    %80 = tpu.matmul %79, %67, %cst_33 {dimension_numbers = #tpu.dot_dimension_numbers<[2], [1], [1], [2], [0, 0, 0, 1, 1, 2], [0], [0]>} : vector<1x8x8xbf16>, vector<1x8x4xbf16>, vector<1x8x4xf32> -> vector<1x8x4xf32>
    "tpu.trace_stop"() : () -> ()
    %81 = vector.shape_cast %80 : vector<1x8x4xf32> to vector<8x4xf32>
    %82 = arith.truncf %81 : vector<8x4xf32> to vector<8x4xbf16>
    %c0_34 = arith.constant 0 : index
    %c4_35 = arith.constant 4 : index
    %83 = vector.load %arg16[%c0_34, %c4_35] : memref<8x32xbf16, #tpu.memory_space<vmem>>, vector<8x4xbf16>
    tpu.vector_store %arg16[%c0_34, %c4_35], %82 {strides = array<i32>} : memref<8x32xbf16, #tpu.memory_space<vmem>>, vector<8x4xbf16>,
    %c0_36 = arith.constant 0 : index
    %c8 = arith.constant 8 : index
    %84 = vector.load %arg15[%c0_36, %c8] : memref<8x96xbf16, #tpu.memory_space<vmem>>, vector<8x4xbf16>
    %85 = vector.shape_cast %84 : vector<8x4xbf16> to vector<1x8x4xbf16>
    %c0_37 = arith.constant 0 : index
    %c40 = arith.constant 40 : index
    %86 = vector.load %arg15[%c0_37, %c40] : memref<8x96xbf16, #tpu.memory_space<vmem>>, vector<8x4xbf16>
    %87 = vector.shape_cast %86 : vector<8x4xbf16> to vector<1x8x4xbf16>
    %c0_38 = arith.constant 0 : index
    %c72 = arith.constant 72 : index
    %88 = vector.load %arg15[%c0_38, %c72] : memref<8x96xbf16, #tpu.memory_space<vmem>>, vector<8x4xbf16>
    %89 = vector.shape_cast %88 : vector<8x4xbf16> to vector<1x8x4xbf16>
    "tpu.trace_start"() <{level = 10 : i32, message = "gqd,gkd->gqk"}> : () -> ()
    %cst_39 = arith.constant dense<0.000000e+00> : vector<1x8x8xf32>
    %90 = tpu.matmul %85, %87, %cst_39 {dimension_numbers = #tpu.dot_dimension_numbers<[2], [2], [1], [1], [0, 0, 0, 1, 1, 1], [0], [0]>} : vector<1x8x4xbf16>, vector<1x8x4xbf16>, vector<1x8x8xf32> -> vector<1x8x8xf32>
    "tpu.trace_stop"() : () -> ()
    %cst_40 = arith.constant dense<0xFF800000> : vector<1x8xf32>
    %91 = vector.multi_reduction <maximumf>, %90, %cst_40 [2] : vector<1x8x8xf32> to vector<1x8xf32>
    %92 = vector.shape_cast %91 : vector<1x8xf32> to vector<1x8x1xf32>
    %93 = vector.broadcast %92 : vector<1x8x1xf32> to vector<1x8x8xf32>
    %94 = arith.subf %90, %93 : vector<1x8x8xf32>
    %95 = math.exp %94 : vector<1x8x8xf32>
    %cst_41 = arith.constant dense<0.000000e+00> : vector<1x8xf32>
    %96 = vector.multi_reduction <add>, %95, %cst_41 [2] : vector<1x8x8xf32> to vector<1x8xf32>
    %97 = vector.shape_cast %96 : vector<1x8xf32> to vector<1x8x1xf32>
    %98 = tpu.reciprocal %97 {approx = true} : vector<1x8x1xf32> -> vector<1x8x1xf32>
    %99 = vector.broadcast %98 : vector<1x8x1xf32> to vector<1x8x8xf32>
    %100 = arith.mulf %95, %99 : vector<1x8x8xf32>
    %101 = arith.truncf %100 : vector<1x8x8xf32> to vector<1x8x8xbf16>
    "tpu.trace_start"() <{level = 10 : i32, message = "gqk,gkd->gqd"}> : () -> ()
    %cst_42 = arith.constant dense<0.000000e+00> : vector<1x8x4xf32>
    %102 = tpu.matmul %101, %89, %cst_42 {dimension_numbers = #tpu.dot_dimension_numbers<[2], [1], [1], [2], [0, 0, 0, 1, 1, 2], [0], [0]>} : vector<1x8x8xbf16>, vector<1x8x4xbf16>, vector<1x8x4xf32> -> vector<1x8x4xf32>
    "tpu.trace_stop"() : () -> ()
    %103 = vector.shape_cast %102 : vector<1x8x4xf32> to vector<8x4xf32>
    %104 = arith.truncf %103 : vector<8x4xf32> to vector<8x4xbf16>
    %c0_43 = arith.constant 0 : index
    %c8_44 = arith.constant 8 : index
    %105 = vector.load %arg16[%c0_43, %c8_44] : memref<8x32xbf16, #tpu.memory_space<vmem>>, vector<8x4xbf16>
    tpu.vector_store %arg16[%c0_43, %c8_44], %104 {strides = array<i32>} : memref<8x32xbf16, #tpu.memory_space<vmem>>, vector<8x4xbf16>,
    %c0_45 = arith.constant 0 : index
    %c12 = arith.constant 12 : index
    %106 = vector.load %arg15[%c0_45, %c12] : memref<8x96xbf16, #tpu.memory_space<vmem>>, vector<8x4xbf16>
    %107 = vector.shape_cast %106 : vector<8x4xbf16> to vector<1x8x4xbf16>
    %c0_46 = arith.constant 0 : index
    %c44 = arith.constant 44 : index
    %108 = vector.load %arg15[%c0_46, %c44] : memref<8x96xbf16, #tpu.memory_space<vmem>>, vector<8x4xbf16>
    %109 = vector.shape_cast %108 : vector<8x4xbf16> to vector<1x8x4xbf16>
    %c0_47 = arith.constant 0 : index
    %c76 = arith.constant 76 : index
    %110 = vector.load %arg15[%c0_47, %c76] : memref<8x96xbf16, #tpu.memory_space<vmem>>, vector<8x4xbf16>
    %111 = vector.shape_cast %110 : vector<8x4xbf16> to vector<1x8x4xbf16>
    "tpu.trace_start"() <{level = 10 : i32, message = "gqd,gkd->gqk"}> : () -> ()
    %cst_48 = arith.constant dense<0.000000e+00> : vector<1x8x8xf32>
    %112 = tpu.matmul %107, %109, %cst_48 {dimension_numbers = #tpu.dot_dimension_numbers<[2], [2], [1], [1], [0, 0, 0, 1, 1, 1], [0], [0]>} : vector<1x8x4xbf16>, vector<1x8x4xbf16>, vector<1x8x8xf32> -> vector<1x8x8xf32>
    "tpu.trace_stop"() : () -> ()
    %cst_49 = arith.constant dense<0xFF800000> : vector<1x8xf32>
    %113 = vector.multi_reduction <maximumf>, %112, %cst_49 [2] : vector<1x8x8xf32> to vector<1x8xf32>
    %114 = vector.shape_cast %113 : vector<1x8xf32> to vector<1x8x1xf32>
    %115 = vector.broadcast %114 : vector<1x8x1xf32> to vector<1x8x8xf32>
    %116 = arith.subf %112, %115 : vector<1x8x8xf32>
    %117 = math.exp %116 : vector<1x8x8xf32>
    %cst_50 = arith.constant dense<0.000000e+00> : vector<1x8xf32>
    %118 = vector.multi_reduction <add>, %117, %cst_50 [2] : vector<1x8x8xf32> to vector<1x8xf32>
    %119 = vector.shape_cast %118 : vector<1x8xf32> to vector<1x8x1xf32>
    %120 = tpu.reciprocal %119 {approx = true} : vector<1x8x1xf32> -> vector<1x8x1xf32>
    %121 = vector.broadcast %120 : vector<1x8x1xf32> to vector<1x8x8xf32>
    %122 = arith.mulf %117, %121 : vector<1x8x8xf32>
    %123 = arith.truncf %122 : vector<1x8x8xf32> to vector<1x8x8xbf16>
    "tpu.trace_start"() <{level = 10 : i32, message = "gqk,gkd->gqd"}> : () -> ()
    %cst_51 = arith.constant dense<0.000000e+00> : vector<1x8x4xf32>
    %124 = tpu.matmul %123, %111, %cst_51 {dimension_numbers = #tpu.dot_dimension_numbers<[2], [1], [1], [2], [0, 0, 0, 1, 1, 2], [0], [0]>} : vector<1x8x8xbf16>, vector<1x8x4xbf16>, vector<1x8x4xf32> -> vector<1x8x4xf32>
    "tpu.trace_stop"() : () -> ()
    %125 = vector.shape_cast %124 : vector<1x8x4xf32> to vector<8x4xf32>
    %126 = arith.truncf %125 : vector<8x4xf32> to vector<8x4xbf16>
    %c0_52 = arith.constant 0 : index
    %c12_53 = arith.constant 12 : index
    %127 = vector.load %arg16[%c0_52, %c12_53] : memref<8x32xbf16, #tpu.memory_space<vmem>>, vector<8x4xbf16>
    tpu.vector_store %arg16[%c0_52, %c12_53], %126 {strides = array<i32>} : memref<8x32xbf16, #tpu.memory_space<vmem>>, vector<8x4xbf16>,
    %c0_54 = arith.constant 0 : index
    %c16 = arith.constant 16 : index
    %128 = vector.load %arg15[%c0_54, %c16] : memref<8x96xbf16, #tpu.memory_space<vmem>>, vector<8x4xbf16>
    %129 = vector.shape_cast %128 : vector<8x4xbf16> to vector<1x8x4xbf16>
    %c0_55 = arith.constant 0 : index
    %c48 = arith.constant 48 : index
    %130 = vector.load %arg15[%c0_55, %c48] : memref<8x96xbf16, #tpu.memory_space<vmem>>, vector<8x4xbf16>
    %131 = vector.shape_cast %130 : vector<8x4xbf16> to vector<1x8x4xbf16>
    %c0_56 = arith.constant 0 : index
    %c80 = arith.constant 80 : index
    %132 = vector.load %arg15[%c0_56, %c80] : memref<8x96xbf16, #tpu.memory_space<vmem>>, vector<8x4xbf16>
    %133 = vector.shape_cast %132 : vector<8x4xbf16> to vector<1x8x4xbf16>
    "tpu.trace_start"() <{level = 10 : i32, message = "gqd,gkd->gqk"}> : () -> ()
    %cst_57 = arith.constant dense<0.000000e+00> : vector<1x8x8xf32>
    %134 = tpu.matmul %129, %131, %cst_57 {dimension_numbers = #tpu.dot_dimension_numbers<[2], [2], [1], [1], [0, 0, 0, 1, 1, 1], [0], [0]>} : vector<1x8x4xbf16>, vector<1x8x4xbf16>, vector<1x8x8xf32> -> vector<1x8x8xf32>
    "tpu.trace_stop"() : () -> ()
    %cst_58 = arith.constant dense<0xFF800000> : vector<1x8xf32>
    %135 = vector.multi_reduction <maximumf>, %134, %cst_58 [2] : vector<1x8x8xf32> to vector<1x8xf32>
    %136 = vector.shape_cast %135 : vector<1x8xf32> to vector<1x8x1xf32>
    %137 = vector.broadcast %136 : vector<1x8x1xf32> to vector<1x8x8xf32>
    %138 = arith.subf %134, %137 : vector<1x8x8xf32>
    %139 = math.exp %138 : vector<1x8x8xf32>
    %cst_59 = arith.constant dense<0.000000e+00> : vector<1x8xf32>
    %140 = vector.multi_reduction <add>, %139, %cst_59 [2] : vector<1x8x8xf32> to vector<1x8xf32>
    %141 = vector.shape_cast %140 : vector<1x8xf32> to vector<1x8x1xf32>
    %142 = tpu.reciprocal %141 {approx = true} : vector<1x8x1xf32> -> vector<1x8x1xf32>
    %143 = vector.broadcast %142 : vector<1x8x1xf32> to vector<1x8x8xf32>
    %144 = arith.mulf %139, %143 : vector<1x8x8xf32>
    %145 = arith.truncf %144 : vector<1x8x8xf32> to vector<1x8x8xbf16>
    "tpu.trace_start"() <{level = 10 : i32, message = "gqk,gkd->gqd"}> : () -> ()
    %cst_60 = arith.constant dense<0.000000e+00> : vector<1x8x4xf32>
    %146 = tpu.matmul %145, %133, %cst_60 {dimension_numbers = #tpu.dot_dimension_numbers<[2], [1], [1], [2], [0, 0, 0, 1, 1, 2], [0], [0]>} : vector<1x8x8xbf16>, vector<1x8x4xbf16>, vector<1x8x4xf32> -> vector<1x8x4xf32>
    "tpu.trace_stop"() : () -> ()
    %147 = vector.shape_cast %146 : vector<1x8x4xf32> to vector<8x4xf32>
    %148 = arith.truncf %147 : vector<8x4xf32> to vector<8x4xbf16>
    %c0_61 = arith.constant 0 : index
    %c16_62 = arith.constant 16 : index
    %149 = vector.load %arg16[%c0_61, %c16_62] : memref<8x32xbf16, #tpu.memory_space<vmem>>, vector<8x4xbf16>
    tpu.vector_store %arg16[%c0_61, %c16_62], %148 {strides = array<i32>} : memref<8x32xbf16, #tpu.memory_space<vmem>>, vector<8x4xbf16>,
    %c0_63 = arith.constant 0 : index
    %c20 = arith.constant 20 : index
    %150 = vector.load %arg15[%c0_63, %c20] : memref<8x96xbf16, #tpu.memory_space<vmem>>, vector<8x4xbf16>
    %151 = vector.shape_cast %150 : vector<8x4xbf16> to vector<1x8x4xbf16>
    %c0_64 = arith.constant 0 : index
    %c52 = arith.constant 52 : index
    %152 = vector.load %arg15[%c0_64, %c52] : memref<8x96xbf16, #tpu.memory_space<vmem>>, vector<8x4xbf16>
    %153 = vector.shape_cast %152 : vector<8x4xbf16> to vector<1x8x4xbf16>
    %c0_65 = arith.constant 0 : index
    %c84 = arith.constant 84 : index
    %154 = vector.load %arg15[%c0_65, %c84] : memref<8x96xbf16, #tpu.memory_space<vmem>>, vector<8x4xbf16>
    %155 = vector.shape_cast %154 : vector<8x4xbf16> to vector<1x8x4xbf16>
    "tpu.trace_start"() <{level = 10 : i32, message = "gqd,gkd->gqk"}> : () -> ()
    %cst_66 = arith.constant dense<0.000000e+00> : vector<1x8x8xf32>
    %156 = tpu.matmul %151, %153, %cst_66 {dimension_numbers = #tpu.dot_dimension_numbers<[2], [2], [1], [1], [0, 0, 0, 1, 1, 1], [0], [0]>} : vector<1x8x4xbf16>, vector<1x8x4xbf16>, vector<1x8x8xf32> -> vector<1x8x8xf32>
    "tpu.trace_stop"() : () -> ()
    %cst_67 = arith.constant dense<0xFF800000> : vector<1x8xf32>
    %157 = vector.multi_reduction <maximumf>, %156, %cst_67 [2] : vector<1x8x8xf32> to vector<1x8xf32>
    %158 = vector.shape_cast %157 : vector<1x8xf32> to vector<1x8x1xf32>
    %159 = vector.broadcast %158 : vector<1x8x1xf32> to vector<1x8x8xf32>
    %160 = arith.subf %156, %159 : vector<1x8x8xf32>
    %161 = math.exp %160 : vector<1x8x8xf32>
    %cst_68 = arith.constant dense<0.000000e+00> : vector<1x8xf32>
    %162 = vector.multi_reduction <add>, %161, %cst_68 [2] : vector<1x8x8xf32> to vector<1x8xf32>
    %163 = vector.shape_cast %162 : vector<1x8xf32> to vector<1x8x1xf32>
    %164 = tpu.reciprocal %163 {approx = true} : vector<1x8x1xf32> -> vector<1x8x1xf32>
    %165 = vector.broadcast %164 : vector<1x8x1xf32> to vector<1x8x8xf32>
    %166 = arith.mulf %161, %165 : vector<1x8x8xf32>
    %167 = arith.truncf %166 : vector<1x8x8xf32> to vector<1x8x8xbf16>
    "tpu.trace_start"() <{level = 10 : i32, message = "gqk,gkd->gqd"}> : () -> ()
    %cst_69 = arith.constant dense<0.000000e+00> : vector<1x8x4xf32>
    %168 = tpu.matmul %167, %155, %cst_69 {dimension_numbers = #tpu.dot_dimension_numbers<[2], [1], [1], [2], [0, 0, 0, 1, 1, 2], [0], [0]>} : vector<1x8x8xbf16>, vector<1x8x4xbf16>, vector<1x8x4xf32> -> vector<1x8x4xf32>
    "tpu.trace_stop"() : () -> ()
    %169 = vector.shape_cast %168 : vector<1x8x4xf32> to vector<8x4xf32>
    %170 = arith.truncf %169 : vector<8x4xf32> to vector<8x4xbf16>
    %c0_70 = arith.constant 0 : index
    %c20_71 = arith.constant 20 : index
    %171 = vector.load %arg16[%c0_70, %c20_71] : memref<8x32xbf16, #tpu.memory_space<vmem>>, vector<8x4xbf16>
    tpu.vector_store %arg16[%c0_70, %c20_71], %170 {strides = array<i32>} : memref<8x32xbf16, #tpu.memory_space<vmem>>, vector<8x4xbf16>,
    %c0_72 = arith.constant 0 : index
    %c24 = arith.constant 24 : index
    %172 = vector.load %arg15[%c0_72, %c24] : memref<8x96xbf16, #tpu.memory_space<vmem>>, vector<8x4xbf16>
    %173 = vector.shape_cast %172 : vector<8x4xbf16> to vector<1x8x4xbf16>
    %c0_73 = arith.constant 0 : index
    %c56 = arith.constant 56 : index
    %174 = vector.load %arg15[%c0_73, %c56] : memref<8x96xbf16, #tpu.memory_space<vmem>>, vector<8x4xbf16>
    %175 = vector.shape_cast %174 : vector<8x4xbf16> to vector<1x8x4xbf16>
    %c0_74 = arith.constant 0 : index
    %c88 = arith.constant 88 : index
    %176 = vector.load %arg15[%c0_74, %c88] : memref<8x96xbf16, #tpu.memory_space<vmem>>, vector<8x4xbf16>
    %177 = vector.shape_cast %176 : vector<8x4xbf16> to vector<1x8x4xbf16>
    "tpu.trace_start"() <{level = 10 : i32, message = "gqd,gkd->gqk"}> : () -> ()
    %cst_75 = arith.constant dense<0.000000e+00> : vector<1x8x8xf32>
    %178 = tpu.matmul %173, %175, %cst_75 {dimension_numbers = #tpu.dot_dimension_numbers<[2], [2], [1], [1], [0, 0, 0, 1, 1, 1], [0], [0]>} : vector<1x8x4xbf16>, vector<1x8x4xbf16>, vector<1x8x8xf32> -> vector<1x8x8xf32>
    "tpu.trace_stop"() : () -> ()
    %cst_76 = arith.constant dense<0xFF800000> : vector<1x8xf32>
    %179 = vector.multi_reduction <maximumf>, %178, %cst_76 [2] : vector<1x8x8xf32> to vector<1x8xf32>
    %180 = vector.shape_cast %179 : vector<1x8xf32> to vector<1x8x1xf32>
    %181 = vector.broadcast %180 : vector<1x8x1xf32> to vector<1x8x8xf32>
    %182 = arith.subf %178, %181 : vector<1x8x8xf32>
    %183 = math.exp %182 : vector<1x8x8xf32>
    %cst_77 = arith.constant dense<0.000000e+00> : vector<1x8xf32>
    %184 = vector.multi_reduction <add>, %183, %cst_77 [2] : vector<1x8x8xf32> to vector<1x8xf32>
    %185 = vector.shape_cast %184 : vector<1x8xf32> to vector<1x8x1xf32>
    %186 = tpu.reciprocal %185 {approx = true} : vector<1x8x1xf32> -> vector<1x8x1xf32>
    %187 = vector.broadcast %186 : vector<1x8x1xf32> to vector<1x8x8xf32>
    %188 = arith.mulf %183, %187 : vector<1x8x8xf32>
    %189 = arith.truncf %188 : vector<1x8x8xf32> to vector<1x8x8xbf16>
    "tpu.trace_start"() <{level = 10 : i32, message = "gqk,gkd->gqd"}> : () -> ()
    %cst_78 = arith.constant dense<0.000000e+00> : vector<1x8x4xf32>
    %190 = tpu.matmul %189, %177, %cst_78 {dimension_numbers = #tpu.dot_dimension_numbers<[2], [1], [1], [2], [0, 0, 0, 1, 1, 2], [0], [0]>} : vector<1x8x8xbf16>, vector<1x8x4xbf16>, vector<1x8x4xf32> -> vector<1x8x4xf32>
    "tpu.trace_stop"() : () -> ()
    %191 = vector.shape_cast %190 : vector<1x8x4xf32> to vector<8x4xf32>
    %192 = arith.truncf %191 : vector<8x4xf32> to vector<8x4xbf16>
    %c0_79 = arith.constant 0 : index
    %c24_80 = arith.constant 24 : index
    %193 = vector.load %arg16[%c0_79, %c24_80] : memref<8x32xbf16, #tpu.memory_space<vmem>>, vector<8x4xbf16>
    tpu.vector_store %arg16[%c0_79, %c24_80], %192 {strides = array<i32>} : memref<8x32xbf16, #tpu.memory_space<vmem>>, vector<8x4xbf16>,
    %c0_81 = arith.constant 0 : index
    %c28 = arith.constant 28 : index
    %194 = vector.load %arg15[%c0_81, %c28] : memref<8x96xbf16, #tpu.memory_space<vmem>>, vector<8x4xbf16>
    %195 = vector.shape_cast %194 : vector<8x4xbf16> to vector<1x8x4xbf16>
    %c0_82 = arith.constant 0 : index
    %c60 = arith.constant 60 : index
    %196 = vector.load %arg15[%c0_82, %c60] : memref<8x96xbf16, #tpu.memory_space<vmem>>, vector<8x4xbf16>
    %197 = vector.shape_cast %196 : vector<8x4xbf16> to vector<1x8x4xbf16>
    %c0_83 = arith.constant 0 : index
    %c92 = arith.constant 92 : index
    %198 = vector.load %arg15[%c0_83, %c92] : memref<8x96xbf16, #tpu.memory_space<vmem>>, vector<8x4xbf16>
    %199 = vector.shape_cast %198 : vector<8x4xbf16> to vector<1x8x4xbf16>
    "tpu.trace_start"() <{level = 10 : i32, message = "gqd,gkd->gqk"}> : () -> ()
    %cst_84 = arith.constant dense<0.000000e+00> : vector<1x8x8xf32>
    %200 = tpu.matmul %195, %197, %cst_84 {dimension_numbers = #tpu.dot_dimension_numbers<[2], [2], [1], [1], [0, 0, 0, 1, 1, 1], [0], [0]>} : vector<1x8x4xbf16>, vector<1x8x4xbf16>, vector<1x8x8xf32> -> vector<1x8x8xf32>
    "tpu.trace_stop"() : () -> ()
    %cst_85 = arith.constant dense<0xFF800000> : vector<1x8xf32>
    %201 = vector.multi_reduction <maximumf>, %200, %cst_85 [2] : vector<1x8x8xf32> to vector<1x8xf32>
    %202 = vector.shape_cast %201 : vector<1x8xf32> to vector<1x8x1xf32>
    %203 = vector.broadcast %202 : vector<1x8x1xf32> to vector<1x8x8xf32>
    %204 = arith.subf %200, %203 : vector<1x8x8xf32>
    %205 = math.exp %204 : vector<1x8x8xf32>
    %cst_86 = arith.constant dense<0.000000e+00> : vector<1x8xf32>
    %206 = vector.multi_reduction <add>, %205, %cst_86 [2] : vector<1x8x8xf32> to vector<1x8xf32>
    %207 = vector.shape_cast %206 : vector<1x8xf32> to vector<1x8x1xf32>
    %208 = tpu.reciprocal %207 {approx = true} : vector<1x8x1xf32> -> vector<1x8x1xf32>
    %209 = vector.broadcast %208 : vector<1x8x1xf32> to vector<1x8x8xf32>
    %210 = arith.mulf %205, %209 : vector<1x8x8xf32>
    %211 = arith.truncf %210 : vector<1x8x8xf32> to vector<1x8x8xbf16>
    "tpu.trace_start"() <{level = 10 : i32, message = "gqk,gkd->gqd"}> : () -> ()
    %cst_87 = arith.constant dense<0.000000e+00> : vector<1x8x4xf32>
    %212 = tpu.matmul %211, %199, %cst_87 {dimension_numbers = #tpu.dot_dimension_numbers<[2], [1], [1], [2], [0, 0, 0, 1, 1, 2], [0], [0]>} : vector<1x8x8xbf16>, vector<1x8x4xbf16>, vector<1x8x4xf32> -> vector<1x8x4xf32>
    "tpu.trace_stop"() : () -> ()
    %213 = vector.shape_cast %212 : vector<1x8x4xf32> to vector<8x4xf32>
    %214 = arith.truncf %213 : vector<8x4xf32> to vector<8x4xbf16>
    %c0_88 = arith.constant 0 : index
    %c28_89 = arith.constant 28 : index
    %215 = vector.load %arg16[%c0_88, %c28_89] : memref<8x32xbf16, #tpu.memory_space<vmem>>, vector<8x4xbf16>
    tpu.vector_store %arg16[%c0_88, %c28_89], %214 {strides = array<i32>} : memref<8x32xbf16, #tpu.memory_space<vmem>>, vector<8x4xbf16>,
    %c0_90 = arith.constant 0 : index
    %c0_91 = arith.constant 0 : index
    %216 = vector.load %arg16[%c0_90, %c0_91] : memref<8x32xbf16, #tpu.memory_space<vmem>>, vector<8x32xbf16>
    %c0_92 = arith.constant 0 : index
    %c0_93 = arith.constant 0 : index
    %217 = vector.load %arg6[%c0_92, %c0_93] : memref<32x32xbf16, #tpu.memory_space<vmem>>, vector<32x32xbf16>
    %cst_94 = arith.constant dense<0.000000e+00> : vector<8x32xf32>
    %218 = tpu.matmul %216, %217, %cst_94 {dimension_numbers = #tpu.dot_dimension_numbers<[1], [0], [0], [1], [0, 0, 1, 1], [], []>} : vector<8x32xbf16>, vector<32x32xbf16>, vector<8x32xf32> -> vector<8x32xf32>
    %c0_95 = arith.constant 0 : index
    %c0_96 = arith.constant 0 : index
    %219 = vector.load %arg7[%c0_95, %c0_96] : memref<1x32xf32, #tpu.memory_space<vmem>>, vector<1x32xf32>
    %220 = vector.shape_cast %219 : vector<1x32xf32> to vector<32xf32>
    %221 = vector.shape_cast %220 : vector<32xf32> to vector<1x32xf32>
    %222 = vector.broadcast %221 : vector<1x32xf32> to vector<8x32xf32>
    %223 = arith.addf %218, %222 : vector<8x32xf32>
    %224 = arith.addf %1, %223 : vector<8x32xf32>
    %c0_97 = arith.constant 0 : index
    %c0_98 = arith.constant 0 : index
    %225 = vector.load %arg8[%c0_97, %c0_98] : memref<1x32xf32, #tpu.memory_space<vmem>>, vector<1x32xf32>
    %226 = vector.shape_cast %225 : vector<1x32xf32> to vector<32xf32>
    %c0_99 = arith.constant 0 : index
    %c0_100 = arith.constant 0 : index
    %227 = vector.load %arg9[%c0_99, %c0_100] : memref<1x32xf32, #tpu.memory_space<vmem>>, vector<1x32xf32>
    %228 = vector.shape_cast %227 : vector<1x32xf32> to vector<32xf32>
    %cst_101 = arith.constant dense<0.000000e+00> : vector<8xf32>
    %229 = vector.multi_reduction <add>, %224, %cst_101 [1] : vector<8x32xf32> to vector<8xf32>
    %230 = vector.shape_cast %229 : vector<8xf32> to vector<8x1xf32>
    %cst_102 = arith.constant 3.200000e+01 : f32
    %231 = vector.broadcast %cst_102 : f32 to vector<8x1xf32>
    %232 = arith.divf %230, %231 : vector<8x1xf32>
    %233 = vector.broadcast %232 : vector<8x1xf32> to vector<8x32xf32>
    %234 = arith.subf %224, %233 : vector<8x32xf32>
    %235 = arith.mulf %234, %234 : vector<8x32xf32>
    %cst_103 = arith.constant dense<0.000000e+00> : vector<8xf32>
    %236 = vector.multi_reduction <add>, %235, %cst_103 [1] : vector<8x32xf32> to vector<8xf32>
    %237 = vector.shape_cast %236 : vector<8xf32> to vector<8x1xf32>
    %cst_104 = arith.constant 3.200000e+01 : f32
    %238 = vector.broadcast %cst_104 : f32 to vector<8x1xf32>
    %239 = arith.divf %237, %238 : vector<8x1xf32>
    %240 = vector.broadcast %232 : vector<8x1xf32> to vector<8x32xf32>
    %241 = arith.subf %224, %240 : vector<8x32xf32>
    %cst_105 = arith.constant 9.99999997E-7 : f32
    %242 = vector.broadcast %cst_105 : f32 to vector<8x1xf32>
    %243 = arith.addf %239, %242 : vector<8x1xf32>
    %244 = math.rsqrt %243 : vector<8x1xf32>
    %245 = vector.broadcast %244 : vector<8x1xf32> to vector<8x32xf32>
    %246 = arith.mulf %241, %245 : vector<8x32xf32>
    %247 = vector.shape_cast %226 : vector<32xf32> to vector<1x32xf32>
    %248 = vector.broadcast %247 : vector<1x32xf32> to vector<8x32xf32>
    %249 = arith.mulf %246, %248 : vector<8x32xf32>
    %250 = vector.shape_cast %228 : vector<32xf32> to vector<1x32xf32>
    %251 = vector.broadcast %250 : vector<1x32xf32> to vector<8x32xf32>
    %252 = arith.addf %249, %251 : vector<8x32xf32>
    %253 = arith.truncf %252 : vector<8x32xf32> to vector<8x32xbf16>
    %c0_106 = arith.constant 0 : index
    %c0_107 = arith.constant 0 : index
    %254 = vector.load %arg10[%c0_106, %c0_107] : memref<32x128xbf16, #tpu.memory_space<vmem>>, vector<32x128xbf16>
    %cst_108 = arith.constant dense<0.000000e+00> : vector<8x128xf32>
    %255 = tpu.matmul %253, %254, %cst_108 {dimension_numbers = #tpu.dot_dimension_numbers<[1], [0], [0], [1], [0, 0, 1, 1], [], []>} : vector<8x32xbf16>, vector<32x128xbf16>, vector<8x128xf32> -> vector<8x128xf32>
    %c0_109 = arith.constant 0 : index
    %c0_110 = arith.constant 0 : index
    %256 = vector.load %arg11[%c0_109, %c0_110] : memref<1x128xf32, #tpu.memory_space<vmem>>, vector<1x128xf32>
    %257 = vector.shape_cast %256 : vector<1x128xf32> to vector<128xf32>
    %258 = vector.shape_cast %257 : vector<128xf32> to vector<1x128xf32>
    %259 = vector.broadcast %258 : vector<1x128xf32> to vector<8x128xf32>
    %260 = arith.addf %255, %259 : vector<8x128xf32>
    %cst_111 = arith.constant 5.000000e-01 : f32
    %261 = vector.broadcast %cst_111 : f32 to vector<8x128xf32>
    %262 = arith.mulf %261, %260 : vector<8x128xf32>
    %cst_112 = arith.constant 4.471500e-02 : f32
    %263 = vector.broadcast %cst_112 : f32 to vector<8x128xf32>
    %264 = arith.mulf %263, %260 : vector<8x128xf32>
    %265 = arith.mulf %264, %260 : vector<8x128xf32>
    %266 = arith.mulf %265, %260 : vector<8x128xf32>
    %267 = arith.addf %260, %266 : vector<8x128xf32>
    %cst_113 = arith.constant 0.797884583 : f32
    %268 = vector.broadcast %cst_113 : f32 to vector<8x128xf32>
    %269 = arith.mulf %268, %267 : vector<8x128xf32>
    %270 = math.tanh %269 : vector<8x128xf32>
    %cst_114 = arith.constant 1.000000e+00 : f32
    %271 = vector.broadcast %cst_114 : f32 to vector<8x128xf32>
    %272 = arith.addf %271, %270 : vector<8x128xf32>
    %273 = arith.mulf %262, %272 : vector<8x128xf32>
    %274 = arith.truncf %273 : vector<8x128xf32> to vector<8x128xbf16>
    %c0_115 = arith.constant 0 : index
    %c0_116 = arith.constant 0 : index
    %275 = vector.load %arg12[%c0_115, %c0_116] : memref<128x32xbf16, #tpu.memory_space<vmem>>, vector<128x32xbf16>
    %cst_117 = arith.constant dense<0.000000e+00> : vector<8x32xf32>
    %276 = tpu.matmul %274, %275, %cst_117 {dimension_numbers = #tpu.dot_dimension_numbers<[1], [0], [0], [1], [0, 0, 1, 1], [], []>} : vector<8x128xbf16>, vector<128x32xbf16>, vector<8x32xf32> -> vector<8x32xf32>
    %c0_118 = arith.constant 0 : index
    %c0_119 = arith.constant 0 : index
    %277 = vector.load %arg13[%c0_118, %c0_119] : memref<1x32xf32, #tpu.memory_space<vmem>>, vector<1x32xf32>
    %278 = vector.shape_cast %277 : vector<1x32xf32> to vector<32xf32>
    %279 = vector.shape_cast %278 : vector<32xf32> to vector<1x32xf32>
    %280 = vector.broadcast %279 : vector<1x32xf32> to vector<8x32xf32>
    %281 = arith.addf %276, %280 : vector<8x32xf32>
    %282 = arith.addf %224, %281 : vector<8x32xf32>
    %283 = vector.shape_cast %282 : vector<8x32xf32> to vector<1x8x32xf32>
    %c0_120 = arith.constant 0 : index
    %c0_121 = arith.constant 0 : index
    %c0_122 = arith.constant 0 : index
    %284 = vector.load %arg14[%c0_120, %c0_121, %c0_122] : memref<1x8x32xf32, #tpu.memory_space<vmem>>, vector<1x8x32xf32>
    tpu.vector_store %arg14[%c0_120, %c0_121, %c0_122], %283 {strides = array<i32>} : memref<1x8x32xf32, #tpu.memory_space<vmem>>, vector<1x8x32xf32>,
    return
  }
  func.func @transform_0(%arg0: i32) -> (i32, i32, i32) {
    %c0_i32 = arith.constant 0 : i32
    %c0_i32_0 = arith.constant 0 : i32
    %c0_i32_1 = arith.constant 0 : i32
    return %arg0, %c0_i32, %c0_i32_0 : i32, i32, i32
  }
  func.func @transform_1(%arg0: i32) -> (i32, i32) {
    %c0_i32 = arith.constant 0 : i32
    %c0_i32_0 = arith.constant 0 : i32
    %c0_i32_1 = arith.constant 0 : i32
    return %c0_i32, %c0_i32_0 : i32, i32
  }
  func.func @transform_2(%arg0: i32) -> (i32, i32) {
    %c0_i32 = arith.constant 0 : i32
    %c0_i32_0 = arith.constant 0 : i32
    %c0_i32_1 = arith.constant 0 : i32
    return %c0_i32, %c0_i32_0 : i32, i32
  }
  func.func @transform_3(%arg0: i32) -> (i32, i32) {
    %c0_i32 = arith.constant 0 : i32
    %c0_i32_0 = arith.constant 0 : i32
    %c0_i32_1 = arith.constant 0 : i32
    return %c0_i32, %c0_i32_0 : i32, i32
  }
  func.func @transform_4(%arg0: i32) -> (i32, i32) {
    %c0_i32 = arith.constant 0 : i32
    %c0_i32_0 = arith.constant 0 : i32
    %c0_i32_1 = arith.constant 0 : i32
    return %c0_i32, %c0_i32_0 : i32, i32
  }
  func.func @transform_5(%arg0: i32) -> (i32, i32) {
    %c0_i32 = arith.constant 0 : i32
    %c0_i32_0 = arith.constant 0 : i32
    %c0_i32_1 = arith.constant 0 : i32
    return %c0_i32, %c0_i32_0 : i32, i32
  }
  func.func @transform_6(%arg0: i32) -> (i32, i32) {
    %c0_i32 = arith.constant 0 : i32
    %c0_i32_0 = arith.constant 0 : i32
    %c0_i32_1 = arith.constant 0 : i32
    return %c0_i32, %c0_i32_0 : i32, i32
  }
  func.func @transform_7(%arg0: i32) -> (i32, i32) {
    %c0_i32 = arith.constant 0 : i32
    %c0_i32_0 = arith.constant 0 : i32
    %c0_i32_1 = arith.constant 0 : i32
    return %c0_i32, %c0_i32_0 : i32, i32
  }
  func.func @transform_8(%arg0: i32) -> (i32, i32) {
    %c0_i32 = arith.constant 0 : i32
    %c0_i32_0 = arith.constant 0 : i32
    %c0_i32_1 = arith.constant 0 : i32
    return %c0_i32, %c0_i32_0 : i32, i32
  }
  func.func @transform_9(%arg0: i32) -> (i32, i32) {
    %c0_i32 = arith.constant 0 : i32
    %c0_i32_0 = arith.constant 0 : i32
    %c0_i32_1 = arith.constant 0 : i32
    return %c0_i32, %c0_i32_0 : i32, i32
  }
  func.func @transform_10(%arg0: i32) -> (i32, i32) {
    %c0_i32 = arith.constant 0 : i32
    %c0_i32_0 = arith.constant 0 : i32
    %c0_i32_1 = arith.constant 0 : i32
    return %c0_i32, %c0_i32_0 : i32, i32
  }
  func.func @transform_11(%arg0: i32) -> (i32, i32) {
    %c0_i32 = arith.constant 0 : i32
    %c0_i32_0 = arith.constant 0 : i32
    %c0_i32_1 = arith.constant 0 : i32
    return %c0_i32, %c0_i32_0 : i32, i32
  }
  func.func @transform_12(%arg0: i32) -> (i32, i32) {
    %c0_i32 = arith.constant 0 : i32
    %c0_i32_0 = arith.constant 0 : i32
    %c0_i32_1 = arith.constant 0 : i32
    return %c0_i32, %c0_i32_0 : i32, i32
  }
  func.func @transform_13(%arg0: i32) -> (i32, i32, i32) {
    %c0_i32 = arith.constant 0 : i32
    %c0_i32_0 = arith.constant 0 : i32
    %c0_i32_1 = arith.constant 0 : i32
    return %arg0, %c0_i32, %c0_i32_0 : i32, i32, i32
  }
}

</mosaic_0001>

<llo_original>
// kernel: tpu_custom_call.1
$region0: #{tpu_custom_call.1}
  #allocation0 [shape = 'u32[]', space=smem, size = 0x4, offset = 0x4, fixed_abs, tag = 'smem constant byte address 0x4 - core index']
  #allocation1 [shape = 'u32[144,128]{1,0:T(1,128)}', space=vmem, size = 0x12000, scoped, tag = 'internal scratch']
  #allocation2 [shape = 'bf16[8,96]{1,0:T(8,128)(2,1)}', space=vmem, size = 0x800, scoped, tag = 'scratch operand']
  #allocation3 [shape = 'bf16[8,32]{1,0:T(8,128)(2,1)}', space=vmem, size = 0x800, scoped, tag = 'scratch operand']
  %s0 = inlined_call_operand.vmem [shape: f32[2,8,32], index: 0, kind: input, shape index: {}]
  %s1 = inlined_call_operand.vmem [shape: f32[1,32], index: 1, kind: input, shape index: {}]
  %s2 = inlined_call_operand.vmem [shape: f32[1,32], index: 2, kind: input, shape index: {}]
  %s3 = inlined_call_operand.vmem [shape: bf16[32,96], index: 3, kind: input, shape index: {}]
  %s4 = inlined_call_operand.vmem [shape: f32[1,96], index: 4, kind: input, shape index: {}]
  %s5 = inlined_call_operand.vmem [shape: bf16[32,32], index: 5, kind: input, shape index: {}]
  %s6 = inlined_call_operand.vmem [shape: f32[1,32], index: 6, kind: input, shape index: {}]
  %s7 = inlined_call_operand.vmem [shape: f32[1,32], index: 7, kind: input, shape index: {}]
  %s8 = inlined_call_operand.vmem [shape: f32[1,32], index: 8, kind: input, shape index: {}]
  %s9 = inlined_call_operand.vmem [shape: bf16[32,128], index: 9, kind: input, shape index: {}]
  %s10 = inlined_call_operand.vmem [shape: f32[1,128], index: 10, kind: input, shape index: {}]
  %s11 = inlined_call_operand.vmem [shape: bf16[128,32], index: 11, kind: input, shape index: {}]
  %s12 = inlined_call_operand.vmem [shape: f32[1,32], index: 12, kind: input, shape index: {}]
  %s13 = inlined_call_operand.hbm [shape: f32[2,8,32], index: 13, kind: output, shape index: {}]
  %s14 = sld [smem:[#allocation0]]
  $region85: #{tpu_custom_call.1} parent=0
    _
  %s16 = ssub.s32 1, %s14
  %s17 = scalar_select 0, %s16, %s14
  $region1: #{tpu_custom_call.1} parent=0
    #allocation4 [shape = 'u8[8192]{0}', space=vmem, size = 0x2000, scoped, tag = 'output window, operand 0']
    #allocation5 [shape = 's32[2]{0}', space=sflag, size = 0x8, scoped, tag = 'scoped memory for tpu_custom_call.1']
    %18 = vsyncpa [#allocation5], 0
    %s19 = scalar_lea.sflag [#allocation5], 1
    %20 = vsyncpa %s19, 0
    loop: start=0, step=1, limit=4
    $region2: #{tpu_custom_call.1} parent=1 // loop_pre_header
      _
    $region3: #{tpu_custom_call.1} parent=1 // loop_header
      %s22 = sphi 0, %s26
      %p23 = scmp.ge.s32.totalorder %s22, 4
      %s32 = sphi 0, %s34
      %s35 = sphi 0, %s32
      %s36 = sphi 0, %s35
      %s52 = sphi 0, %s36
      %s56 = sphi 0, %s56
      %s58 = sphi 0, %s56
      %s59 = sphi 0, %s58
      %s73 = sphi 0, %s59
      %s77 = sphi 0, %s77
      %s79 = sphi 0, %s77
      %s80 = sphi 0, %s79
      %s94 = sphi 0, %s80
      %s98 = sphi 0, %s98
      %s100 = sphi 0, %s98
      %s101 = sphi 0, %s100
      %s115 = sphi 0, %s101
      %s119 = sphi 0, %s119
      %s121 = sphi 0, %s119
      %s122 = sphi 0, %s121
      %s136 = sphi 0, %s122
      %s140 = sphi 0, %s140
      %s142 = sphi 0, %s140
      %s143 = sphi 0, %s142
      %s157 = sphi 0, %s143
      %s161 = sphi 0, %s161
      %s163 = sphi 0, %s161
      %s164 = sphi 0, %s163
      %s178 = sphi 0, %s164
      %s182 = sphi 0, %s182
      %s184 = sphi 0, %s182
      %s185 = sphi 0, %s184
      %s199 = sphi 0, %s185
      %s203 = sphi 0, %s203
      %s205 = sphi 0, %s203
      %s206 = sphi 0, %s205
      %s220 = sphi 0, %s206
      %s224 = sphi 0, %s224
      %s226 = sphi 0, %s224
      %s227 = sphi 0, %s226
      %s241 = sphi 0, %s227
      %s245 = sphi 0, %s245
      %s247 = sphi 0, %s245
      %s248 = sphi 0, %s247
      %s262 = sphi 0, %s248
      %s266 = sphi 0, %s266
      %s268 = sphi 0, %s266
      %s269 = sphi 0, %s268
      %s283 = sphi 0, %s269
      %s287 = sphi 0, %s287
      %s289 = sphi 0, %s287
      %s290 = sphi 0, %s289
      %s304 = sphi 0, %s290
      %s310 = sphi 0, %s312
      %s313 = sphi 0, %s310
      %s314 = sphi 0, %s313
      %s330 = sphi 0, %s314
    $region4: #{tpu_custom_call.1} parent=1 // loop_header_branch
      %25 = sbr.rel (%p23) target = $region8
    $region5: #{tpu_custom_call.1} parent=1 // loop_body
      %s27 = ssub.s32 %s22, 1
      %s28 = ssub.s32 %s22, 2
      %s29 = sadd.s32 %s22, 1
      %s30 = ssub.s32 %s22, %s29
      %p31 = scmp.eq.s32.totalorder %s30, 0
      %s33 = sadd.s32 %s32, 1
      %s34 = scalar_select %p31, %s32, %s33
      %p37 = pneg %p31
      %p38 = scmp.eq.s32.totalorder %s22, 1
      %p39 = por %p37, %p38
      %p40 = scmp.ne.s32.totalorder %s32, %s35
      %p41 = scmp.eq.s32.totalorder %s22, 0
      %p42 = por %p40, %p41
      %p43 = scmp.ne.s32.totalorder %s32, %s35
      %p44 = scmp.eq.s32.totalorder %s27, 1
      %p45 = por %p43, %p44
      %p46 = scmp.ne.s32.totalorder %s35, %s36
      %p47 = scmp.eq.s32.totalorder %s27, 0
      %p48 = por %p46, %p47
      %p49 = scmp.ne.s32.totalorder %s35, %s36
      %p50 = scmp.eq.s32.totalorder %s28, 1
      %p51 = por %p49, %p50
      %p53 = scmp.ne.s32.totalorder %s36, %s52
      %p54 = scmp.eq.s32.totalorder %s28, 0
      %p55 = por %p53, %p54
      %s57 = sadd.s32 %s56, 1
      %p60 = scmp.eq.s32.totalorder %s22, 1
      %p61 = scmp.ne.s32.totalorder %s56, %s58
      %p62 = scmp.eq.s32.totalorder %s22, 0
      %p63 = por %p61, %p62
      %p64 = scmp.ne.s32.totalorder %s56, %s58
      %p65 = scmp.eq.s32.totalorder %s27, 1
      %p66 = por %p64, %p65
      %p67 = scmp.ne.s32.totalorder %s58, %s59
      %p68 = scmp.eq.s32.totalorder %s27, 0
      %p69 = por %p67, %p68
      %p70 = scmp.ne.s32.totalorder %s58, %s59
      %p71 = scmp.eq.s32.totalorder %s28, 1
      %p72 = por %p70, %p71
      %p74 = scmp.ne.s32.totalorder %s59, %s73
      %p75 = scmp.eq.s32.totalorder %s28, 0
      %p76 = por %p74, %p75
      %s78 = sadd.s32 %s77, 1
      %p81 = scmp.eq.s32.totalorder %s22, 1
      %p82 = scmp.ne.s32.totalorder %s77, %s79
      %p83 = scmp.eq.s32.totalorder %s22, 0
      %p84 = por %p82, %p83
      %p85 = scmp.ne.s32.totalorder %s77, %s79
      %p86 = scmp.eq.s32.totalorder %s27, 1
      %p87 = por %p85, %p86
      %p88 = scmp.ne.s32.totalorder %s79, %s80
      %p89 = scmp.eq.s32.totalorder %s27, 0
      %p90 = por %p88, %p89
      %p91 = scmp.ne.s32.totalorder %s79, %s80
      %p92 = scmp.eq.s32.totalorder %s28, 1
      %p93 = por %p91, %p92
      %p95 = scmp.ne.s32.totalorder %s80, %s94
      %p96 = scmp.eq.s32.totalorder %s28, 0
      %p97 = por %p95, %p96
      %s99 = sadd.s32 %s98, 1
      %p102 = scmp.eq.s32.totalorder %s22, 1
      %p103 = scmp.ne.s32.totalorder %s98, %s100
      %p104 = scmp.eq.s32.totalorder %s22, 0
      %p105 = por %p103, %p104
      %p106 = scmp.ne.s32.totalorder %s98, %s100
      %p107 = scmp.eq.s32.totalorder %s27, 1
      %p108 = por %p106, %p107
      %p109 = scmp.ne.s32.totalorder %s100, %s101
      %p110 = scmp.eq.s32.totalorder %s27, 0
      %p111 = por %p109, %p110
      %p112 = scmp.ne.s32.totalorder %s100, %s101
      %p113 = scmp.eq.s32.totalorder %s28, 1
      %p114 = por %p112, %p113
      %p116 = scmp.ne.s32.totalorder %s101, %s115
      %p117 = scmp.eq.s32.totalorder %s28, 0
      %p118 = por %p116, %p117
      %s120 = sadd.s32 %s119, 1
      %p123 = scmp.eq.s32.totalorder %s22, 1
      %p124 = scmp.ne.s32.totalorder %s119, %s121
      %p125 = scmp.eq.s32.totalorder %s22, 0
      %p126 = por %p124, %p125
      %p127 = scmp.ne.s32.totalorder %s119, %s121
      %p128 = scmp.eq.s32.totalorder %s27, 1
      %p129 = por %p127, %p128
      %p130 = scmp.ne.s32.totalorder %s121, %s122
      %p131 = scmp.eq.s32.totalorder %s27, 0
      %p132 = por %p130, %p131
      %p133 = scmp.ne.s32.totalorder %s121, %s122
      %p134 = scmp.eq.s32.totalorder %s28, 1
      %p135 = por %p133, %p134
      %p137 = scmp.ne.s32.totalorder %s122, %s136
      %p138 = scmp.eq.s32.totalorder %s28, 0
      %p139 = por %p137, %p138
      %s141 = sadd.s32 %s140, 1
      %p144 = scmp.eq.s32.totalorder %s22, 1
      %p145 = scmp.ne.s32.totalorder %s140, %s142
      %p146 = scmp.eq.s32.totalorder %s22, 0
      %p147 = por %p145, %p146
      %p148 = scmp.ne.s32.totalorder %s140, %s142
      %p149 = scmp.eq.s32.totalorder %s27, 1
      %p150 = por %p148, %p149
      %p151 = scmp.ne.s32.totalorder %s142, %s143
      %p152 = scmp.eq.s32.totalorder %s27, 0
      %p153 = por %p151, %p152
      %p154 = scmp.ne.s32.totalorder %s142, %s143
      %p155 = scmp.eq.s32.totalorder %s28, 1
      %p156 = por %p154, %p155
      %p158 = scmp.ne.s32.totalorder %s143, %s157
      %p159 = scmp.eq.s32.totalorder %s28, 0
      %p160 = por %p158, %p159
      %s162 = sadd.s32 %s161, 1
      %p165 = scmp.eq.s32.totalorder %s22, 1
      %p166 = scmp.ne.s32.totalorder %s161, %s163
      %p167 = scmp.eq.s32.totalorder %s22, 0
      %p168 = por %p166, %p167
      %p169 = scmp.ne.s32.totalorder %s161, %s163
      %p170 = scmp.eq.s32.totalorder %s27, 1
      %p171 = por %p169, %p170
      %p172 = scmp.ne.s32.totalorder %s163, %s164
      %p173 = scmp.eq.s32.totalorder %s27, 0
      %p174 = por %p172, %p173
      %p175 = scmp.ne.s32.totalorder %s163, %s164
      %p176 = scmp.eq.s32.totalorder %s28, 1
      %p177 = por %p175, %p176
      %p179 = scmp.ne.s32.totalorder %s164, %s178
      %p180 = scmp.eq.s32.totalorder %s28, 0
      %p181 = por %p179, %p180
      %s183 = sadd.s32 %s182, 1
      %p186 = scmp.eq.s32.totalorder %s22, 1
      %p187 = scmp.ne.s32.totalorder %s182, %s184
      %p188 = scmp.eq.s32.totalorder %s22, 0
      %p189 = por %p187, %p188
      %p190 = scmp.ne.s32.totalorder %s182, %s184
      %p191 = scmp.eq.s32.totalorder %s27, 1
      %p192 = por %p190, %p191
      %p193 = scmp.ne.s32.totalorder %s184, %s185
      %p194 = scmp.eq.s32.totalorder %s27, 0
      %p195 = por %p193, %p194
      %p196 = scmp.ne.s32.totalorder %s184, %s185
      %p197 = scmp.eq.s32.totalorder %s28, 1
      %p198 = por %p196, %p197
      %p200 = scmp.ne.s32.totalorder %s185, %s199
      %p201 = scmp.eq.s32.totalorder %s28, 0
      %p202 = por %p200, %p201
      %s204 = sadd.s32 %s203, 1
      %p207 = scmp.eq.s32.totalorder %s22, 1
      %p208 = scmp.ne.s32.totalorder %s203, %s205
      %p209 = scmp.eq.s32.totalorder %s22, 0
      %p210 = por %p208, %p209
      %p211 = scmp.ne.s32.totalorder %s203, %s205
      %p212 = scmp.eq.s32.totalorder %s27, 1
      %p213 = por %p211, %p212
      %p214 = scmp.ne.s32.totalorder %s205, %s206
      %p215 = scmp.eq.s32.totalorder %s27, 0
      %p216 = por %p214, %p215
      %p217 = scmp.ne.s32.totalorder %s205, %s206
      %p218 = scmp.eq.s32.totalorder %s28, 1
      %p219 = por %p217, %p218
      %p221 = scmp.ne.s32.totalorder %s206, %s220
      %p222 = scmp.eq.s32.totalorder %s28, 0
      %p223 = por %p221, %p222
      %s225 = sadd.s32 %s224, 1
      %p228 = scmp.eq.s32.totalorder %s22, 1
      %p229 = scmp.ne.s32.totalorder %s224, %s226
      %p230 = scmp.eq.s32.totalorder %s22, 0
      %p231 = por %p229, %p230
      %p232 = scmp.ne.s32.totalorder %s224, %s226
      %p233 = scmp.eq.s32.totalorder %s27, 1
      %p234 = por %p232, %p233
      %p235 = scmp.ne.s32.totalorder %s226, %s227
      %p236 = scmp.eq.s32.totalorder %s27, 0
      %p237 = por %p235, %p236
      %p238 = scmp.ne.s32.totalorder %s226, %s227
      %p239 = scmp.eq.s32.totalorder %s28, 1
      %p240 = por %p238, %p239
      %p242 = scmp.ne.s32.totalorder %s227, %s241
      %p243 = scmp.eq.s32.totalorder %s28, 0
      %p244 = por %p242, %p243
      %s246 = sadd.s32 %s245, 1
      %p249 = scmp.eq.s32.totalorder %s22, 1
      %p250 = scmp.ne.s32.totalorder %s245, %s247
      %p251 = scmp.eq.s32.totalorder %s22, 0
      %p252 = por %p250, %p251
      %p253 = scmp.ne.s32.totalorder %s245, %s247
      %p254 = scmp.eq.s32.totalorder %s27, 1
      %p255 = por %p253, %p254
      %p256 = scmp.ne.s32.totalorder %s247, %s248
      %p257 = scmp.eq.s32.totalorder %s27, 0
      %p258 = por %p256, %p257
      %p259 = scmp.ne.s32.totalorder %s247, %s248
      %p260 = scmp.eq.s32.totalorder %s28, 1
      %p261 = por %p259, %p260
      %p263 = scmp.ne.s32.totalorder %s248, %s262
      %p264 = scmp.eq.s32.totalorder %s28, 0
      %p265 = por %p263, %p264
      %s267 = sadd.s32 %s266, 1
      %p270 = scmp.eq.s32.totalorder %s22, 1
      %p271 = scmp.ne.s32.totalorder %s266, %s268
      %p272 = scmp.eq.s32.totalorder %s22, 0
      %p273 = por %p271, %p272
      %p274 = scmp.ne.s32.totalorder %s266, %s268
      %p275 = scmp.eq.s32.totalorder %s27, 1
      %p276 = por %p274, %p275
      %p277 = scmp.ne.s32.totalorder %s268, %s269
      %p278 = scmp.eq.s32.totalorder %s27, 0
      %p279 = por %p277, %p278
      %p280 = scmp.ne.s32.totalorder %s268, %s269
      %p281 = scmp.eq.s32.totalorder %s28, 1
      %p282 = por %p280, %p281
      %p284 = scmp.ne.s32.totalorder %s269, %s283
      %p285 = scmp.eq.s32.totalorder %s28, 0
      %p286 = por %p284, %p285
      %s288 = sadd.s32 %s287, 1
      %p291 = scmp.eq.s32.totalorder %s22, 1
      %p292 = scmp.ne.s32.totalorder %s287, %s289
      %p293 = scmp.eq.s32.totalorder %s22, 0
      %p294 = por %p292, %p293
      %p295 = scmp.ne.s32.totalorder %s287, %s289
      %p296 = scmp.eq.s32.totalorder %s27, 1
      %p297 = por %p295, %p296
      %p298 = scmp.ne.s32.totalorder %s289, %s290
      %p299 = scmp.eq.s32.totalorder %s27, 0
      %p300 = por %p298, %p299
      %p301 = scmp.ne.s32.totalorder %s289, %s290
      %p302 = scmp.eq.s32.totalorder %s28, 1
      %p303 = por %p301, %p302
      %p305 = scmp.ne.s32.totalorder %s290, %s304
      %p306 = scmp.eq.s32.totalorder %s28, 0
      %p307 = por %p305, %p306
      %s308 = ssub.s32 %s22, %s29
      %p309 = scmp.eq.s32.totalorder %s308, 0
      %s311 = sadd.s32 %s310, 1
      %s312 = scalar_select %p309, %s310, %s311
      %p315 = pneg %p309
      %p316 = scmp.eq.s32.totalorder %s22, 1
      %p317 = por %p315, %p316
      %p318 = scmp.ne.s32.totalorder %s310, %s313
      %p319 = scmp.eq.s32.totalorder %s22, 0
      %p320 = por %p318, %p319
      %p321 = scmp.ne.s32.totalorder %s310, %s313
      %p322 = scmp.eq.s32.totalorder %s27, 1
      %p323 = por %p321, %p322
      %p324 = scmp.ne.s32.totalorder %s313, %s314
      %p325 = scmp.eq.s32.totalorder %s27, 0
      %p326 = por %p324, %p325
      %p327 = scmp.ne.s32.totalorder %s313, %s314
      %p328 = scmp.eq.s32.totalorder %s28, 1
      %p329 = por %p327, %p328
      %p331 = scmp.ne.s32.totalorder %s314, %s330
      %p332 = scmp.eq.s32.totalorder %s28, 0
      %p333 = por %p331, %p332
      %p334 = scmp.le.s32.totalorder 1, %s22
      %p335 = scmp.lt.s32.totalorder %s22, 3
      %p336 = pnand %p334, %p335
      %p337 = pneg %p336
      // Predicated region
      $region9: #{tpu_custom_call.1} parent=5 // pred_check
        _
      $region10: #{tpu_custom_call.1} parent=5 // pred_check_branch
        %339 = sbr.rel (%p336) target = $region12
      $region11: #{tpu_custom_call.1} parent=5 // pred_region
        %s340 = ssub.s32 %s22, 1
        // Predicated region
        $region13: #{tpu_custom_call.1} parent=11 // pred_check
          %p341 = pneg %p69
        $region14: #{tpu_custom_call.1} parent=11 // pred_check_branch
          %343 = sbr.rel (%p341) target = $region16
        $region15: #{tpu_custom_call.1} parent=11 // pred_region
          _
        $region16: #{tpu_custom_call.1} parent=11 // pred_fallthru
          _
        // Predicated region
        $region17: #{tpu_custom_call.1} parent=11 // pred_check
          %p344 = pneg %p90
        $region18: #{tpu_custom_call.1} parent=11 // pred_check_branch
          %346 = sbr.rel (%p344) target = $region20
        $region19: #{tpu_custom_call.1} parent=11 // pred_region
          _
        $region20: #{tpu_custom_call.1} parent=11 // pred_fallthru
          _
        // Predicated region
        $region21: #{tpu_custom_call.1} parent=11 // pred_check
          %p347 = pneg %p111
        $region22: #{tpu_custom_call.1} parent=11 // pred_check_branch
          %349 = sbr.rel (%p347) target = $region24
        $region23: #{tpu_custom_call.1} parent=11 // pred_region
          _
        $region24: #{tpu_custom_call.1} parent=11 // pred_fallthru
          _
        // Predicated region
        $region25: #{tpu_custom_call.1} parent=11 // pred_check
          %p350 = pneg %p132
        $region26: #{tpu_custom_call.1} parent=11 // pred_check_branch
          %352 = sbr.rel (%p350) target = $region28
        $region27: #{tpu_custom_call.1} parent=11 // pred_region
          _
        $region28: #{tpu_custom_call.1} parent=11 // pred_fallthru
          _
        // Predicated region
        $region29: #{tpu_custom_call.1} parent=11 // pred_check
          %p353 = pneg %p153
        $region30: #{tpu_custom_call.1} parent=11 // pred_check_branch
          %355 = sbr.rel (%p353) target = $region32
        $region31: #{tpu_custom_call.1} parent=11 // pred_region
          _
        $region32: #{tpu_custom_call.1} parent=11 // pred_fallthru
          _
        // Predicated region
        $region33: #{tpu_custom_call.1} parent=11 // pred_check
          %p356 = pneg %p174
        $region34: #{tpu_custom_call.1} parent=11 // pred_check_branch
          %358 = sbr.rel (%p356) target = $region36
        $region35: #{tpu_custom_call.1} parent=11 // pred_region
          _
        $region36: #{tpu_custom_call.1} parent=11 // pred_fallthru
          _
        // Predicated region
        $region37: #{tpu_custom_call.1} parent=11 // pred_check
          %p359 = pneg %p195
        $region38: #{tpu_custom_call.1} parent=11 // pred_check_branch
          %361 = sbr.rel (%p359) target = $region40
        $region39: #{tpu_custom_call.1} parent=11 // pred_region
          _
        $region40: #{tpu_custom_call.1} parent=11 // pred_fallthru
          _
        // Predicated region
        $region41: #{tpu_custom_call.1} parent=11 // pred_check
          %p362 = pneg %p216
        $region42: #{tpu_custom_call.1} parent=11 // pred_check_branch
          %364 = sbr.rel (%p362) target = $region44
        $region43: #{tpu_custom_call.1} parent=11 // pred_region
          _
        $region44: #{tpu_custom_call.1} parent=11 // pred_fallthru
          _
        // Predicated region
        $region45: #{tpu_custom_call.1} parent=11 // pred_check
          %p365 = pneg %p237
        $region46: #{tpu_custom_call.1} parent=11 // pred_check_branch
          %367 = sbr.rel (%p365) target = $region48
        $region47: #{tpu_custom_call.1} parent=11 // pred_region
          _
        $region48: #{tpu_custom_call.1} parent=11 // pred_fallthru
          _
        // Predicated region
        $region49: #{tpu_custom_call.1} parent=11 // pred_check
          %p368 = pneg %p258
        $region50: #{tpu_custom_call.1} parent=11 // pred_check_branch
          %370 = sbr.rel (%p368) target = $region52
        $region51: #{tpu_custom_call.1} parent=11 // pred_region
          _
        $region52: #{tpu_custom_call.1} parent=11 // pred_fallthru
          _
        // Predicated region
        $region53: #{tpu_custom_call.1} parent=11 // pred_check
          %p371 = pneg %p279
        $region54: #{tpu_custom_call.1} parent=11 // pred_check_branch
          %373 = sbr.rel (%p371) target = $region56
        $region55: #{tpu_custom_call.1} parent=11 // pred_region
          _
        $region56: #{tpu_custom_call.1} parent=11 // pred_fallthru
          _
        // Predicated region
        $region57: #{tpu_custom_call.1} parent=11 // pred_check
          %p374 = pneg %p300
        $region58: #{tpu_custom_call.1} parent=11 // pred_check_branch
          %376 = sbr.rel (%p374) target = $region60
        $region59: #{tpu_custom_call.1} parent=11 // pred_region
          _
        $region60: #{tpu_custom_call.1} parent=11 // pred_fallthru
          _
      $region12: #{tpu_custom_call.1} parent=5 // pred_fallthru
        _
      %p377 = scmp.lt.s32.totalorder %s22, 2
      // Predicated region
      $region61: #{tpu_custom_call.1} parent=5 // pred_check
        %p378 = pneg %p377
      $region62: #{tpu_custom_call.1} parent=5 // pred_check_branch
        %380 = sbr.rel (%p378) target = $region64
      $region63: #{tpu_custom_call.1} parent=5 // pred_region
        // Predicated region
        $region65: #{tpu_custom_call.1} parent=63 // pred_check
          %p381 = pneg %p42
        $region66: #{tpu_custom_call.1} parent=63 // pred_check_branch
          %383 = sbr.rel (%p381) target = $region68
        $region67: #{tpu_custom_call.1} parent=63 // pred_region
          %p384 = scmp.lt.s32.totalorder %s22, 1
          %s385 = scalar_select %p384, %s22, 1
          %s386 = smul.addr %s385, 8
          %s387 = scalar_lea.vmem %s0, %s386
        $region68: #{tpu_custom_call.1} parent=63 // pred_fallthru
          _
      $region64: #{tpu_custom_call.1} parent=5 // pred_fallthru
        _
      %p388 = scmp.le.s32.totalorder 1, %s22
      %p389 = scmp.lt.s32.totalorder %s22, 3
      %p390 = pnand %p388, %p389
      %p391 = pneg %p390
      // Predicated region
      $region69: #{tpu_custom_call.1} parent=5 // pred_check
        _
      $region70: #{tpu_custom_call.1} parent=5 // pred_check_branch
        %393 = sbr.rel (%p390) target = $region72
      $region71: #{tpu_custom_call.1} parent=5 // pred_region
        %s394 = ssub.s32 %s22, 1
        %p395 = scmp.lt.s32.totalorder %s27, 1
        %s396 = scalar_select %p395, %s27, 1
        %s397 = smul.addr %s396, 8
        %s398 = scalar_lea.vmem %s0, %s397
        %p399 = pneg %p48
        %p400 = pneg %p45
        %p401 = pneg %p69
        %p402 = pneg %p66
        %p403 = pneg %p90
        %p404 = pneg %p87
        %p405 = pneg %p111
        %p406 = pneg %p108
        %p407 = pneg %p132
        %p408 = pneg %p129
        %p409 = pneg %p153
        %p410 = pneg %p150
        %p411 = pneg %p174
        %p412 = pneg %p171
        %p413 = pneg %p195
        %p414 = pneg %p192
        %p415 = pneg %p216
        %p416 = pneg %p213
        %p417 = pneg %p237
        %p418 = pneg %p234
        %p419 = pneg %p258
        %p420 = pneg %p255
        %p421 = pneg %p279
        %p422 = pneg %p276
        %p423 = pneg %p300
        %p424 = pneg %p297
        %p425 = pneg %p326
        %p426 = pneg %p323
        %s427 = sand.u32 %s313, 1
        %s428 = scalar_lea.sflag [#allocation5], %s427
        %s429 = sand.u32 %s313, 1
        %s430 = smul.addr %s429, 8
        %s431 = scalar_lea.vmem [#allocation4], %s430
        %p432 = scmp.lt.s32.totalorder %s27, 1
        %s433 = scalar_select %p432, %s27, 1
        %s434 = smul.addr %s433, 8
        %s435 = scalar_lea.vmem %s0, %s434
        %v437 = vld [vmem:[%s435] sm:$0xff]
        %v438 = vld [vmem:[%s1] sm:$0x1]
        %v439 = vld [vmem:[%s2] sm:$0x1]
        %vm440 = vcmask 261120
        %v441 = vsel %vm440, %v437, 0.0
        %442 = vadd.xlane.f32.xlu0 %v441
        %v443 = vpop.xlane.xlu0 %442
        %v444 = vrcp.pop 32.0
        %v445 = vmul.f32 %v443, %v444
        %v446 = vsub.f32 %v437, %v445
        %v447 = vmul.f32 %v446, %v446
        %v448 = vsel %vm440, %v447, 0.0
        %449 = vadd.xlane.f32.xlu0 %v448
        %v450 = vpop.xlane.xlu0 %449
        %v451 = vmul.f32 %v450, %v444
        %v452 = vadd.f32 %v451, 1e-06
        %v453 = vrsqrt.pop %v452
        %v454 = vmul.f32 %v446, %v453
        %v456 = vlaneseq
        %v457 = vshrl.u32 %v456, 7
        %v458 = vsub.s32 0, %v457
        %v459 = vrot.slane %v438, %v458
        %v461 = vmul.f32 %v454, %v459
        %v463 = vlaneseq
        %v464 = vshrl.u32 %v463, 7
        %v465 = vsub.s32 0, %v464
        %v466 = vrot.slane %v439, %v465
        %v468 = vadd.f32 %v461, %v466
        %v469 = vpack.c.bf16 %v468, %v468
        %v470 = vld [vmem:[%s3] sm:$0xf]
        %v471 = vld [vmem:[%s3 + $0x4] sm:$0xf]
        %v472 = vld [vmem:[%s3 + $0x8] sm:$0xf]
        %v473 = vld [vmem:[%s3 + $0xc] sm:$0xf]
        %v474 = vld [vmem:[%s4] sm:$0x1]
        %v476 = vlaneseq
        %v477 = vshrl.u32 %v476, 7
        %v478 = vsub.s32 0, %v477
        %v479 = vrot.slane %v474, %v478
        %v485 = vunpack.c.l.b16 %v470
        %v486 = vunpack.c.l.b16 %v471
        %v487 = vunpack.c.l.b16 %v472
        %v488 = vunpack.c.l.b16 %v473
        %v489 = vpack.c.b16 %v486, %v485
        %v490 = vpack.c.b16 %v488, %v487
        %v494 = vsel %vm440, %v469, 0
        %496 = vmatprep.subr.bf16.mxu0 0
        %497 = vmatpush1.bf16.msra.mxu0 %v489
        %498 = vmatprep.subr.bf16.mxu0 0
        %499 = vmatpush1.bf16.msra.mxu0 %v490
        %500 = vmatprep.subr.bf16.mxu0 0
        %501 = vmatpush1.bf16.msra.mxu0 0
        %502 = vmatprep.subr.bf16.mxu0 0
        %503 = vmatpush1.bf16.msra.mxu0 0
        %504 = vmatprep.subr.bf16.mxu0 0
        %505 = vmatpush1.bf16.msra.mxu0 0
        %506 = vmatprep.subr.bf16.mxu0 0
        %507 = vmatpush1.bf16.msra.mxu0 0
        %508 = vmatprep.subr.bf16.mxu0 0
        %509 = vmatpush1.bf16.msra.mxu0 0
        %510 = vmatprep.subr.bf16.mxu0 0
        %511 = vmatpush1.bf16.msra.mxu0 0
        %512 = vmatprep.subr.bf16.mxu0 0
        %513 = vmatpush1.bf16.msra.mxu0 0
        %514 = vmatprep.subr.bf16.mxu0 0
        %515 = vmatpush1.bf16.msra.mxu0 0
        %516 = vmatprep.subr.bf16.mxu0 0
        %517 = vmatpush1.bf16.msra.mxu0 0
        %518 = vmatprep.subr.bf16.mxu0 0
        %519 = vmatpush1.bf16.msra.mxu0 0
        %520 = vmatprep.subr.bf16.mxu0 0
        %521 = vmatpush1.bf16.msra.mxu0 0
        %522 = vmatprep.subr.bf16.mxu0 0
        %523 = vmatpush1.bf16.msra.mxu0 0
        %524 = vmatprep.subr.bf16.mxu0 0
        %525 = vmatpush1.bf16.msra.mxu0 0
        %526 = vmatprep.subr.bf16.mxu0 0
        %527 = vmatpush1.bf16.msra.mxu0 0
        %528 = vmatprep.mubr.bf16.mxu0 0
        %529 = vmatmul.mubr.bf16.gmra.mrb[0].mxu0 %v494
        %v530 = vpop.f32.mrb[0].mxu0
        %v531 = vadd.f32 %v479, %v530
        %v532 = vpop.f32.mrb[0].mxu0
        %v533 = vpop.f32.mrb[0].mxu0
        %v534 = vpop.f32.mrb[0].mxu0
        %535 = vdwg.mxu0
        %v536 = vpack.c.bf16 %v531, %v531
        %vm537 = vcmask 781312
        %538 = vst.msk [vmem:[#allocation2] sm:$0xf] %vm537, %v536
        %v539 = vld [vmem:[#allocation2] sm:$0xf]
        %v541 = vunpack.c.l.b16 %v539
        %v542 = vpack.c.b16 %v541, %v541
        %543 = vrot.lane.b32.xlu0 %v542, 96
        %v544 = vpop.permute.xlu0 %543
        %vm545 = vcmask 31744
        %v547 = vsel %vm545, %v539, 0
        %v550 = vsel %vm545, %v544, 0
        %552 = vmatprep.subr.bf16.mxu0 0
        %553 = vmatpush1.bf16.xpose.msra.mxu0 %v550
        %554 = vmatprep.subr.bf16.mxu0 0
        %555 = vmatpush1.bf16.xpose.msra.mxu0 0
        %556 = vmatprep.subr.bf16.mxu0 0
        %557 = vmatpush1.bf16.xpose.msra.mxu0 0
        %558 = vmatprep.subr.bf16.mxu0 0
        %559 = vmatpush1.bf16.xpose.msra.mxu0 0
        %560 = vmatprep.subr.bf16.mxu0 0
        %561 = vmatpush1.bf16.xpose.msra.mxu0 0
        %562 = vmatprep.subr.bf16.mxu0 0
        %563 = vmatpush1.bf16.xpose.msra.mxu0 0
        %564 = vmatprep.subr.bf16.mxu0 0
        %565 = vmatpush1.bf16.xpose.msra.mxu0 0
        %566 = vmatprep.subr.bf16.mxu0 0
        %567 = vmatpush1.bf16.xpose.msra.mxu0 0
        %568 = vmatprep.subr.bf16.mxu0 0
        %569 = vmatpush1.bf16.xpose.msra.mxu0 0
        %570 = vmatprep.subr.bf16.mxu0 0
        %571 = vmatpush1.bf16.xpose.msra.mxu0 0
        %572 = vmatprep.subr.bf16.mxu0 0
        %573 = vmatpush1.bf16.xpose.msra.mxu0 0
        %574 = vmatprep.subr.bf16.mxu0 0
        %575 = vmatpush1.bf16.xpose.msra.mxu0 0
        %576 = vmatprep.subr.bf16.mxu0 0
        %577 = vmatpush1.bf16.xpose.msra.mxu0 0
        %578 = vmatprep.subr.bf16.mxu0 0
        %579 = vmatpush1.bf16.xpose.msra.mxu0 0
        %580 = vmatprep.subr.bf16.mxu0 0
        %581 = vmatpush1.bf16.xpose.msra.mxu0 0
        %582 = vmatprep.subr.bf16.mxu0 0
        %583 = vmatpush1.bf16.xpose.msra.mxu0 0
        %584 = vmatprep.mubr.bf16.mxu0 0
        %585 = vmatmul.mubr.bf16.gmra.mrb[0].mxu0 %v547
        %v586 = vpop.f32.mrb[0].mxu0
        %v587 = vadd.f32 0.0, %v586
        %v588 = vpop.f32.mrb[0].mxu0
        %v589 = vpop.f32.mrb[0].mxu0
        %v590 = vpop.f32.mrb[0].mxu0
        %591 = vdwg.mxu0
        %vm592 = vcmask 64512
        %v593 = vsel %vm592, %v587, -inf
        %594 = vmax.xlane.f32.xlu0 %v593
        %v595 = vpop.xlane.xlu0 %594
        %v596 = vsub.f32 %v587, %v595
        %v597 = vmul.f32 %v596, 1.442695
        %v598 = vpow.pop %v597
        %v599 = vsel %vm592, %v598, 0.0
        %600 = vadd.xlane.f32.xlu0 %v599
        %v601 = vpop.xlane.xlu0 %600
        %v602 = vrcp.pop %v601
        %v603 = vmul.f32 %v598, %v602
        %v604 = vpack.c.bf16 %v603, %v603
        %605 = vrot.lane.b32.xlu0 %v542, 64
        %v606 = vpop.permute.xlu0 %605
        %v608 = vsel %vm592, %v604, 0
        %vm610 = vcmask 1043456
        %v612 = vsel %vm610, %v606, 0
        %614 = vmatprep.subr.bf16.mxu0 0
        %615 = vmatpush1.bf16.msra.mxu0 %v612
        %616 = vmatprep.subr.bf16.mxu0 0
        %617 = vmatpush1.bf16.msra.mxu0 0
        %618 = vmatprep.subr.bf16.mxu0 0
        %619 = vmatpush1.bf16.msra.mxu0 0
        %620 = vmatprep.subr.bf16.mxu0 0
        %621 = vmatpush1.bf16.msra.mxu0 0
        %622 = vmatprep.subr.bf16.mxu0 0
        %623 = vmatpush1.bf16.msra.mxu0 0
        %624 = vmatprep.subr.bf16.mxu0 0
        %625 = vmatpush1.bf16.msra.mxu0 0
        %626 = vmatprep.subr.bf16.mxu0 0
        %627 = vmatpush1.bf16.msra.mxu0 0
        %628 = vmatprep.subr.bf16.mxu0 0
        %629 = vmatpush1.bf16.msra.mxu0 0
        %630 = vmatprep.subr.bf16.mxu0 0
        %631 = vmatpush1.bf16.msra.mxu0 0
        %632 = vmatprep.subr.bf16.mxu0 0
        %633 = vmatpush1.bf16.msra.mxu0 0
        %634 = vmatprep.subr.bf16.mxu0 0
        %635 = vmatpush1.bf16.msra.mxu0 0
        %636 = vmatprep.subr.bf16.mxu0 0
        %637 = vmatpush1.bf16.msra.mxu0 0
        %638 = vmatprep.subr.bf16.mxu0 0
        %639 = vmatpush1.bf16.msra.mxu0 0
        %640 = vmatprep.subr.bf16.mxu0 0
        %641 = vmatpush1.bf16.msra.mxu0 0
        %642 = vmatprep.subr.bf16.mxu0 0
        %643 = vmatpush1.bf16.msra.mxu0 0
        %644 = vmatprep.subr.bf16.mxu0 0
        %645 = vmatpush1.bf16.msra.mxu0 0
        %646 = vmatprep.mubr.bf16.mxu0 0
        %647 = vmatmul.mubr.bf16.gmra.mrb[0].mxu0 %v608
        %v648 = vpop.f32.mrb[0].mxu0
        %v649 = vadd.f32 0.0, %v648
        %v650 = vpop.f32.mrb[0].mxu0
        %v651 = vpop.f32.mrb[0].mxu0
        %v652 = vpop.f32.mrb[0].mxu0
        %653 = vdwg.mxu0
        %v654 = vpack.c.bf16 %v649, %v649
        %vm655 = vcmask 27648
        %656 = vst.msk [vmem:[#allocation3] sm:$0xf] %vm655, %v654
        %v657 = vld [vmem:[#allocation2] sm:$0xf]
        %v659 = vunpack.c.l.b16 %v657
        %v660 = vpack.c.b16 %v659, %v659
        %661 = vrot.lane.b32.xlu0 %v660, 124
        %v662 = vpop.permute.xlu0 %661
        %663 = vrot.lane.b32.xlu0 %v660, 92
        %v664 = vpop.permute.xlu0 %663
        %v666 = vsel %vm545, %v662, 0
        %v669 = vsel %vm545, %v664, 0
        %671 = vmatprep.subr.bf16.mxu0 0
        %672 = vmatpush1.bf16.xpose.msra.mxu0 %v669
        %673 = vmatprep.subr.bf16.mxu0 0
        %674 = vmatpush1.bf16.xpose.msra.mxu0 0
        %675 = vmatprep.subr.bf16.mxu0 0
        %676 = vmatpush1.bf16.xpose.msra.mxu0 0
        %677 = vmatprep.subr.bf16.mxu0 0
        %678 = vmatpush1.bf16.xpose.msra.mxu0 0
        %679 = vmatprep.subr.bf16.mxu0 0
        %680 = vmatpush1.bf16.xpose.msra.mxu0 0
        %681 = vmatprep.subr.bf16.mxu0 0
        %682 = vmatpush1.bf16.xpose.msra.mxu0 0
        %683 = vmatprep.subr.bf16.mxu0 0
        %684 = vmatpush1.bf16.xpose.msra.mxu0 0
        %685 = vmatprep.subr.bf16.mxu0 0
        %686 = vmatpush1.bf16.xpose.msra.mxu0 0
        %687 = vmatprep.subr.bf16.mxu0 0
        %688 = vmatpush1.bf16.xpose.msra.mxu0 0
        %689 = vmatprep.subr.bf16.mxu0 0
        %690 = vmatpush1.bf16.xpose.msra.mxu0 0
        %691 = vmatprep.subr.bf16.mxu0 0
        %692 = vmatpush1.bf16.xpose.msra.mxu0 0
        %693 = vmatprep.subr.bf16.mxu0 0
        %694 = vmatpush1.bf16.xpose.msra.mxu0 0
        %695 = vmatprep.subr.bf16.mxu0 0
        %696 = vmatpush1.bf16.xpose.msra.mxu0 0
        %697 = vmatprep.subr.bf16.mxu0 0
        %698 = vmatpush1.bf16.xpose.msra.mxu0 0
        %699 = vmatprep.subr.bf16.mxu0 0
        %700 = vmatpush1.bf16.xpose.msra.mxu0 0
        %701 = vmatprep.subr.bf16.mxu0 0
        %702 = vmatpush1.bf16.xpose.msra.mxu0 0
        %703 = vmatprep.mubr.bf16.mxu0 0
        %704 = vmatmul.mubr.bf16.gmra.mrb[0].mxu0 %v666
        %v705 = vpop.f32.mrb[0].mxu0
        %v706 = vadd.f32 0.0, %v705
        %v707 = vpop.f32.mrb[0].mxu0
        %v708 = vpop.f32.mrb[0].mxu0
        %v709 = vpop.f32.mrb[0].mxu0
        %710 = vdwg.mxu0
        %v711 = vsel %vm592, %v706, -inf
        %712 = vmax.xlane.f32.xlu0 %v711
        %v713 = vpop.xlane.xlu0 %712
        %v714 = vsub.f32 %v706, %v713
        %v715 = vmul.f32 %v714, 1.442695
        %v716 = vpow.pop %v715
        %v717 = vsel %vm592, %v716, 0.0
        %718 = vadd.xlane.f32.xlu0 %v717
        %v719 = vpop.xlane.xlu0 %718
        %v720 = vrcp.pop %v719
        %v721 = vmul.f32 %v716, %v720
        %v722 = vpack.c.bf16 %v721, %v721
        %723 = vrot.lane.b32.xlu0 %v660, 60
        %v724 = vpop.permute.xlu0 %723
        %v726 = vsel %vm592, %v722, 0
        %v729 = vsel %vm610, %v724, 0
        %731 = vmatprep.subr.bf16.mxu0 0
        %732 = vmatpush1.bf16.msra.mxu0 %v729
        %733 = vmatprep.subr.bf16.mxu0 0
        %734 = vmatpush1.bf16.msra.mxu0 0
        %735 = vmatprep.subr.bf16.mxu0 0
        %736 = vmatpush1.bf16.msra.mxu0 0
        %737 = vmatprep.subr.bf16.mxu0 0
        %738 = vmatpush1.bf16.msra.mxu0 0
        %739 = vmatprep.subr.bf16.mxu0 0
        %740 = vmatpush1.bf16.msra.mxu0 0
        %741 = vmatprep.subr.bf16.mxu0 0
        %742 = vmatpush1.bf16.msra.mxu0 0
        %743 = vmatprep.subr.bf16.mxu0 0
        %744 = vmatpush1.bf16.msra.mxu0 0
        %745 = vmatprep.subr.bf16.mxu0 0
        %746 = vmatpush1.bf16.msra.mxu0 0
        %747 = vmatprep.subr.bf16.mxu0 0
        %748 = vmatpush1.bf16.msra.mxu0 0
        %749 = vmatprep.subr.bf16.mxu0 0
        %750 = vmatpush1.bf16.msra.mxu0 0
        %751 = vmatprep.subr.bf16.mxu0 0
        %752 = vmatpush1.bf16.msra.mxu0 0
        %753 = vmatprep.subr.bf16.mxu0 0
        %754 = vmatpush1.bf16.msra.mxu0 0
        %755 = vmatprep.subr.bf16.mxu0 0
        %756 = vmatpush1.bf16.msra.mxu0 0
        %757 = vmatprep.subr.bf16.mxu0 0
        %758 = vmatpush1.bf16.msra.mxu0 0
        %759 = vmatprep.subr.bf16.mxu0 0
        %760 = vmatpush1.bf16.msra.mxu0 0
        %761 = vmatprep.subr.bf16.mxu0 0
        %762 = vmatpush1.bf16.msra.mxu0 0
        %763 = vmatprep.mubr.bf16.mxu0 0
        %764 = vmatmul.mubr.bf16.gmra.mrb[0].mxu0 %v726
        %v765 = vpop.f32.mrb[0].mxu0
        %v766 = vadd.f32 0.0, %v765
        %v767 = vpop.f32.mrb[0].mxu0
        %v768 = vpop.f32.mrb[0].mxu0
        %v769 = vpop.f32.mrb[0].mxu0
        %770 = vdwg.mxu0
        %v771 = vpack.c.bf16 %v766, %v766
        %v773 = vunpack.c.l.b16 %v771
        %v774 = vpack.c.b16 %v773, %v773
        %775 = vrot.lane.b32.xlu0 %v774, 4
        %v776 = vpop.permute.xlu0 %775
        %vm778 = vcmask 60448
        %779 = vst.msk [vmem:[#allocation3] sm:$0xf] %vm778, %v776
        %v780 = vld [vmem:[#allocation2] sm:$0xf]
        %v782 = vunpack.c.l.b16 %v780
        %v783 = vpack.c.b16 %v782, %v782
        %784 = vrot.lane.b32.xlu0 %v783, 120
        %v785 = vpop.permute.xlu0 %784
        %786 = vrot.lane.b32.xlu0 %v783, 88
        %v787 = vpop.permute.xlu0 %786
        %v789 = vsel %vm545, %v785, 0
        %v792 = vsel %vm545, %v787, 0
        %794 = vmatprep.subr.bf16.mxu0 0
        %795 = vmatpush1.bf16.xpose.msra.mxu0 %v792
        %796 = vmatprep.subr.bf16.mxu0 0
        %797 = vmatpush1.bf16.xpose.msra.mxu0 0
        %798 = vmatprep.subr.bf16.mxu0 0
        %799 = vmatpush1.bf16.xpose.msra.mxu0 0
        %800 = vmatprep.subr.bf16.mxu0 0
        %801 = vmatpush1.bf16.xpose.msra.mxu0 0
        %802 = vmatprep.subr.bf16.mxu0 0
        %803 = vmatpush1.bf16.xpose.msra.mxu0 0
        %804 = vmatprep.subr.bf16.mxu0 0
        %805 = vmatpush1.bf16.xpose.msra.mxu0 0
        %806 = vmatprep.subr.bf16.mxu0 0
        %807 = vmatpush1.bf16.xpose.msra.mxu0 0
        %808 = vmatprep.subr.bf16.mxu0 0
        %809 = vmatpush1.bf16.xpose.msra.mxu0 0
        %810 = vmatprep.subr.bf16.mxu0 0
        %811 = vmatpush1.bf16.xpose.msra.mxu0 0
        %812 = vmatprep.subr.bf16.mxu0 0
        %813 = vmatpush1.bf16.xpose.msra.mxu0 0
        %814 = vmatprep.subr.bf16.mxu0 0
        %815 = vmatpush1.bf16.xpose.msra.mxu0 0
        %816 = vmatprep.subr.bf16.mxu0 0
        %817 = vmatpush1.bf16.xpose.msra.mxu0 0
        %818 = vmatprep.subr.bf16.mxu0 0
        %819 = vmatpush1.bf16.xpose.msra.mxu0 0
        %820 = vmatprep.subr.bf16.mxu0 0
        %821 = vmatpush1.bf16.xpose.msra.mxu0 0
        %822 = vmatprep.subr.bf16.mxu0 0
        %823 = vmatpush1.bf16.xpose.msra.mxu0 0
        %824 = vmatprep.subr.bf16.mxu0 0
        %825 = vmatpush1.bf16.xpose.msra.mxu0 0
        %826 = vmatprep.mubr.bf16.mxu0 0
        %827 = vmatmul.mubr.bf16.gmra.mrb[0].mxu0 %v789
        %v828 = vpop.f32.mrb[0].mxu0
        %v829 = vadd.f32 0.0, %v828
        %v830 = vpop.f32.mrb[0].mxu0
        %v831 = vpop.f32.mrb[0].mxu0
        %v832 = vpop.f32.mrb[0].mxu0
        %833 = vdwg.mxu0
        %v834 = vsel %vm592, %v829, -inf
        %835 = vmax.xlane.f32.xlu0 %v834
        %v836 = vpop.xlane.xlu0 %835
        %v837 = vsub.f32 %v829, %v836
        %v838 = vmul.f32 %v837, 1.442695
        %v839 = vpow.pop %v838
        %v840 = vsel %vm592, %v839, 0.0
        %841 = vadd.xlane.f32.xlu0 %v840
        %v842 = vpop.xlane.xlu0 %841
        %v843 = vrcp.pop %v842
        %v844 = vmul.f32 %v839, %v843
        %v845 = vpack.c.bf16 %v844, %v844
        %846 = vrot.lane.b32.xlu0 %v783, 56
        %v847 = vpop.permute.xlu0 %846
        %v849 = vsel %vm592, %v845, 0
        %v852 = vsel %vm610, %v847, 0
        %854 = vmatprep.subr.bf16.mxu0 0
        %855 = vmatpush1.bf16.msra.mxu0 %v852
        %856 = vmatprep.subr.bf16.mxu0 0
        %857 = vmatpush1.bf16.msra.mxu0 0
        %858 = vmatprep.subr.bf16.mxu0 0
        %859 = vmatpush1.bf16.msra.mxu0 0
        %860 = vmatprep.subr.bf16.mxu0 0
        %861 = vmatpush1.bf16.msra.mxu0 0
        %862 = vmatprep.subr.bf16.mxu0 0
        %863 = vmatpush1.bf16.msra.mxu0 0
        %864 = vmatprep.subr.bf16.mxu0 0
        %865 = vmatpush1.bf16.msra.mxu0 0
        %866 = vmatprep.subr.bf16.mxu0 0
        %867 = vmatpush1.bf16.msra.mxu0 0
        %868 = vmatprep.subr.bf16.mxu0 0
        %869 = vmatpush1.bf16.msra.mxu0 0
        %870 = vmatprep.subr.bf16.mxu0 0
        %871 = vmatpush1.bf16.msra.mxu0 0
        %872 = vmatprep.subr.bf16.mxu0 0
        %873 = vmatpush1.bf16.msra.mxu0 0
        %874 = vmatprep.subr.bf16.mxu0 0
        %875 = vmatpush1.bf16.msra.mxu0 0
        %876 = vmatprep.subr.bf16.mxu0 0
        %877 = vmatpush1.bf16.msra.mxu0 0
        %878 = vmatprep.subr.bf16.mxu0 0
        %879 = vmatpush1.bf16.msra.mxu0 0
        %880 = vmatprep.subr.bf16.mxu0 0
        %881 = vmatpush1.bf16.msra.mxu0 0
        %882 = vmatprep.subr.bf16.mxu0 0
        %883 = vmatpush1.bf16.msra.mxu0 0
        %884 = vmatprep.subr.bf16.mxu0 0
        %885 = vmatpush1.bf16.msra.mxu0 0
        %886 = vmatprep.mubr.bf16.mxu0 0
        %887 = vmatmul.mubr.bf16.gmra.mrb[0].mxu0 %v849
        %v888 = vpop.f32.mrb[0].mxu0
        %v889 = vadd.f32 0.0, %v888
        %v890 = vpop.f32.mrb[0].mxu0
        %v891 = vpop.f32.mrb[0].mxu0
        %v892 = vpop.f32.mrb[0].mxu0
        %893 = vdwg.mxu0
        %v894 = vpack.c.bf16 %v889, %v889
        %v896 = vunpack.c.l.b16 %v894
        %v897 = vpack.c.b16 %v896, %v896
        %898 = vrot.lane.b32.xlu0 %v897, 8
        %v899 = vpop.permute.xlu0 %898
        %vm901 = vcmask 93248
        %902 = vst.msk [vmem:[#allocation3] sm:$0xf] %vm901, %v899
        %v903 = vld [vmem:[#allocation2] sm:$0xf]
        %v905 = vunpack.c.l.b16 %v903
        %v906 = vpack.c.b16 %v905, %v905
        %907 = vrot.lane.b32.xlu0 %v906, 116
        %v908 = vpop.permute.xlu0 %907
        %909 = vrot.lane.b32.xlu0 %v906, 84
        %v910 = vpop.permute.xlu0 %909
        %v912 = vsel %vm545, %v908, 0
        %v915 = vsel %vm545, %v910, 0
        %917 = vmatprep.subr.bf16.mxu0 0
        %918 = vmatpush1.bf16.xpose.msra.mxu0 %v915
        %919 = vmatprep.subr.bf16.mxu0 0
        %920 = vmatpush1.bf16.xpose.msra.mxu0 0
        %921 = vmatprep.subr.bf16.mxu0 0
        %922 = vmatpush1.bf16.xpose.msra.mxu0 0
        %923 = vmatprep.subr.bf16.mxu0 0
        %924 = vmatpush1.bf16.xpose.msra.mxu0 0
        %925 = vmatprep.subr.bf16.mxu0 0
        %926 = vmatpush1.bf16.xpose.msra.mxu0 0
        %927 = vmatprep.subr.bf16.mxu0 0
        %928 = vmatpush1.bf16.xpose.msra.mxu0 0
        %929 = vmatprep.subr.bf16.mxu0 0
        %930 = vmatpush1.bf16.xpose.msra.mxu0 0
        %931 = vmatprep.subr.bf16.mxu0 0
        %932 = vmatpush1.bf16.xpose.msra.mxu0 0
        %933 = vmatprep.subr.bf16.mxu0 0
        %934 = vmatpush1.bf16.xpose.msra.mxu0 0
        %935 = vmatprep.subr.bf16.mxu0 0
        %936 = vmatpush1.bf16.xpose.msra.mxu0 0
        %937 = vmatprep.subr.bf16.mxu0 0
        %938 = vmatpush1.bf16.xpose.msra.mxu0 0
        %939 = vmatprep.subr.bf16.mxu0 0
        %940 = vmatpush1.bf16.xpose.msra.mxu0 0
        %941 = vmatprep.subr.bf16.mxu0 0
        %942 = vmatpush1.bf16.xpose.msra.mxu0 0
        %943 = vmatprep.subr.bf16.mxu0 0
        %944 = vmatpush1.bf16.xpose.msra.mxu0 0
        %945 = vmatprep.subr.bf16.mxu0 0
        %946 = vmatpush1.bf16.xpose.msra.mxu0 0
        %947 = vmatprep.subr.bf16.mxu0 0
        %948 = vmatpush1.bf16.xpose.msra.mxu0 0
        %949 = vmatprep.mubr.bf16.mxu0 0
        %950 = vmatmul.mubr.bf16.gmra.mrb[0].mxu0 %v912
        %v951 = vpop.f32.mrb[0].mxu0
        %v952 = vadd.f32 0.0, %v951
        %v953 = vpop.f32.mrb[0].mxu0
        %v954 = vpop.f32.mrb[0].mxu0
        %v955 = vpop.f32.mrb[0].mxu0
        %956 = vdwg.mxu0
        %v957 = vsel %vm592, %v952, -inf
        %958 = vmax.xlane.f32.xlu0 %v957
        %v959 = vpop.xlane.xlu0 %958
        %v960 = vsub.f32 %v952, %v959
        %v961 = vmul.f32 %v960, 1.442695
        %v962 = vpow.pop %v961
        %v963 = vsel %vm592, %v962, 0.0
        %964 = vadd.xlane.f32.xlu0 %v963
        %v965 = vpop.xlane.xlu0 %964
        %v966 = vrcp.pop %v965
        %v967 = vmul.f32 %v962, %v966
        %v968 = vpack.c.bf16 %v967, %v967
        %969 = vrot.lane.b32.xlu0 %v906, 52
        %v970 = vpop.permute.xlu0 %969
        %v972 = vsel %vm592, %v968, 0
        %v975 = vsel %vm610, %v970, 0
        %977 = vmatprep.subr.bf16.mxu0 0
        %978 = vmatpush1.bf16.msra.mxu0 %v975
        %979 = vmatprep.subr.bf16.mxu0 0
        %980 = vmatpush1.bf16.msra.mxu0 0
        %981 = vmatprep.subr.bf16.mxu0 0
        %982 = vmatpush1.bf16.msra.mxu0 0
        %983 = vmatprep.subr.bf16.mxu0 0
        %984 = vmatpush1.bf16.msra.mxu0 0
        %985 = vmatprep.subr.bf16.mxu0 0
        %986 = vmatpush1.bf16.msra.mxu0 0
        %987 = vmatprep.subr.bf16.mxu0 0
        %988 = vmatpush1.bf16.msra.mxu0 0
        %989 = vmatprep.subr.bf16.mxu0 0
        %990 = vmatpush1.bf16.msra.mxu0 0
        %991 = vmatprep.subr.bf16.mxu0 0
        %992 = vmatpush1.bf16.msra.mxu0 0
        %993 = vmatprep.subr.bf16.mxu0 0
        %994 = vmatpush1.bf16.msra.mxu0 0
        %995 = vmatprep.subr.bf16.mxu0 0
        %996 = vmatpush1.bf16.msra.mxu0 0
        %997 = vmatprep.subr.bf16.mxu0 0
        %998 = vmatpush1.bf16.msra.mxu0 0
        %999 = vmatprep.subr.bf16.mxu0 0
        %1000 = vmatpush1.bf16.msra.mxu0 0
        %1001 = vmatprep.subr.bf16.mxu0 0
        %1002 = vmatpush1.bf16.msra.mxu0 0
        %1003 = vmatprep.subr.bf16.mxu0 0
        %1004 = vmatpush1.bf16.msra.mxu0 0
        %1005 = vmatprep.subr.bf16.mxu0 0
        %1006 = vmatpush1.bf16.msra.mxu0 0
        %1007 = vmatprep.subr.bf16.mxu0 0
        %1008 = vmatpush1.bf16.msra.mxu0 0
        %1009 = vmatprep.mubr.bf16.mxu0 0
        %1010 = vmatmul.mubr.bf16.gmra.mrb[0].mxu0 %v972
        %v1011 = vpop.f32.mrb[0].mxu0
        %v1012 = vadd.f32 0.0, %v1011
        %v1013 = vpop.f32.mrb[0].mxu0
        %v1014 = vpop.f32.mrb[0].mxu0
        %v1015 = vpop.f32.mrb[0].mxu0
        %1016 = vdwg.mxu0
        %v1017 = vpack.c.bf16 %v1012, %v1012
        %v1019 = vunpack.c.l.b16 %v1017
        %v1020 = vpack.c.b16 %v1019, %v1019
        %1021 = vrot.lane.b32.xlu0 %v1020, 12
        %v1022 = vpop.permute.xlu0 %1021
        %vm1024 = vcmask 126048
        %1025 = vst.msk [vmem:[#allocation3] sm:$0xf] %vm1024, %v1022
        %v1026 = vld [vmem:[#allocation2] sm:$0xf]
        %v1028 = vunpack.c.l.b16 %v1026
        %v1029 = vpack.c.b16 %v1028, %v1028
        %1030 = vrot.lane.b32.xlu0 %v1029, 112
        %v1031 = vpop.permute.xlu0 %1030
        %1032 = vrot.lane.b32.xlu0 %v1029, 80
        %v1033 = vpop.permute.xlu0 %1032
        %v1035 = vsel %vm545, %v1031, 0
        %v1038 = vsel %vm545, %v1033, 0
        %1040 = vmatprep.subr.bf16.mxu0 0
        %1041 = vmatpush1.bf16.xpose.msra.mxu0 %v1038
        %1042 = vmatprep.subr.bf16.mxu0 0
        %1043 = vmatpush1.bf16.xpose.msra.mxu0 0
        %1044 = vmatprep.subr.bf16.mxu0 0
        %1045 = vmatpush1.bf16.xpose.msra.mxu0 0
        %1046 = vmatprep.subr.bf16.mxu0 0
        %1047 = vmatpush1.bf16.xpose.msra.mxu0 0
        %1048 = vmatprep.subr.bf16.mxu0 0
        %1049 = vmatpush1.bf16.xpose.msra.mxu0 0
        %1050 = vmatprep.subr.bf16.mxu0 0
        %1051 = vmatpush1.bf16.xpose.msra.mxu0 0
        %1052 = vmatprep.subr.bf16.mxu0 0
        %1053 = vmatpush1.bf16.xpose.msra.mxu0 0
        %1054 = vmatprep.subr.bf16.mxu0 0
        %1055 = vmatpush1.bf16.xpose.msra.mxu0 0
        %1056 = vmatprep.subr.bf16.mxu0 0
        %1057 = vmatpush1.bf16.xpose.msra.mxu0 0
        %1058 = vmatprep.subr.bf16.mxu0 0
        %1059 = vmatpush1.bf16.xpose.msra.mxu0 0
        %1060 = vmatprep.subr.bf16.mxu0 0
        %1061 = vmatpush1.bf16.xpose.msra.mxu0 0
        %1062 = vmatprep.subr.bf16.mxu0 0
        %1063 = vmatpush1.bf16.xpose.msra.mxu0 0
        %1064 = vmatprep.subr.bf16.mxu0 0
        %1065 = vmatpush1.bf16.xpose.msra.mxu0 0
        %1066 = vmatprep.subr.bf16.mxu0 0
        %1067 = vmatpush1.bf16.xpose.msra.mxu0 0
        %1068 = vmatprep.subr.bf16.mxu0 0
        %1069 = vmatpush1.bf16.xpose.msra.mxu0 0
        %1070 = vmatprep.subr.bf16.mxu0 0
        %1071 = vmatpush1.bf16.xpose.msra.mxu0 0
        %1072 = vmatprep.mubr.bf16.mxu0 0
        %1073 = vmatmul.mubr.bf16.gmra.mrb[0].mxu0 %v1035
        %v1074 = vpop.f32.mrb[0].mxu0
        %v1075 = vadd.f32 0.0, %v1074
        %v1076 = vpop.f32.mrb[0].mxu0
        %v1077 = vpop.f32.mrb[0].mxu0
        %v1078 = vpop.f32.mrb[0].mxu0
        %1079 = vdwg.mxu0
        %v1080 = vsel %vm592, %v1075, -inf
        %1081 = vmax.xlane.f32.xlu0 %v1080
        %v1082 = vpop.xlane.xlu0 %1081
        %v1083 = vsub.f32 %v1075, %v1082
        %v1084 = vmul.f32 %v1083, 1.442695
        %v1085 = vpow.pop %v1084
        %v1086 = vsel %vm592, %v1085, 0.0
        %1087 = vadd.xlane.f32.xlu0 %v1086
        %v1088 = vpop.xlane.xlu0 %1087
        %v1089 = vrcp.pop %v1088
        %v1090 = vmul.f32 %v1085, %v1089
        %v1091 = vpack.c.bf16 %v1090, %v1090
        %1092 = vrot.lane.b32.xlu0 %v1029, 48
        %v1093 = vpop.permute.xlu0 %1092
        %v1095 = vsel %vm592, %v1091, 0
        %v1098 = vsel %vm610, %v1093, 0
        %1100 = vmatprep.subr.bf16.mxu0 0
        %1101 = vmatpush1.bf16.msra.mxu0 %v1098
        %1102 = vmatprep.subr.bf16.mxu0 0
        %1103 = vmatpush1.bf16.msra.mxu0 0
        %1104 = vmatprep.subr.bf16.mxu0 0
        %1105 = vmatpush1.bf16.msra.mxu0 0
        %1106 = vmatprep.subr.bf16.mxu0 0
        %1107 = vmatpush1.bf16.msra.mxu0 0
        %1108 = vmatprep.subr.bf16.mxu0 0
        %1109 = vmatpush1.bf16.msra.mxu0 0
        %1110 = vmatprep.subr.bf16.mxu0 0
        %1111 = vmatpush1.bf16.msra.mxu0 0
        %1112 = vmatprep.subr.bf16.mxu0 0
        %1113 = vmatpush1.bf16.msra.mxu0 0
        %1114 = vmatprep.subr.bf16.mxu0 0
        %1115 = vmatpush1.bf16.msra.mxu0 0
        %1116 = vmatprep.subr.bf16.mxu0 0
        %1117 = vmatpush1.bf16.msra.mxu0 0
        %1118 = vmatprep.subr.bf16.mxu0 0
        %1119 = vmatpush1.bf16.msra.mxu0 0
        %1120 = vmatprep.subr.bf16.mxu0 0
        %1121 = vmatpush1.bf16.msra.mxu0 0
        %1122 = vmatprep.subr.bf16.mxu0 0
        %1123 = vmatpush1.bf16.msra.mxu0 0
        %1124 = vmatprep.subr.bf16.mxu0 0
        %1125 = vmatpush1.bf16.msra.mxu0 0
        %1126 = vmatprep.subr.bf16.mxu0 0
        %1127 = vmatpush1.bf16.msra.mxu0 0
        %1128 = vmatprep.subr.bf16.mxu0 0
        %1129 = vmatpush1.bf16.msra.mxu0 0
        %1130 = vmatprep.subr.bf16.mxu0 0
        %1131 = vmatpush1.bf16.msra.mxu0 0
        %1132 = vmatprep.mubr.bf16.mxu0 0
        %1133 = vmatmul.mubr.bf16.gmra.mrb[0].mxu0 %v1095
        %v1134 = vpop.f32.mrb[0].mxu0
        %v1135 = vadd.f32 0.0, %v1134
        %v1136 = vpop.f32.mrb[0].mxu0
        %v1137 = vpop.f32.mrb[0].mxu0
        %v1138 = vpop.f32.mrb[0].mxu0
        %1139 = vdwg.mxu0
        %v1140 = vpack.c.bf16 %v1135, %v1135
        %v1142 = vunpack.c.l.b16 %v1140
        %v1143 = vpack.c.b16 %v1142, %v1142
        %1144 = vrot.lane.b32.xlu0 %v1143, 16
        %v1145 = vpop.permute.xlu0 %1144
        %vm1147 = vcmask 158848
        %1148 = vst.msk [vmem:[#allocation3] sm:$0xf] %vm1147, %v1145
        %v1149 = vld [vmem:[#allocation2] sm:$0xf]
        %v1151 = vunpack.c.l.b16 %v1149
        %v1152 = vpack.c.b16 %v1151, %v1151
        %1153 = vrot.lane.b32.xlu0 %v1152, 108
        %v1154 = vpop.permute.xlu0 %1153
        %1155 = vrot.lane.b32.xlu0 %v1152, 76
        %v1156 = vpop.permute.xlu0 %1155
        %v1158 = vsel %vm545, %v1154, 0
        %v1161 = vsel %vm545, %v1156, 0
        %1163 = vmatprep.subr.bf16.mxu0 0
        %1164 = vmatpush1.bf16.xpose.msra.mxu0 %v1161
        %1165 = vmatprep.subr.bf16.mxu0 0
        %1166 = vmatpush1.bf16.xpose.msra.mxu0 0
        %1167 = vmatprep.subr.bf16.mxu0 0
        %1168 = vmatpush1.bf16.xpose.msra.mxu0 0
        %1169 = vmatprep.subr.bf16.mxu0 0
        %1170 = vmatpush1.bf16.xpose.msra.mxu0 0
        %1171 = vmatprep.subr.bf16.mxu0 0
        %1172 = vmatpush1.bf16.xpose.msra.mxu0 0
        %1173 = vmatprep.subr.bf16.mxu0 0
        %1174 = vmatpush1.bf16.xpose.msra.mxu0 0
        %1175 = vmatprep.subr.bf16.mxu0 0
        %1176 = vmatpush1.bf16.xpose.msra.mxu0 0
        %1177 = vmatprep.subr.bf16.mxu0 0
        %1178 = vmatpush1.bf16.xpose.msra.mxu0 0
        %1179 = vmatprep.subr.bf16.mxu0 0
        %1180 = vmatpush1.bf16.xpose.msra.mxu0 0
        %1181 = vmatprep.subr.bf16.mxu0 0
        %1182 = vmatpush1.bf16.xpose.msra.mxu0 0
        %1183 = vmatprep.subr.bf16.mxu0 0
        %1184 = vmatpush1.bf16.xpose.msra.mxu0 0
        %1185 = vmatprep.subr.bf16.mxu0 0
        %1186 = vmatpush1.bf16.xpose.msra.mxu0 0
        %1187 = vmatprep.subr.bf16.mxu0 0
        %1188 = vmatpush1.bf16.xpose.msra.mxu0 0
        %1189 = vmatprep.subr.bf16.mxu0 0
        %1190 = vmatpush1.bf16.xpose.msra.mxu0 0
        %1191 = vmatprep.subr.bf16.mxu0 0
        %1192 = vmatpush1.bf16.xpose.msra.mxu0 0
        %1193 = vmatprep.subr.bf16.mxu0 0
        %1194 = vmatpush1.bf16.xpose.msra.mxu0 0
        %1195 = vmatprep.mubr.bf16.mxu0 0
        %1196 = vmatmul.mubr.bf16.gmra.mrb[0].mxu0 %v1158
        %v1197 = vpop.f32.mrb[0].mxu0
        %v1198 = vadd.f32 0.0, %v1197
        %v1199 = vpop.f32.mrb[0].mxu0
        %v1200 = vpop.f32.mrb[0].mxu0
        %v1201 = vpop.f32.mrb[0].mxu0
        %1202 = vdwg.mxu0
        %v1203 = vsel %vm592, %v1198, -inf
        %1204 = vmax.xlane.f32.xlu0 %v1203
        %v1205 = vpop.xlane.xlu0 %1204
        %v1206 = vsub.f32 %v1198, %v1205
        %v1207 = vmul.f32 %v1206, 1.442695
        %v1208 = vpow.pop %v1207
        %v1209 = vsel %vm592, %v1208, 0.0
        %1210 = vadd.xlane.f32.xlu0 %v1209
        %v1211 = vpop.xlane.xlu0 %1210
        %v1212 = vrcp.pop %v1211
        %v1213 = vmul.f32 %v1208, %v1212
        %v1214 = vpack.c.bf16 %v1213, %v1213
        %1215 = vrot.lane.b32.xlu0 %v1152, 44
        %v1216 = vpop.permute.xlu0 %1215
        %v1218 = vsel %vm592, %v1214, 0
        %v1221 = vsel %vm610, %v1216, 0
        %1223 = vmatprep.subr.bf16.mxu0 0
        %1224 = vmatpush1.bf16.msra.mxu0 %v1221
        %1225 = vmatprep.subr.bf16.mxu0 0
        %1226 = vmatpush1.bf16.msra.mxu0 0
        %1227 = vmatprep.subr.bf16.mxu0 0
        %1228 = vmatpush1.bf16.msra.mxu0 0
        %1229 = vmatprep.subr.bf16.mxu0 0
        %1230 = vmatpush1.bf16.msra.mxu0 0
        %1231 = vmatprep.subr.bf16.mxu0 0
        %1232 = vmatpush1.bf16.msra.mxu0 0
        %1233 = vmatprep.subr.bf16.mxu0 0
        %1234 = vmatpush1.bf16.msra.mxu0 0
        %1235 = vmatprep.subr.bf16.mxu0 0
        %1236 = vmatpush1.bf16.msra.mxu0 0
        %1237 = vmatprep.subr.bf16.mxu0 0
        %1238 = vmatpush1.bf16.msra.mxu0 0
        %1239 = vmatprep.subr.bf16.mxu0 0
        %1240 = vmatpush1.bf16.msra.mxu0 0
        %1241 = vmatprep.subr.bf16.mxu0 0
        %1242 = vmatpush1.bf16.msra.mxu0 0
        %1243 = vmatprep.subr.bf16.mxu0 0
        %1244 = vmatpush1.bf16.msra.mxu0 0
        %1245 = vmatprep.subr.bf16.mxu0 0
        %1246 = vmatpush1.bf16.msra.mxu0 0
        %1247 = vmatprep.subr.bf16.mxu0 0
        %1248 = vmatpush1.bf16.msra.mxu0 0
        %1249 = vmatprep.subr.bf16.mxu0 0
        %1250 = vmatpush1.bf16.msra.mxu0 0
        %1251 = vmatprep.subr.bf16.mxu0 0
        %1252 = vmatpush1.bf16.msra.mxu0 0
        %1253 = vmatprep.subr.bf16.mxu0 0
        %1254 = vmatpush1.bf16.msra.mxu0 0
        %1255 = vmatprep.mubr.bf16.mxu0 0
        %1256 = vmatmul.mubr.bf16.gmra.mrb[0].mxu0 %v1218
        %v1257 = vpop.f32.mrb[0].mxu0
        %v1258 = vadd.f32 0.0, %v1257
        %v1259 = vpop.f32.mrb[0].mxu0
        %v1260 = vpop.f32.mrb[0].mxu0
        %v1261 = vpop.f32.mrb[0].mxu0
        %1262 = vdwg.mxu0
        %v1263 = vpack.c.bf16 %v1258, %v1258
        %v1265 = vunpack.c.l.b16 %v1263
        %v1266 = vpack.c.b16 %v1265, %v1265
        %1267 = vrot.lane.b32.xlu0 %v1266, 20
        %v1268 = vpop.permute.xlu0 %1267
        %vm1270 = vcmask 191648
        %1271 = vst.msk [vmem:[#allocation3] sm:$0xf] %vm1270, %v1268
        %v1272 = vld [vmem:[#allocation2] sm:$0xf]
        %v1274 = vunpack.c.l.b16 %v1272
        %v1275 = vpack.c.b16 %v1274, %v1274
        %1276 = vrot.lane.b32.xlu0 %v1275, 104
        %v1277 = vpop.permute.xlu0 %1276
        %1278 = vrot.lane.b32.xlu0 %v1275, 72
        %v1279 = vpop.permute.xlu0 %1278
        %v1281 = vsel %vm545, %v1277, 0
        %v1284 = vsel %vm545, %v1279, 0
        %1286 = vmatprep.subr.bf16.mxu0 0
        %1287 = vmatpush1.bf16.xpose.msra.mxu0 %v1284
        %1288 = vmatprep.subr.bf16.mxu0 0
        %1289 = vmatpush1.bf16.xpose.msra.mxu0 0
        %1290 = vmatprep.subr.bf16.mxu0 0
        %1291 = vmatpush1.bf16.xpose.msra.mxu0 0
        %1292 = vmatprep.subr.bf16.mxu0 0
        %1293 = vmatpush1.bf16.xpose.msra.mxu0 0
        %1294 = vmatprep.subr.bf16.mxu0 0
        %1295 = vmatpush1.bf16.xpose.msra.mxu0 0
        %1296 = vmatprep.subr.bf16.mxu0 0
        %1297 = vmatpush1.bf16.xpose.msra.mxu0 0
        %1298 = vmatprep.subr.bf16.mxu0 0
        %1299 = vmatpush1.bf16.xpose.msra.mxu0 0
        %1300 = vmatprep.subr.bf16.mxu0 0
        %1301 = vmatpush1.bf16.xpose.msra.mxu0 0
        %1302 = vmatprep.subr.bf16.mxu0 0
        %1303 = vmatpush1.bf16.xpose.msra.mxu0 0
        %1304 = vmatprep.subr.bf16.mxu0 0
        %1305 = vmatpush1.bf16.xpose.msra.mxu0 0
        %1306 = vmatprep.subr.bf16.mxu0 0
        %1307 = vmatpush1.bf16.xpose.msra.mxu0 0
        %1308 = vmatprep.subr.bf16.mxu0 0
        %1309 = vmatpush1.bf16.xpose.msra.mxu0 0
        %1310 = vmatprep.subr.bf16.mxu0 0
        %1311 = vmatpush1.bf16.xpose.msra.mxu0 0
        %1312 = vmatprep.subr.bf16.mxu0 0
        %1313 = vmatpush1.bf16.xpose.msra.mxu0 0
        %1314 = vmatprep.subr.bf16.mxu0 0
        %1315 = vmatpush1.bf16.xpose.msra.mxu0 0
        %1316 = vmatprep.subr.bf16.mxu0 0
        %1317 = vmatpush1.bf16.xpose.msra.mxu0 0
        %1318 = vmatprep.mubr.bf16.mxu0 0
        %1319 = vmatmul.mubr.bf16.gmra.mrb[0].mxu0 %v1281
        %v1320 = vpop.f32.mrb[0].mxu0
        %v1321 = vadd.f32 0.0, %v1320
        %v1322 = vpop.f32.mrb[0].mxu0
        %v1323 = vpop.f32.mrb[0].mxu0
        %v1324 = vpop.f32.mrb[0].mxu0
        %1325 = vdwg.mxu0
        %v1326 = vsel %vm592, %v1321, -inf
        %1327 = vmax.xlane.f32.xlu0 %v1326
        %v1328 = vpop.xlane.xlu0 %1327
        %v1329 = vsub.f32 %v1321, %v1328
        %v1330 = vmul.f32 %v1329, 1.442695
        %v1331 = vpow.pop %v1330
        %v1332 = vsel %vm592, %v1331, 0.0
        %1333 = vadd.xlane.f32.xlu0 %v1332
        %v1334 = vpop.xlane.xlu0 %1333
        %v1335 = vrcp.pop %v1334
        %v1336 = vmul.f32 %v1331, %v1335
        %v1337 = vpack.c.bf16 %v1336, %v1336
        %1338 = vrot.lane.b32.xlu0 %v1275, 40
        %v1339 = vpop.permute.xlu0 %1338
        %v1341 = vsel %vm592, %v1337, 0
        %v1344 = vsel %vm610, %v1339, 0
        %1346 = vmatprep.subr.bf16.mxu0 0
        %1347 = vmatpush1.bf16.msra.mxu0 %v1344
        %1348 = vmatprep.subr.bf16.mxu0 0
        %1349 = vmatpush1.bf16.msra.mxu0 0
        %1350 = vmatprep.subr.bf16.mxu0 0
        %1351 = vmatpush1.bf16.msra.mxu0 0
        %1352 = vmatprep.subr.bf16.mxu0 0
        %1353 = vmatpush1.bf16.msra.mxu0 0
        %1354 = vmatprep.subr.bf16.mxu0 0
        %1355 = vmatpush1.bf16.msra.mxu0 0
        %1356 = vmatprep.subr.bf16.mxu0 0
        %1357 = vmatpush1.bf16.msra.mxu0 0
        %1358 = vmatprep.subr.bf16.mxu0 0
        %1359 = vmatpush1.bf16.msra.mxu0 0
        %1360 = vmatprep.subr.bf16.mxu0 0
        %1361 = vmatpush1.bf16.msra.mxu0 0
        %1362 = vmatprep.subr.bf16.mxu0 0
        %1363 = vmatpush1.bf16.msra.mxu0 0
        %1364 = vmatprep.subr.bf16.mxu0 0
        %1365 = vmatpush1.bf16.msra.mxu0 0
        %1366 = vmatprep.subr.bf16.mxu0 0
        %1367 = vmatpush1.bf16.msra.mxu0 0
        %1368 = vmatprep.subr.bf16.mxu0 0
        %1369 = vmatpush1.bf16.msra.mxu0 0
        %1370 = vmatprep.subr.bf16.mxu0 0
        %1371 = vmatpush1.bf16.msra.mxu0 0
        %1372 = vmatprep.subr.bf16.mxu0 0
        %1373 = vmatpush1.bf16.msra.mxu0 0
        %1374 = vmatprep.subr.bf16.mxu0 0
        %1375 = vmatpush1.bf16.msra.mxu0 0
        %1376 = vmatprep.subr.bf16.mxu0 0
        %1377 = vmatpush1.bf16.msra.mxu0 0
        %1378 = vmatprep.mubr.bf16.mxu0 0
        %1379 = vmatmul.mubr.bf16.gmra.mrb[0].mxu0 %v1341
        %v1380 = vpop.f32.mrb[0].mxu0
        %v1381 = vadd.f32 0.0, %v1380
        %v1382 = vpop.f32.mrb[0].mxu0
        %v1383 = vpop.f32.mrb[0].mxu0
        %v1384 = vpop.f32.mrb[0].mxu0
        %1385 = vdwg.mxu0
        %v1386 = vpack.c.bf16 %v1381, %v1381
        %v1388 = vunpack.c.l.b16 %v1386
        %v1389 = vpack.c.b16 %v1388, %v1388
        %1390 = vrot.lane.b32.xlu0 %v1389, 24
        %v1391 = vpop.permute.xlu0 %1390
        %vm1393 = vcmask 224448
        %1394 = vst.msk [vmem:[#allocation3] sm:$0xf] %vm1393, %v1391
        %v1395 = vld [vmem:[#allocation2] sm:$0xf]
        %v1397 = vunpack.c.l.b16 %v1395
        %v1398 = vpack.c.b16 %v1397, %v1397
        %1399 = vrot.lane.b32.xlu0 %v1398, 100
        %v1400 = vpop.permute.xlu0 %1399
        %1401 = vrot.lane.b32.xlu0 %v1398, 68
        %v1402 = vpop.permute.xlu0 %1401
        %v1404 = vsel %vm545, %v1400, 0
        %v1407 = vsel %vm545, %v1402, 0
        %1409 = vmatprep.subr.bf16.mxu0 0
        %1410 = vmatpush1.bf16.xpose.msra.mxu0 %v1407
        %1411 = vmatprep.subr.bf16.mxu0 0
        %1412 = vmatpush1.bf16.xpose.msra.mxu0 0
        %1413 = vmatprep.subr.bf16.mxu0 0
        %1414 = vmatpush1.bf16.xpose.msra.mxu0 0
        %1415 = vmatprep.subr.bf16.mxu0 0
        %1416 = vmatpush1.bf16.xpose.msra.mxu0 0
        %1417 = vmatprep.subr.bf16.mxu0 0
        %1418 = vmatpush1.bf16.xpose.msra.mxu0 0
        %1419 = vmatprep.subr.bf16.mxu0 0
        %1420 = vmatpush1.bf16.xpose.msra.mxu0 0
        %1421 = vmatprep.subr.bf16.mxu0 0
        %1422 = vmatpush1.bf16.xpose.msra.mxu0 0
        %1423 = vmatprep.subr.bf16.mxu0 0
        %1424 = vmatpush1.bf16.xpose.msra.mxu0 0
        %1425 = vmatprep.subr.bf16.mxu0 0
        %1426 = vmatpush1.bf16.xpose.msra.mxu0 0
        %1427 = vmatprep.subr.bf16.mxu0 0
        %1428 = vmatpush1.bf16.xpose.msra.mxu0 0
        %1429 = vmatprep.subr.bf16.mxu0 0
        %1430 = vmatpush1.bf16.xpose.msra.mxu0 0
        %1431 = vmatprep.subr.bf16.mxu0 0
        %1432 = vmatpush1.bf16.xpose.msra.mxu0 0
        %1433 = vmatprep.subr.bf16.mxu0 0
        %1434 = vmatpush1.bf16.xpose.msra.mxu0 0
        %1435 = vmatprep.subr.bf16.mxu0 0
        %1436 = vmatpush1.bf16.xpose.msra.mxu0 0
        %1437 = vmatprep.subr.bf16.mxu0 0
        %1438 = vmatpush1.bf16.xpose.msra.mxu0 0
        %1439 = vmatprep.subr.bf16.mxu0 0
        %1440 = vmatpush1.bf16.xpose.msra.mxu0 0
        %1441 = vmatprep.mubr.bf16.mxu0 0
        %1442 = vmatmul.mubr.bf16.gmra.mrb[0].mxu0 %v1404
        %v1443 = vpop.f32.mrb[0].mxu0
        %v1444 = vadd.f32 0.0, %v1443
        %v1445 = vpop.f32.mrb[0].mxu0
        %v1446 = vpop.f32.mrb[0].mxu0
        %v1447 = vpop.f32.mrb[0].mxu0
        %1448 = vdwg.mxu0
        %v1449 = vsel %vm592, %v1444, -inf
        %1450 = vmax.xlane.f32.xlu0 %v1449
        %v1451 = vpop.xlane.xlu0 %1450
        %v1452 = vsub.f32 %v1444, %v1451
        %v1453 = vmul.f32 %v1452, 1.442695
        %v1454 = vpow.pop %v1453
        %v1455 = vsel %vm592, %v1454, 0.0
        %1456 = vadd.xlane.f32.xlu0 %v1455
        %v1457 = vpop.xlane.xlu0 %1456
        %v1458 = vrcp.pop %v1457
        %v1459 = vmul.f32 %v1454, %v1458
        %v1460 = vpack.c.bf16 %v1459, %v1459
        %1461 = vrot.lane.b32.xlu0 %v1398, 36
        %v1462 = vpop.permute.xlu0 %1461
        %v1464 = vsel %vm592, %v1460, 0
        %v1467 = vsel %vm610, %v1462, 0
        %1469 = vmatprep.subr.bf16.mxu0 0
        %1470 = vmatpush1.bf16.msra.mxu0 %v1467
        %1471 = vmatprep.subr.bf16.mxu0 0
        %1472 = vmatpush1.bf16.msra.mxu0 0
        %1473 = vmatprep.subr.bf16.mxu0 0
        %1474 = vmatpush1.bf16.msra.mxu0 0
        %1475 = vmatprep.subr.bf16.mxu0 0
        %1476 = vmatpush1.bf16.msra.mxu0 0
        %1477 = vmatprep.subr.bf16.mxu0 0
        %1478 = vmatpush1.bf16.msra.mxu0 0
        %1479 = vmatprep.subr.bf16.mxu0 0
        %1480 = vmatpush1.bf16.msra.mxu0 0
        %1481 = vmatprep.subr.bf16.mxu0 0
        %1482 = vmatpush1.bf16.msra.mxu0 0
        %1483 = vmatprep.subr.bf16.mxu0 0
        %1484 = vmatpush1.bf16.msra.mxu0 0
        %1485 = vmatprep.subr.bf16.mxu0 0
        %1486 = vmatpush1.bf16.msra.mxu0 0
        %1487 = vmatprep.subr.bf16.mxu0 0
        %1488 = vmatpush1.bf16.msra.mxu0 0
        %1489 = vmatprep.subr.bf16.mxu0 0
        %1490 = vmatpush1.bf16.msra.mxu0 0
        %1491 = vmatprep.subr.bf16.mxu0 0
        %1492 = vmatpush1.bf16.msra.mxu0 0
        %1493 = vmatprep.subr.bf16.mxu0 0
        %1494 = vmatpush1.bf16.msra.mxu0 0
        %1495 = vmatprep.subr.bf16.mxu0 0
        %1496 = vmatpush1.bf16.msra.mxu0 0
        %1497 = vmatprep.subr.bf16.mxu0 0
        %1498 = vmatpush1.bf16.msra.mxu0 0
        %1499 = vmatprep.subr.bf16.mxu0 0
        %1500 = vmatpush1.bf16.msra.mxu0 0
        %1501 = vmatprep.mubr.bf16.mxu0 0
        %1502 = vmatmul.mubr.bf16.gmra.mrb[0].mxu0 %v1464
        %v1503 = vpop.f32.mrb[0].mxu0
        %v1504 = vadd.f32 0.0, %v1503
        %v1505 = vpop.f32.mrb[0].mxu0
        %v1506 = vpop.f32.mrb[0].mxu0
        %v1507 = vpop.f32.mrb[0].mxu0
        %1508 = vdwg.mxu0
        %v1509 = vpack.c.bf16 %v1504, %v1504
        %v1511 = vunpack.c.l.b16 %v1509
        %v1512 = vpack.c.b16 %v1511, %v1511
        %1513 = vrot.lane.b32.xlu0 %v1512, 28
        %v1514 = vpop.permute.xlu0 %1513
        %vm1516 = vcmask 257248
        %1517 = vst.msk [vmem:[#allocation3] sm:$0xf] %vm1516, %v1514
        %v1518 = vld [vmem:[#allocation3] sm:$0xf]
        %v1519 = vld [vmem:[%s5] sm:$0xf]
        %v1520 = vld [vmem:[%s5 + $0x4] sm:$0xf]
        %v1521 = vld [vmem:[%s5 + $0x8] sm:$0xf]
        %v1522 = vld [vmem:[%s5 + $0xc] sm:$0xf]
        %v1523 = vld [vmem:[%s6] sm:$0x1]
        %v1525 = vlaneseq
        %v1526 = vshrl.u32 %v1525, 7
        %v1527 = vsub.s32 0, %v1526
        %v1528 = vrot.slane %v1523, %v1527
        %v1534 = vunpack.c.l.b16 %v1519
        %v1535 = vunpack.c.l.b16 %v1520
        %v1536 = vunpack.c.l.b16 %v1521
        %v1537 = vunpack.c.l.b16 %v1522
        %v1538 = vpack.c.b16 %v1535, %v1534
        %v1539 = vpack.c.b16 %v1537, %v1536
        %v1543 = vsel %vm440, %v1518, 0
        %1545 = vmatprep.subr.bf16.mxu0 0
        %1546 = vmatpush1.bf16.msra.mxu0 %v1538
        %1547 = vmatprep.subr.bf16.mxu0 0
        %1548 = vmatpush1.bf16.msra.mxu0 %v1539
        %1549 = vmatprep.subr.bf16.mxu0 0
        %1550 = vmatpush1.bf16.msra.mxu0 0
        %1551 = vmatprep.subr.bf16.mxu0 0
        %1552 = vmatpush1.bf16.msra.mxu0 0
        %1553 = vmatprep.subr.bf16.mxu0 0
        %1554 = vmatpush1.bf16.msra.mxu0 0
        %1555 = vmatprep.subr.bf16.mxu0 0
        %1556 = vmatpush1.bf16.msra.mxu0 0
        %1557 = vmatprep.subr.bf16.mxu0 0
        %1558 = vmatpush1.bf16.msra.mxu0 0
        %1559 = vmatprep.subr.bf16.mxu0 0
        %1560 = vmatpush1.bf16.msra.mxu0 0
        %1561 = vmatprep.subr.bf16.mxu0 0
        %1562 = vmatpush1.bf16.msra.mxu0 0
        %1563 = vmatprep.subr.bf16.mxu0 0
        %1564 = vmatpush1.bf16.msra.mxu0 0
        %1565 = vmatprep.subr.bf16.mxu0 0
        %1566 = vmatpush1.bf16.msra.mxu0 0
        %1567 = vmatprep.subr.bf16.mxu0 0
        %1568 = vmatpush1.bf16.msra.mxu0 0
        %1569 = vmatprep.subr.bf16.mxu0 0
        %1570 = vmatpush1.bf16.msra.mxu0 0
        %1571 = vmatprep.subr.bf16.mxu0 0
        %1572 = vmatpush1.bf16.msra.mxu0 0
        %1573 = vmatprep.subr.bf16.mxu0 0
        %1574 = vmatpush1.bf16.msra.mxu0 0
        %1575 = vmatprep.subr.bf16.mxu0 0
        %1576 = vmatpush1.bf16.msra.mxu0 0
        %1577 = vmatprep.mubr.bf16.mxu0 0
        %1578 = vmatmul.mubr.bf16.gmra.mrb[0].mxu0 %v1543
        %v1579 = vpop.f32.mrb[0].mxu0
        %v1580 = vadd.f32 %v1528, %v1579
        %v1581 = vpop.f32.mrb[0].mxu0
        %v1582 = vpop.f32.mrb[0].mxu0
        %v1583 = vpop.f32.mrb[0].mxu0
        %1584 = vdwg.mxu0
        %v1585 = vadd.f32 %v437, %v1580
        %v1586 = vld [vmem:[%s7] sm:$0x1]
        %v1587 = vld [vmem:[%s8] sm:$0x1]
        %v1588 = vsel %vm440, %v1585, 0.0
        %1589 = vadd.xlane.f32.xlu0 %v1588
        %v1590 = vpop.xlane.xlu0 %1589
        %v1591 = vmul.f32 %v1590, %v444
        %v1592 = vsub.f32 %v1585, %v1591
        %v1593 = vmul.f32 %v1592, %v1592
        %v1594 = vsel %vm440, %v1593, 0.0
        %1595 = vadd.xlane.f32.xlu0 %v1594
        %v1596 = vpop.xlane.xlu0 %1595
        %v1597 = vmul.f32 %v1596, %v444
        %v1598 = vadd.f32 %v1597, 1e-06
        %v1599 = vrsqrt.pop %v1598
        %v1600 = vmul.f32 %v1592, %v1599
        %v1602 = vlaneseq
        %v1603 = vshrl.u32 %v1602, 7
        %v1604 = vsub.s32 0, %v1603
        %v1605 = vrot.slane %v1586, %v1604
        %v1607 = vmul.f32 %v1600, %v1605
        %v1609 = vlaneseq
        %v1610 = vshrl.u32 %v1609, 7
        %v1611 = vsub.s32 0, %v1610
        %v1612 = vrot.slane %v1587, %v1611
        %v1614 = vadd.f32 %v1607, %v1612
        %v1615 = vpack.c.bf16 %v1614, %v1614
        %v1616 = vld [vmem:[%s9] sm:$0xf]
        %v1617 = vld [vmem:[%s9 + $0x4] sm:$0xf]
        %v1618 = vld [vmem:[%s9 + $0x8] sm:$0xf]
        %v1619 = vld [vmem:[%s9 + $0xc] sm:$0xf]
        %v1620 = vld [vmem:[%s10] sm:$0x1]
        %v1622 = vlaneseq
        %v1623 = vshrl.u32 %v1622, 7
        %v1624 = vsub.s32 0, %v1623
        %v1625 = vrot.slane %v1620, %v1624
        %v1631 = vunpack.c.l.b16 %v1616
        %v1632 = vunpack.c.l.b16 %v1617
        %v1633 = vunpack.c.l.b16 %v1618
        %v1634 = vunpack.c.l.b16 %v1619
        %v1635 = vpack.c.b16 %v1632, %v1631
        %v1636 = vpack.c.b16 %v1634, %v1633
        %v1640 = vsel %vm440, %v1615, 0
        %1642 = vmatprep.subr.bf16.mxu0 0
        %1643 = vmatpush1.bf16.msra.mxu0 %v1635
        %1644 = vmatprep.subr.bf16.mxu0 0
        %1645 = vmatpush1.bf16.msra.mxu0 %v1636
        %1646 = vmatprep.subr.bf16.mxu0 0
        %1647 = vmatpush1.bf16.msra.mxu0 0
        %1648 = vmatprep.subr.bf16.mxu0 0
        %1649 = vmatpush1.bf16.msra.mxu0 0
        %1650 = vmatprep.subr.bf16.mxu0 0
        %1651 = vmatpush1.bf16.msra.mxu0 0
        %1652 = vmatprep.subr.bf16.mxu0 0
        %1653 = vmatpush1.bf16.msra.mxu0 0
        %1654 = vmatprep.subr.bf16.mxu0 0
        %1655 = vmatpush1.bf16.msra.mxu0 0
        %1656 = vmatprep.subr.bf16.mxu0 0
        %1657 = vmatpush1.bf16.msra.mxu0 0
        %1658 = vmatprep.subr.bf16.mxu0 0
        %1659 = vmatpush1.bf16.msra.mxu0 0
        %1660 = vmatprep.subr.bf16.mxu0 0
        %1661 = vmatpush1.bf16.msra.mxu0 0
        %1662 = vmatprep.subr.bf16.mxu0 0
        %1663 = vmatpush1.bf16.msra.mxu0 0
        %1664 = vmatprep.subr.bf16.mxu0 0
        %1665 = vmatpush1.bf16.msra.mxu0 0
        %1666 = vmatprep.subr.bf16.mxu0 0
        %1667 = vmatpush1.bf16.msra.mxu0 0
        %1668 = vmatprep.subr.bf16.mxu0 0
        %1669 = vmatpush1.bf16.msra.mxu0 0
        %1670 = vmatprep.subr.bf16.mxu0 0
        %1671 = vmatpush1.bf16.msra.mxu0 0
        %1672 = vmatprep.subr.bf16.mxu0 0
        %1673 = vmatpush1.bf16.msra.mxu0 0
        %1674 = vmatprep.mubr.bf16.mxu0 0
        %1675 = vmatmul.mubr.bf16.gmra.mrb[0].mxu0 %v1640
        %v1676 = vpop.f32.mrb[0].mxu0
        %v1677 = vadd.f32 %v1625, %v1676
        %v1678 = vpop.f32.mrb[0].mxu0
        %v1679 = vpop.f32.mrb[0].mxu0
        %v1680 = vpop.f32.mrb[0].mxu0
        %1681 = vdwg.mxu0
        %v1682 = vmul.f32 %v1677, 0.5
        %v1683 = vmul.f32 %v1677, 0.044715
        %v1684 = vmul.f32 %v1683, %v1677
        %v1685 = vmul.f32 %v1684, %v1677
        %v1686 = vadd.f32 %v1677, %v1685
        %v1687 = vmul.f32 %v1686, 0.7978846
        %v1688 = vtanh.pop %v1687
        %v1689 = vadd.f32 %v1688, 1.0
        %v1690 = vmul.f32 %v1682, %v1689
        %v1691 = vpack.c.bf16 %v1690, %v1690
        %v1692 = vld [vmem:[%s11] sm:$0xf]
        %v1693 = vld [vmem:[%s11 + $0x4] sm:$0xf]
        %v1694 = vld [vmem:[%s11 + $0x8] sm:$0xf]
        %v1695 = vld [vmem:[%s11 + $0xc] sm:$0xf]
        %v1696 = vld [vmem:[%s11 + $0x10] sm:$0xf]
        %v1697 = vld [vmem:[%s11 + $0x14] sm:$0xf]
        %v1698 = vld [vmem:[%s11 + $0x18] sm:$0xf]
        %v1699 = vld [vmem:[%s11 + $0x1c] sm:$0xf]
        %v1700 = vld [vmem:[%s11 + $0x20] sm:$0xf]
        %v1701 = vld [vmem:[%s11 + $0x24] sm:$0xf]
        %v1702 = vld [vmem:[%s11 + $0x28] sm:$0xf]
        %v1703 = vld [vmem:[%s11 + $0x2c] sm:$0xf]
        %v1704 = vld [vmem:[%s11 + $0x30] sm:$0xf]
        %v1705 = vld [vmem:[%s11 + $0x34] sm:$0xf]
        %v1706 = vld [vmem:[%s11 + $0x38] sm:$0xf]
        %v1707 = vld [vmem:[%s11 + $0x3c] sm:$0xf]
        %v1708 = vld [vmem:[%s12] sm:$0x1]
        %v1710 = vlaneseq
        %v1711 = vshrl.u32 %v1710, 7
        %v1712 = vsub.s32 0, %v1711
        %v1713 = vrot.slane %v1708, %v1712
        %v1731 = vunpack.c.l.b16 %v1692
        %v1732 = vunpack.c.l.b16 %v1693
        %v1733 = vunpack.c.l.b16 %v1694
        %v1734 = vunpack.c.l.b16 %v1695
        %v1735 = vunpack.c.l.b16 %v1696
        %v1736 = vunpack.c.l.b16 %v1697
        %v1737 = vunpack.c.l.b16 %v1698
        %v1738 = vunpack.c.l.b16 %v1699
        %v1739 = vunpack.c.l.b16 %v1700
        %v1740 = vunpack.c.l.b16 %v1701
        %v1741 = vunpack.c.l.b16 %v1702
        %v1742 = vunpack.c.l.b16 %v1703
        %v1743 = vunpack.c.l.b16 %v1704
        %v1744 = vunpack.c.l.b16 %v1705
        %v1745 = vunpack.c.l.b16 %v1706
        %v1746 = vunpack.c.l.b16 %v1707
        %v1747 = vpack.c.b16 %v1732, %v1731
        %v1748 = vpack.c.b16 %v1734, %v1733
        %v1749 = vpack.c.b16 %v1736, %v1735
        %v1750 = vpack.c.b16 %v1738, %v1737
        %v1751 = vpack.c.b16 %v1740, %v1739
        %v1752 = vpack.c.b16 %v1742, %v1741
        %v1753 = vpack.c.b16 %v1744, %v1743
        %v1754 = vpack.c.b16 %v1746, %v1745
        %1763 = vmatprep.subr.bf16.mxu0 0
        %1764 = vmatpush1.bf16.msra.mxu0 %v1747
        %1765 = vmatprep.subr.bf16.mxu0 0
        %1766 = vmatpush1.bf16.msra.mxu0 %v1748
        %1767 = vmatprep.subr.bf16.mxu0 0
        %1768 = vmatpush1.bf16.msra.mxu0 %v1749
        %1769 = vmatprep.subr.bf16.mxu0 0
        %1770 = vmatpush1.bf16.msra.mxu0 %v1750
        %1771 = vmatprep.subr.bf16.mxu0 0
        %1772 = vmatpush1.bf16.msra.mxu0 %v1751
        %1773 = vmatprep.subr.bf16.mxu0 0
        %1774 = vmatpush1.bf16.msra.mxu0 %v1752
        %1775 = vmatprep.subr.bf16.mxu0 0
        %1776 = vmatpush1.bf16.msra.mxu0 %v1753
        %1777 = vmatprep.subr.bf16.mxu0 0
        %1778 = vmatpush1.bf16.msra.mxu0 %v1754
        %1779 = vmatprep.subr.bf16.mxu0 0
        %1780 = vmatpush1.bf16.msra.mxu0 0
        %1781 = vmatprep.subr.bf16.mxu0 0
        %1782 = vmatpush1.bf16.msra.mxu0 0
        %1783 = vmatprep.subr.bf16.mxu0 0
        %1784 = vmatpush1.bf16.msra.mxu0 0
        %1785 = vmatprep.subr.bf16.mxu0 0
        %1786 = vmatpush1.bf16.msra.mxu0 0
        %1787 = vmatprep.subr.bf16.mxu0 0
        %1788 = vmatpush1.bf16.msra.mxu0 0
        %1789 = vmatprep.subr.bf16.mxu0 0
        %1790 = vmatpush1.bf16.msra.mxu0 0
        %1791 = vmatprep.subr.bf16.mxu0 0
        %1792 = vmatpush1.bf16.msra.mxu0 0
        %1793 = vmatprep.subr.bf16.mxu0 0
        %1794 = vmatpush1.bf16.msra.mxu0 0
        %1795 = vmatprep.mubr.bf16.mxu0 0
        %1796 = vmatmul.mubr.bf16.gmra.mrb[0].mxu0 %v1691
        %v1797 = vpop.f32.mrb[0].mxu0
        %v1798 = vadd.f32 %v1713, %v1797
        %v1799 = vpop.f32.mrb[0].mxu0
        %v1800 = vpop.f32.mrb[0].mxu0
        %v1801 = vpop.f32.mrb[0].mxu0
        %1802 = vdwg.mxu0
        %v1803 = vadd.f32 %v1585, %v1798
        %1804 = vst.msk [vmem:[%s431] sm:$0xff] %vm440, %v1803
        %s1805 = sand.u32 %s313, 1
        %s1806 = scalar_lea.sflag [#allocation5], %s1805
        %s1807 = sand.u32 %s313, 1
        %s1808 = smul.addr %s1807, 8
        %s1809 = scalar_lea.vmem [#allocation4], %s1808
        // Predicated region
        $region73: #{tpu_custom_call.1} parent=71 // pred_check
          %p1810 = pneg %p323
        $region74: #{tpu_custom_call.1} parent=71 // pred_check_branch
          %1812 = sbr.rel (%p1810) target = $region76
        $region75: #{tpu_custom_call.1} parent=71 // pred_region
          %s1814 = ssub.s32 128, 128
          %1815 = vsyncadd %s1806, %s1814
          %s1816 = smul.addr %s27, 128
          %s1817 = scalar_lea.hbm %s13, %s1816
          %s1819 = sshll.u32 %s1809, 4
          %s1820 = int_to_ptr.vmem [resolvable:$true] %s1819
          %1822 = dma.vmem_to_hbm [thread:$0]  %s1820, 128, %s1817, %s1806
        $region76: #{tpu_custom_call.1} parent=71 // pred_fallthru
          _
      $region72: #{tpu_custom_call.1} parent=5 // pred_fallthru
        _
      %p1823 = scmp.le.s32.totalorder 2, %s22
      // Predicated region
      $region77: #{tpu_custom_call.1} parent=5 // pred_check
        %p1824 = pneg %p1823
      $region78: #{tpu_custom_call.1} parent=5 // pred_check_branch
        %1826 = sbr.rel (%p1824) target = $region80
      $region79: #{tpu_custom_call.1} parent=5 // pred_region
        %s1827 = ssub.s32 %s22, 2
        // Predicated region
        $region81: #{tpu_custom_call.1} parent=79 // pred_check
          %p1828 = pneg %p329
        $region82: #{tpu_custom_call.1} parent=79 // pred_check_branch
          %1830 = sbr.rel (%p1828) target = $region84
        $region83: #{tpu_custom_call.1} parent=79 // pred_region
          %s1831 = sand.u32 %s314, 1
          %s1832 = scalar_lea.sflag [#allocation5], %s1831
          %s1833 = sand.u32 %s314, 1
          %s1834 = smul.addr %s1833, 8
          %s1835 = scalar_lea.vmem [#allocation4], %s1834
          %1836 = dma.done %s1832, 128
        $region84: #{tpu_custom_call.1} parent=79 // pred_fallthru
          _
      $region80: #{tpu_custom_call.1} parent=5 // pred_fallthru
        _
    $region6: #{tpu_custom_call.1} parent=1 // loop_footer
      %s26 = sadd.s32 1, %s22
    $region7: #{tpu_custom_call.1} parent=1 // loop_footer_branch
      %21 = sbr.rel target = $region3
    $region8: #{tpu_custom_call.1} parent=1 // loop_exit
      _
    %1837 = vsyncpa [#allocation5], 1
    %s1838 = scalar_lea.sflag [#allocation5], 1
    %1839 = vsyncpa %s1838, 1

// kernel: tpu_custom_call.1
$region0: #{tpu_custom_call.1}
  #allocation0 [shape = 'u32[]', space=smem, size = 0x4, offset = 0x4, fixed_abs, tag = 'smem constant byte address 0x4 - core index']
  #allocation1 [shape = 'u32[144,128]{1,0:T(1,128)}', space=vmem, size = 0x12000, scoped, tag = 'internal scratch']
  #allocation2 [shape = 'bf16[8,96]{1,0:T(8,128)(2,1)}', space=vmem, size = 0x800, scoped, tag = 'scratch operand']
  #allocation3 [shape = 'bf16[8,32]{1,0:T(8,128)(2,1)}', space=vmem, size = 0x800, scoped, tag = 'scratch operand']
  %s0 = inlined_call_operand.vmem [shape: f32[2,8,32], index: 0, kind: input, shape index: {}]
  %s1 = inlined_call_operand.vmem [shape: f32[1,32], index: 1, kind: input, shape index: {}]
  %s2 = inlined_call_operand.vmem [shape: f32[1,32], index: 2, kind: input, shape index: {}]
  %s3 = inlined_call_operand.vmem [shape: bf16[32,96], index: 3, kind: input, shape index: {}]
  %s4 = inlined_call_operand.vmem [shape: f32[1,96], index: 4, kind: input, shape index: {}]
  %s5 = inlined_call_operand.vmem [shape: bf16[32,32], index: 5, kind: input, shape index: {}]
  %s6 = inlined_call_operand.vmem [shape: f32[1,32], index: 6, kind: input, shape index: {}]
  %s7 = inlined_call_operand.vmem [shape: f32[1,32], index: 7, kind: input, shape index: {}]
  %s8 = inlined_call_operand.vmem [shape: f32[1,32], index: 8, kind: input, shape index: {}]
  %s9 = inlined_call_operand.vmem [shape: bf16[32,128], index: 9, kind: input, shape index: {}]
  %s10 = inlined_call_operand.vmem [shape: f32[1,128], index: 10, kind: input, shape index: {}]
  %s11 = inlined_call_operand.vmem [shape: bf16[128,32], index: 11, kind: input, shape index: {}]
  %s12 = inlined_call_operand.vmem [shape: f32[1,32], index: 12, kind: input, shape index: {}]
  %s13 = inlined_call_operand.hbm [shape: f32[2,8,32], index: 13, kind: output, shape index: {}]
  %s14 = sld [smem:[#allocation0]]
  $region85: #{tpu_custom_call.1} parent=0
    _
  %s16 = ssub.s32 1, %s14
  %s17 = scalar_select 0, %s16, %s14
  $region1: #{tpu_custom_call.1} parent=0
    #allocation4 [shape = 'u8[8192]{0}', space=vmem, size = 0x2000, scoped, tag = 'output window, operand 0']
    #allocation5 [shape = 's32[2]{0}', space=sflag, size = 0x8, scoped, tag = 'scoped memory for tpu_custom_call.1']
    %18 = vsyncpa [#allocation5], 0
    %s19 = scalar_lea.sflag [#allocation5], 1
    %20 = vsyncpa %s19, 0
    loop: start=0, step=1, limit=4
    $region2: #{tpu_custom_call.1} parent=1 // loop_pre_header
      _
    $region3: #{tpu_custom_call.1} parent=1 // loop_header
      %s22 = sphi 0, %s26
      %p23 = scmp.ge.s32.totalorder %s22, 4
      %s32 = sphi 0, %s34
      %s35 = sphi 0, %s32
      %s36 = sphi 0, %s35
      %s52 = sphi 0, %s36
      %s56 = sphi 0, %s56
      %s58 = sphi 0, %s56
      %s59 = sphi 0, %s58
      %s73 = sphi 0, %s59
      %s77 = sphi 0, %s77
      %s79 = sphi 0, %s77
      %s80 = sphi 0, %s79
      %s94 = sphi 0, %s80
      %s98 = sphi 0, %s98
      %s100 = sphi 0, %s98
      %s101 = sphi 0, %s100
      %s115 = sphi 0, %s101
      %s119 = sphi 0, %s119
      %s121 = sphi 0, %s119
      %s122 = sphi 0, %s121
      %s136 = sphi 0, %s122
      %s140 = sphi 0, %s140
      %s142 = sphi 0, %s140
      %s143 = sphi 0, %s142
      %s157 = sphi 0, %s143
      %s161 = sphi 0, %s161
      %s163 = sphi 0, %s161
      %s164 = sphi 0, %s163
      %s178 = sphi 0, %s164
      %s182 = sphi 0, %s182
      %s184 = sphi 0, %s182
      %s185 = sphi 0, %s184
      %s199 = sphi 0, %s185
      %s203 = sphi 0, %s203
      %s205 = sphi 0, %s203
      %s206 = sphi 0, %s205
      %s220 = sphi 0, %s206
      %s224 = sphi 0, %s224
      %s226 = sphi 0, %s224
      %s227 = sphi 0, %s226
      %s241 = sphi 0, %s227
      %s245 = sphi 0, %s245
      %s247 = sphi 0, %s245
      %s248 = sphi 0, %s247
      %s262 = sphi 0, %s248
      %s266 = sphi 0, %s266
      %s268 = sphi 0, %s266
      %s269 = sphi 0, %s268
      %s283 = sphi 0, %s269
      %s287 = sphi 0, %s287
      %s289 = sphi 0, %s287
      %s290 = sphi 0, %s289
      %s304 = sphi 0, %s290
      %s310 = sphi 0, %s312
      %s313 = sphi 0, %s310
      %s314 = sphi 0, %s313
      %s330 = sphi 0, %s314
    $region4: #{tpu_custom_call.1} parent=1 // loop_header_branch
      %25 = sbr.rel (%p23) target = $region8
    $region5: #{tpu_custom_call.1} parent=1 // loop_body
      %s27 = ssub.s32 %s22, 1
      %s28 = ssub.s32 %s22, 2
      %s29 = sadd.s32 %s22, 1
      %s30 = ssub.s32 %s22, %s29
      %p31 = scmp.eq.s32.totalorder %s30, 0
      %s33 = sadd.s32 %s32, 1
      %s34 = scalar_select %p31, %s32, %s33
      %p37 = pneg %p31
      %p38 = scmp.eq.s32.totalorder %s22, 1
      %p39 = por %p37, %p38
      %p40 = scmp.ne.s32.totalorder %s32, %s35
      %p41 = scmp.eq.s32.totalorder %s22, 0
      %p42 = por %p40, %p41
      %p43 = scmp.ne.s32.totalorder %s32, %s35
      %p44 = scmp.eq.s32.totalorder %s27, 1
      %p45 = por %p43, %p44
      %p46 = scmp.ne.s32.totalorder %s35, %s36
      %p47 = scmp.eq.s32.totalorder %s27, 0
      %p48 = por %p46, %p47
      %p49 = scmp.ne.s32.totalorder %s35, %s36
      %p50 = scmp.eq.s32.totalorder %s28, 1
      %p51 = por %p49, %p50
      %p53 = scmp.ne.s32.totalorder %s36, %s52
      %p54 = scmp.eq.s32.totalorder %s28, 0
      %p55 = por %p53, %p54
      %s57 = sadd.s32 %s56, 1
      %p60 = scmp.eq.s32.totalorder %s22, 1
      %p61 = scmp.ne.s32.totalorder %s56, %s58
      %p62 = scmp.eq.s32.totalorder %s22, 0
      %p63 = por %p61, %p62
      %p64 = scmp.ne.s32.totalorder %s56, %s58
      %p65 = scmp.eq.s32.totalorder %s27, 1
      %p66 = por %p64, %p65
      %p67 = scmp.ne.s32.totalorder %s58, %s59
      %p68 = scmp.eq.s32.totalorder %s27, 0
      %p69 = por %p67, %p68
      %p70 = scmp.ne.s32.totalorder %s58, %s59
      %p71 = scmp.eq.s32.totalorder %s28, 1
      %p72 = por %p70, %p71
      %p74 = scmp.ne.s32.totalorder %s59, %s73
      %p75 = scmp.eq.s32.totalorder %s28, 0
      %p76 = por %p74, %p75
      %s78 = sadd.s32 %s77, 1
      %p81 = scmp.eq.s32.totalorder %s22, 1
      %p82 = scmp.ne.s32.totalorder %s77, %s79
      %p83 = scmp.eq.s32.totalorder %s22, 0
      %p84 = por %p82, %p83
      %p85 = scmp.ne.s32.totalorder %s77, %s79
      %p86 = scmp.eq.s32.totalorder %s27, 1
      %p87 = por %p85, %p86
      %p88 = scmp.ne.s32.totalorder %s79, %s80
      %p89 = scmp.eq.s32.totalorder %s27, 0
      %p90 = por %p88, %p89
      %p91 = scmp.ne.s32.totalorder %s79, %s80
      %p92 = scmp.eq.s32.totalorder %s28, 1
      %p93 = por %p91, %p92
      %p95 = scmp.ne.s32.totalorder %s80, %s94
      %p96 = scmp.eq.s32.totalorder %s28, 0
      %p97 = por %p95, %p96
      %s99 = sadd.s32 %s98, 1
      %p102 = scmp.eq.s32.totalorder %s22, 1
      %p103 = scmp.ne.s32.totalorder %s98, %s100
      %p104 = scmp.eq.s32.totalorder %s22, 0
      %p105 = por %p103, %p104
      %p106 = scmp.ne.s32.totalorder %s98, %s100
      %p107 = scmp.eq.s32.totalorder %s27, 1
      %p108 = por %p106, %p107
      %p109 = scmp.ne.s32.totalorder %s100, %s101
      %p110 = scmp.eq.s32.totalorder %s27, 0
      %p111 = por %p109, %p110
      %p112 = scmp.ne.s32.totalorder %s100, %s101
      %p113 = scmp.eq.s32.totalorder %s28, 1
      %p114 = por %p112, %p113
      %p116 = scmp.ne.s32.totalorder %s101, %s115
      %p117 = scmp.eq.s32.totalorder %s28, 0
      %p118 = por %p116, %p117
      %s120 = sadd.s32 %s119, 1
      %p123 = scmp.eq.s32.totalorder %s22, 1
      %p124 = scmp.ne.s32.totalorder %s119, %s121
      %p125 = scmp.eq.s32.totalorder %s22, 0
      %p126 = por %p124, %p125
      %p127 = scmp.ne.s32.totalorder %s119, %s121
      %p128 = scmp.eq.s32.totalorder %s27, 1
      %p129 = por %p127, %p128
      %p130 = scmp.ne.s32.totalorder %s121, %s122
      %p131 = scmp.eq.s32.totalorder %s27, 0
      %p132 = por %p130, %p131
      %p133 = scmp.ne.s32.totalorder %s121, %s122
      %p134 = scmp.eq.s32.totalorder %s28, 1
      %p135 = por %p133, %p134
      %p137 = scmp.ne.s32.totalorder %s122, %s136
      %p138 = scmp.eq.s32.totalorder %s28, 0
      %p139 = por %p137, %p138
      %s141 = sadd.s32 %s140, 1
      %p144 = scmp.eq.s32.totalorder %s22, 1
      %p145 = scmp.ne.s32.totalorder %s140, %s142
      %p146 = scmp.eq.s32.totalorder %s22, 0
      %p147 = por %p145, %p146
      %p148 = scmp.ne.s32.totalorder %s140, %s142
      %p149 = scmp.eq.s32.totalorder %s27, 1
      %p150 = por %p148, %p149
      %p151 = scmp.ne.s32.totalorder %s142, %s143
      %p152 = scmp.eq.s32.totalorder %s27, 0
      %p153 = por %p151, %p152
      %p154 = scmp.ne.s32.totalorder %s142, %s143
      %p155 = scmp.eq.s32.totalorder %s28, 1
      %p156 = por %p154, %p155
      %p158 = scmp.ne.s32.totalorder %s143, %s157
      %p159 = scmp.eq.s32.totalorder %s28, 0
      %p160 = por %p158, %p159
      %s162 = sadd.s32 %s161, 1
      %p165 = scmp.eq.s32.totalorder %s22, 1
      %p166 = scmp.ne.s32.totalorder %s161, %s163
      %p167 = scmp.eq.s32.totalorder %s22, 0
      %p168 = por %p166, %p167
      %p169 = scmp.ne.s32.totalorder %s161, %s163
      %p170 = scmp.eq.s32.totalorder %s27, 1
      %p171 = por %p169, %p170
      %p172 = scmp.ne.s32.totalorder %s163, %s164
      %p173 = scmp.eq.s32.totalorder %s27, 0
      %p174 = por %p172, %p173
      %p175 = scmp.ne.s32.totalorder %s163, %s164
      %p176 = scmp.eq.s32.totalorder %s28, 1
      %p177 = por %p175, %p176
      %p179 = scmp.ne.s32.totalorder %s164, %s178
      %p180 = scmp.eq.s32.totalorder %s28, 0
      %p181 = por %p179, %p180
      %s183 = sadd.s32 %s182, 1
      %p186 = scmp.eq.s32.totalorder %s22, 1
      %p187 = scmp.ne.s32.totalorder %s182, %s184
      %p188 = scmp.eq.s32.totalorder %s22, 0
      %p189 = por %p187, %p188
      %p190 = scmp.ne.s32.totalorder %s182, %s184
      %p191 = scmp.eq.s32.totalorder %s27, 1
      %p192 = por %p190, %p191
      %p193 = scmp.ne.s32.totalorder %s184, %s185
      %p194 = scmp.eq.s32.totalorder %s27, 0
      %p195 = por %p193, %p194
      %p196 = scmp.ne.s32.totalorder %s184, %s185
      %p197 = scmp.eq.s32.totalorder %s28, 1
      %p198 = por %p196, %p197
      %p200 = scmp.ne.s32.totalorder %s185, %s199
      %p201 = scmp.eq.s32.totalorder %s28, 0
      %p202 = por %p200, %p201
      %s204 = sadd.s32 %s203, 1
      %p207 = scmp.eq.s32.totalorder %s22, 1
      %p208 = scmp.ne.s32.totalorder %s203, %s205
      %p209 = scmp.eq.s32.totalorder %s22, 0
      %p210 = por %p208, %p209
      %p211 = scmp.ne.s32.totalorder %s203, %s205
      %p212 = scmp.eq.s32.totalorder %s27, 1
      %p213 = por %p211, %p212
      %p214 = scmp.ne.s32.totalorder %s205, %s206
      %p215 = scmp.eq.s32.totalorder %s27, 0
      %p216 = por %p214, %p215
      %p217 = scmp.ne.s32.totalorder %s205, %s206
      %p218 = scmp.eq.s32.totalorder %s28, 1
      %p219 = por %p217, %p218
      %p221 = scmp.ne.s32.totalorder %s206, %s220
      %p222 = scmp.eq.s32.totalorder %s28, 0
      %p223 = por %p221, %p222
      %s225 = sadd.s32 %s224, 1
      %p228 = scmp.eq.s32.totalorder %s22, 1
      %p229 = scmp.ne.s32.totalorder %s224, %s226
      %p230 = scmp.eq.s32.totalorder %s22, 0
      %p231 = por %p229, %p230
      %p232 = scmp.ne.s32.totalorder %s224, %s226
      %p233 = scmp.eq.s32.totalorder %s27, 1
      %p234 = por %p232, %p233
      %p235 = scmp.ne.s32.totalorder %s226, %s227
      %p236 = scmp.eq.s32.totalorder %s27, 0
      %p237 = por %p235, %p236
      %p238 = scmp.ne.s32.totalorder %s226, %s227
      %p239 = scmp.eq.s32.totalorder %s28, 1
      %p240 = por %p238, %p239
      %p242 = scmp.ne.s32.totalorder %s227, %s241
      %p243 = scmp.eq.s32.totalorder %s28, 0
      %p244 = por %p242, %p243
      %s246 = sadd.s32 %s245, 1
      %p249 = scmp.eq.s32.totalorder %s22, 1
      %p250 = scmp.ne.s32.totalorder %s245, %s247
      %p251 = scmp.eq.s32.totalorder %s22, 0
      %p252 = por %p250, %p251
      %p253 = scmp.ne.s32.totalorder %s245, %s247
      %p254 = scmp.eq.s32.totalorder %s27, 1
      %p255 = por %p253, %p254
      %p256 = scmp.ne.s32.totalorder %s247, %s248
      %p257 = scmp.eq.s32.totalorder %s27, 0
      %p258 = por %p256, %p257
      %p259 = scmp.ne.s32.totalorder %s247, %s248
      %p260 = scmp.eq.s32.totalorder %s28, 1
      %p261 = por %p259, %p260
      %p263 = scmp.ne.s32.totalorder %s248, %s262
      %p264 = scmp.eq.s32.totalorder %s28, 0
      %p265 = por %p263, %p264
      %s267 = sadd.s32 %s266, 1
      %p270 = scmp.eq.s32.totalorder %s22, 1
      %p271 = scmp.ne.s32.totalorder %s266, %s268
      %p272 = scmp.eq.s32.totalorder %s22, 0
      %p273 = por %p271, %p272
      %p274 = scmp.ne.s32.totalorder %s266, %s268
      %p275 = scmp.eq.s32.totalorder %s27, 1
      %p276 = por %p274, %p275
      %p277 = scmp.ne.s32.totalorder %s268, %s269
      %p278 = scmp.eq.s32.totalorder %s27, 0
      %p279 = por %p277, %p278
      %p280 = scmp.ne.s32.totalorder %s268, %s269
      %p281 = scmp.eq.s32.totalorder %s28, 1
      %p282 = por %p280, %p281
      %p284 = scmp.ne.s32.totalorder %s269, %s283
      %p285 = scmp.eq.s32.totalorder %s28, 0
      %p286 = por %p284, %p285
      %s288 = sadd.s32 %s287, 1
      %p291 = scmp.eq.s32.totalorder %s22, 1
      %p292 = scmp.ne.s32.totalorder %s287, %s289
      %p293 = scmp.eq.s32.totalorder %s22, 0
      %p294 = por %p292, %p293
      %p295 = scmp.ne.s32.totalorder %s287, %s289
      %p296 = scmp.eq.s32.totalorder %s27, 1
      %p297 = por %p295, %p296
      %p298 = scmp.ne.s32.totalorder %s289, %s290
      %p299 = scmp.eq.s32.totalorder %s27, 0
      %p300 = por %p298, %p299
      %p301 = scmp.ne.s32.totalorder %s289, %s290
      %p302 = scmp.eq.s32.totalorder %s28, 1
      %p303 = por %p301, %p302
      %p305 = scmp.ne.s32.totalorder %s290, %s304
      %p306 = scmp.eq.s32.totalorder %s28, 0
      %p307 = por %p305, %p306
      %s308 = ssub.s32 %s22, %s29
      %p309 = scmp.eq.s32.totalorder %s308, 0
      %s311 = sadd.s32 %s310, 1
      %s312 = scalar_select %p309, %s310, %s311
      %p315 = pneg %p309
      %p316 = scmp.eq.s32.totalorder %s22, 1
      %p317 = por %p315, %p316
      %p318 = scmp.ne.s32.totalorder %s310, %s313
      %p319 = scmp.eq.s32.totalorder %s22, 0
      %p320 = por %p318, %p319
      %p321 = scmp.ne.s32.totalorder %s310, %s313
      %p322 = scmp.eq.s32.totalorder %s27, 1
      %p323 = por %p321, %p322
      %p324 = scmp.ne.s32.totalorder %s313, %s314
      %p325 = scmp.eq.s32.totalorder %s27, 0
      %p326 = por %p324, %p325
      %p327 = scmp.ne.s32.totalorder %s313, %s314
      %p328 = scmp.eq.s32.totalorder %s28, 1
      %p329 = por %p327, %p328
      %p331 = scmp.ne.s32.totalorder %s314, %s330
      %p332 = scmp.eq.s32.totalorder %s28, 0
      %p333 = por %p331, %p332
      %p334 = scmp.le.s32.totalorder 1, %s22
      %p335 = scmp.lt.s32.totalorder %s22, 3
      %p336 = pnand %p334, %p335
      %p337 = pneg %p336
      // Predicated region
      $region9: #{tpu_custom_call.1} parent=5 // pred_check
        _
      $region10: #{tpu_custom_call.1} parent=5 // pred_check_branch
        %339 = sbr.rel (%p336) target = $region12
      $region11: #{tpu_custom_call.1} parent=5 // pred_region
        %s340 = ssub.s32 %s22, 1
        // Predicated region
        $region13: #{tpu_custom_call.1} parent=11 // pred_check
          %p341 = pneg %p69
        $region14: #{tpu_custom_call.1} parent=11 // pred_check_branch
          %343 = sbr.rel (%p341) target = $region16
        $region15: #{tpu_custom_call.1} parent=11 // pred_region
          _
        $region16: #{tpu_custom_call.1} parent=11 // pred_fallthru
          _
        // Predicated region
        $region17: #{tpu_custom_call.1} parent=11 // pred_check
          %p344 = pneg %p90
        $region18: #{tpu_custom_call.1} parent=11 // pred_check_branch
          %346 = sbr.rel (%p344) target = $region20
        $region19: #{tpu_custom_call.1} parent=11 // pred_region
          _
        $region20: #{tpu_custom_call.1} parent=11 // pred_fallthru
          _
        // Predicated region
        $region21: #{tpu_custom_call.1} parent=11 // pred_check
          %p347 = pneg %p111
        $region22: #{tpu_custom_call.1} parent=11 // pred_check_branch
          %349 = sbr.rel (%p347) target = $region24
        $region23: #{tpu_custom_call.1} parent=11 // pred_region
          _
        $region24: #{tpu_custom_call.1} parent=11 // pred_fallthru
          _
        // Predicated region
        $region25: #{tpu_custom_call.1} parent=11 // pred_check
          %p350 = pneg %p132
        $region26: #{tpu_custom_call.1} parent=11 // pred_check_branch
          %352 = sbr.rel (%p350) target = $region28
        $region27: #{tpu_custom_call.1} parent=11 // pred_region
          _
        $region28: #{tpu_custom_call.1} parent=11 // pred_fallthru
          _
        // Predicated region
        $region29: #{tpu_custom_call.1} parent=11 // pred_check
          %p353 = pneg %p153
        $region30: #{tpu_custom_call.1} parent=11 // pred_check_branch
          %355 = sbr.rel (%p353) target = $region32
        $region31: #{tpu_custom_call.1} parent=11 // pred_region
          _
        $region32: #{tpu_custom_call.1} parent=11 // pred_fallthru
          _
        // Predicated region
        $region33: #{tpu_custom_call.1} parent=11 // pred_check
          %p356 = pneg %p174
        $region34: #{tpu_custom_call.1} parent=11 // pred_check_branch
          %358 = sbr.rel (%p356) target = $region36
        $region35: #{tpu_custom_call.1} parent=11 // pred_region
          _
        $region36: #{tpu_custom_call.1} parent=11 // pred_fallthru
          _
        // Predicated region
        $region37: #{tpu_custom_call.1} parent=11 // pred_check
          %p359 = pneg %p195
        $region38: #{tpu_custom_call.1} parent=11 // pred_check_branch
          %361 = sbr.rel (%p359) target = $region40
        $region39: #{tpu_custom_call.1} parent=11 // pred_region
          _
        $region40: #{tpu_custom_call.1} parent=11 // pred_fallthru
          _
        // Predicated region
        $region41: #{tpu_custom_call.1} parent=11 // pred_check
          %p362 = pneg %p216
        $region42: #{tpu_custom_call.1} parent=11 // pred_check_branch
          %364 = sbr.rel (%p362) target = $region44
        $region43: #{tpu_custom_call.1} parent=11 // pred_region
          _
        $region44: #{tpu_custom_call.1} parent=11 // pred_fallthru
          _
        // Predicated region
        $region45: #{tpu_custom_call.1} parent=11 // pred_check
          %p365 = pneg %p237
        $region46: #{tpu_custom_call.1} parent=11 // pred_check_branch
          %367 = sbr.rel (%p365) target = $region48
        $region47: #{tpu_custom_call.1} parent=11 // pred_region
          _
        $region48: #{tpu_custom_call.1} parent=11 // pred_fallthru
          _
        // Predicated region
        $region49: #{tpu_custom_call.1} parent=11 // pred_check
          %p368 = pneg %p258
        $region50: #{tpu_custom_call.1} parent=11 // pred_check_branch
          %370 = sbr.rel (%p368) target = $region52
        $region51: #{tpu_custom_call.1} parent=11 // pred_region
          _
        $region52: #{tpu_custom_call.1} parent=11 // pred_fallthru
          _
        // Predicated region
        $region53: #{tpu_custom_call.1} parent=11 // pred_check
          %p371 = pneg %p279
        $region54: #{tpu_custom_call.1} parent=11 // pred_check_branch
          %373 = sbr.rel (%p371) target = $region56
        $region55: #{tpu_custom_call.1} parent=11 // pred_region
          _
        $region56: #{tpu_custom_call.1} parent=11 // pred_fallthru
          _
        // Predicated region
        $region57: #{tpu_custom_call.1} parent=11 // pred_check
          %p374 = pneg %p300
        $region58: #{tpu_custom_call.1} parent=11 // pred_check_branch
          %376 = sbr.rel (%p374) target = $region60
        $region59: #{tpu_custom_call.1} parent=11 // pred_region
          _
        $region60: #{tpu_custom_call.1} parent=11 // pred_fallthru
          _
      $region12: #{tpu_custom_call.1} parent=5 // pred_fallthru
        _
      %p377 = scmp.lt.s32.totalorder %s22, 2
      // Predicated region
      $region61: #{tpu_custom_call.1} parent=5 // pred_check
        %p378 = pneg %p377
      $region62: #{tpu_custom_call.1} parent=5 // pred_check_branch
        %380 = sbr.rel (%p378) target = $region64
      $region63: #{tpu_custom_call.1} parent=5 // pred_region
        // Predicated region
        $region65: #{tpu_custom_call.1} parent=63 // pred_check
          %p381 = pneg %p42
        $region66: #{tpu_custom_call.1} parent=63 // pred_check_branch
          %383 = sbr.rel (%p381) target = $region68
        $region67: #{tpu_custom_call.1} parent=63 // pred_region
          %p384 = scmp.lt.s32.totalorder %s22, 1
          %s385 = scalar_select %p384, %s22, 1
          %s386 = smul.addr %s385, 8
          %s387 = scalar_lea.vmem %s0, %s386
        $region68: #{tpu_custom_call.1} parent=63 // pred_fallthru
          _
      $region64: #{tpu_custom_call.1} parent=5 // pred_fallthru
        _
      %p388 = scmp.le.s32.totalorder 1, %s22
      %p389 = scmp.lt.s32.totalorder %s22, 3
      %p390 = pnand %p388, %p389
      %p391 = pneg %p390
      // Predicated region
      $region69: #{tpu_custom_call.1} parent=5 // pred_check
        _
      $region70: #{tpu_custom_call.1} parent=5 // pred_check_branch
        %393 = sbr.rel (%p390) target = $region72
      $region71: #{tpu_custom_call.1} parent=5 // pred_region
        %s394 = ssub.s32 %s22, 1
        %p395 = scmp.lt.s32.totalorder %s27, 1
        %s396 = scalar_select %p395, %s27, 1
        %s397 = smul.addr %s396, 8
        %s398 = scalar_lea.vmem %s0, %s397
        %p399 = pneg %p48
        %p400 = pneg %p45
        %p401 = pneg %p69
        %p402 = pneg %p66
        %p403 = pneg %p90
        %p404 = pneg %p87
        %p405 = pneg %p111
        %p406 = pneg %p108
        %p407 = pneg %p132
        %p408 = pneg %p129
        %p409 = pneg %p153
        %p410 = pneg %p150
        %p411 = pneg %p174
        %p412 = pneg %p171
        %p413 = pneg %p195
        %p414 = pneg %p192
        %p415 = pneg %p216
        %p416 = pneg %p213
        %p417 = pneg %p237
        %p418 = pneg %p234
        %p419 = pneg %p258
        %p420 = pneg %p255
        %p421 = pneg %p279
        %p422 = pneg %p276
        %p423 = pneg %p300
        %p424 = pneg %p297
        %p425 = pneg %p326
        %p426 = pneg %p323
        %s427 = sand.u32 %s313, 1
        %s428 = scalar_lea.sflag [#allocation5], %s427
        %s429 = sand.u32 %s313, 1
        %s430 = smul.addr %s429, 8
        %s431 = scalar_lea.vmem [#allocation4], %s430
        %p432 = scmp.lt.s32.totalorder %s27, 1
        %s433 = scalar_select %p432, %s27, 1
        %s434 = smul.addr %s433, 8
        %s435 = scalar_lea.vmem %s0, %s434
        %v437 = vld [vmem:[%s435] sm:$0xff]
        %v438 = vld [vmem:[%s1] sm:$0x1]
        %v439 = vld [vmem:[%s2] sm:$0x1]
        %vm440 = vcmask 261120
        %v441 = vsel %vm440, %v437, 0.0
        %442 = vadd.xlane.f32.xlu0 %v441
        %v443 = vpop.xlane.xlu0 %442
        %v444 = vrcp.pop 32.0
        %v445 = vmul.f32 %v443, %v444
        %v446 = vsub.f32 %v437, %v445
        %v447 = vmul.f32 %v446, %v446
        %v448 = vsel %vm440, %v447, 0.0
        %449 = vadd.xlane.f32.xlu0 %v448
        %v450 = vpop.xlane.xlu0 %449
        %v451 = vmul.f32 %v450, %v444
        %v452 = vadd.f32 %v451, 1e-06
        %v453 = vrsqrt.pop %v452
        %v454 = vmul.f32 %v446, %v453
        %v456 = vlaneseq
        %v457 = vshrl.u32 %v456, 7
        %v458 = vsub.s32 0, %v457
        %v459 = vrot.slane %v438, %v458
        %v461 = vmul.f32 %v454, %v459
        %v463 = vlaneseq
        %v464 = vshrl.u32 %v463, 7
        %v465 = vsub.s32 0, %v464
        %v466 = vrot.slane %v439, %v465
        %v468 = vadd.f32 %v461, %v466
        %v469 = vpack.c.bf16 %v468, %v468
        %v470 = vld [vmem:[%s3] sm:$0xf]
        %v471 = vld [vmem:[%s3 + $0x4] sm:$0xf]
        %v472 = vld [vmem:[%s3 + $0x8] sm:$0xf]
        %v473 = vld [vmem:[%s3 + $0xc] sm:$0xf]
        %v474 = vld [vmem:[%s4] sm:$0x1]
        %v476 = vlaneseq
        %v477 = vshrl.u32 %v476, 7
        %v478 = vsub.s32 0, %v477
        %v479 = vrot.slane %v474, %v478
        %v485 = vunpack.c.l.b16 %v470
        %v486 = vunpack.c.l.b16 %v471
        %v487 = vunpack.c.l.b16 %v472
        %v488 = vunpack.c.l.b16 %v473
        %v489 = vpack.c.b16 %v486, %v485
        %v490 = vpack.c.b16 %v488, %v487
        %v494 = vsel %vm440, %v469, 0
        %496 = vmatprep.subr.bf16.mxu0 0
        %497 = vmatpush1.bf16.msra.mxu0 %v489
        %498 = vmatprep.subr.bf16.mxu0 0
        %499 = vmatpush1.bf16.msra.mxu0 %v490
        %500 = vmatprep.subr.bf16.mxu0 0
        %501 = vmatpush1.bf16.msra.mxu0 0
        %502 = vmatprep.subr.bf16.mxu0 0
        %503 = vmatpush1.bf16.msra.mxu0 0
        %504 = vmatprep.subr.bf16.mxu0 0
        %505 = vmatpush1.bf16.msra.mxu0 0
        %506 = vmatprep.subr.bf16.mxu0 0
        %507 = vmatpush1.bf16.msra.mxu0 0
        %508 = vmatprep.subr.bf16.mxu0 0
        %509 = vmatpush1.bf16.msra.mxu0 0
        %510 = vmatprep.subr.bf16.mxu0 0
        %511 = vmatpush1.bf16.msra.mxu0 0
        %512 = vmatprep.subr.bf16.mxu0 0
        %513 = vmatpush1.bf16.msra.mxu0 0
        %514 = vmatprep.subr.bf16.mxu0 0
        %515 = vmatpush1.bf16.msra.mxu0 0
        %516 = vmatprep.subr.bf16.mxu0 0
        %517 = vmatpush1.bf16.msra.mxu0 0
        %518 = vmatprep.subr.bf16.mxu0 0
        %519 = vmatpush1.bf16.msra.mxu0 0
        %520 = vmatprep.subr.bf16.mxu0 0
        %521 = vmatpush1.bf16.msra.mxu0 0
        %522 = vmatprep.subr.bf16.mxu0 0
        %523 = vmatpush1.bf16.msra.mxu0 0
        %524 = vmatprep.subr.bf16.mxu0 0
        %525 = vmatpush1.bf16.msra.mxu0 0
        %526 = vmatprep.subr.bf16.mxu0 0
        %527 = vmatpush1.bf16.msra.mxu0 0
        %528 = vmatprep.mubr.bf16.mxu0 0
        %529 = vmatmul.mubr.bf16.gmra.mrb[0].mxu0 %v494
        %v530 = vpop.f32.mrb[0].mxu0
        %v531 = vadd.f32 %v479, %v530
        %v532 = vpop.f32.mrb[0].mxu0
        %v533 = vpop.f32.mrb[0].mxu0
        %v534 = vpop.f32.mrb[0].mxu0
        %535 = vdwg.mxu0
        %v536 = vpack.c.bf16 %v531, %v531
        %vm537 = vcmask 781312
        %538 = vst.msk [vmem:[#allocation2] sm:$0xf] %vm537, %v536
        %v539 = vld [vmem:[#allocation2] sm:$0xf]
        %v541 = vunpack.c.l.b16 %v539
        %v542 = vpack.c.b16 %v541, %v541
        %543 = vrot.lane.b32.xlu0 %v542, 96
        %v544 = vpop.permute.xlu0 %543
        %vm545 = vcmask 31744
        %v547 = vsel %vm545, %v539, 0
        %v550 = vsel %vm545, %v544, 0
        %552 = vmatprep.subr.bf16.mxu0 0
        %553 = vmatpush1.bf16.xpose.msra.mxu0 %v550
        %554 = vmatprep.subr.bf16.mxu0 0
        %555 = vmatpush1.bf16.xpose.msra.mxu0 0
        %556 = vmatprep.subr.bf16.mxu0 0
        %557 = vmatpush1.bf16.xpose.msra.mxu0 0
        %558 = vmatprep.subr.bf16.mxu0 0
        %559 = vmatpush1.bf16.xpose.msra.mxu0 0
        %560 = vmatprep.subr.bf16.mxu0 0
        %561 = vmatpush1.bf16.xpose.msra.mxu0 0
        %562 = vmatprep.subr.bf16.mxu0 0
        %563 = vmatpush1.bf16.xpose.msra.mxu0 0
        %564 = vmatprep.subr.bf16.mxu0 0
        %565 = vmatpush1.bf16.xpose.msra.mxu0 0
        %566 = vmatprep.subr.bf16.mxu0 0
        %567 = vmatpush1.bf16.xpose.msra.mxu0 0
        %568 = vmatprep.subr.bf16.mxu0 0
        %569 = vmatpush1.bf16.xpose.msra.mxu0 0
        %570 = vmatprep.subr.bf16.mxu0 0
        %571 = vmatpush1.bf16.xpose.msra.mxu0 0
        %572 = vmatprep.subr.bf16.mxu0 0
        %573 = vmatpush1.bf16.xpose.msra.mxu0 0
        %574 = vmatprep.subr.bf16.mxu0 0
        %575 = vmatpush1.bf16.xpose.msra.mxu0 0
        %576 = vmatprep.subr.bf16.mxu0 0
        %577 = vmatpush1.bf16.xpose.msra.mxu0 0
        %578 = vmatprep.subr.bf16.mxu0 0
        %579 = vmatpush1.bf16.xpose.msra.mxu0 0
        %580 = vmatprep.subr.bf16.mxu0 0
        %581 = vmatpush1.bf16.xpose.msra.mxu0 0
        %582 = vmatprep.subr.bf16.mxu0 0
        %583 = vmatpush1.bf16.xpose.msra.mxu0 0
        %584 = vmatprep.mubr.bf16.mxu0 0
        %585 = vmatmul.mubr.bf16.gmra.mrb[0].mxu0 %v547
        %v586 = vpop.f32.mrb[0].mxu0
        %v587 = vadd.f32 0.0, %v586
        %v588 = vpop.f32.mrb[0].mxu0
        %v589 = vpop.f32.mrb[0].mxu0
        %v590 = vpop.f32.mrb[0].mxu0
        %591 = vdwg.mxu0
        %vm592 = vcmask 64512
        %v593 = vsel %vm592, %v587, -inf
        %594 = vmax.xlane.f32.xlu0 %v593
        %v595 = vpop.xlane.xlu0 %594
        %v596 = vsub.f32 %v587, %v595
        %v597 = vmul.f32 %v596, 1.442695
        %v598 = vpow.pop %v597
        %v599 = vsel %vm592, %v598, 0.0
        %600 = vadd.xlane.f32.xlu0 %v599
        %v601 = vpop.xlane.xlu0 %600
        %v602 = vrcp.pop %v601
        %v603 = vmul.f32 %v598, %v602
        %v604 = vpack.c.bf16 %v603, %v603
        %605 = vrot.lane.b32.xlu0 %v542, 64
        %v606 = vpop.permute.xlu0 %605
        %v608 = vsel %vm592, %v604, 0
        %vm610 = vcmask 1043456
        %v612 = vsel %vm610, %v606, 0
        %614 = vmatprep.subr.bf16.mxu0 0
        %615 = vmatpush1.bf16.msra.mxu0 %v612
        %616 = vmatprep.subr.bf16.mxu0 0
        %617 = vmatpush1.bf16.msra.mxu0 0
        %618 = vmatprep.subr.bf16.mxu0 0
        %619 = vmatpush1.bf16.msra.mxu0 0
        %620 = vmatprep.subr.bf16.mxu0 0
        %621 = vmatpush1.bf16.msra.mxu0 0
        %622 = vmatprep.subr.bf16.mxu0 0
        %623 = vmatpush1.bf16.msra.mxu0 0
        %624 = vmatprep.subr.bf16.mxu0 0
        %625 = vmatpush1.bf16.msra.mxu0 0
        %626 = vmatprep.subr.bf16.mxu0 0
        %627 = vmatpush1.bf16.msra.mxu0 0
        %628 = vmatprep.subr.bf16.mxu0 0
        %629 = vmatpush1.bf16.msra.mxu0 0
        %630 = vmatprep.subr.bf16.mxu0 0
        %631 = vmatpush1.bf16.msra.mxu0 0
        %632 = vmatprep.subr.bf16.mxu0 0
        %633 = vmatpush1.bf16.msra.mxu0 0
        %634 = vmatprep.subr.bf16.mxu0 0
        %635 = vmatpush1.bf16.msra.mxu0 0
        %636 = vmatprep.subr.bf16.mxu0 0
        %637 = vmatpush1.bf16.msra.mxu0 0
        %638 = vmatprep.subr.bf16.mxu0 0
        %639 = vmatpush1.bf16.msra.mxu0 0
        %640 = vmatprep.subr.bf16.mxu0 0
        %641 = vmatpush1.bf16.msra.mxu0 0
        %642 = vmatprep.subr.bf16.mxu0 0
        %643 = vmatpush1.bf16.msra.mxu0 0
        %644 = vmatprep.subr.bf16.mxu0 0
        %645 = vmatpush1.bf16.msra.mxu0 0
        %646 = vmatprep.mubr.bf16.mxu0 0
        %647 = vmatmul.mubr.bf16.gmra.mrb[0].mxu0 %v608
        %v648 = vpop.f32.mrb[0].mxu0
        %v649 = vadd.f32 0.0, %v648
        %v650 = vpop.f32.mrb[0].mxu0
        %v651 = vpop.f32.mrb[0].mxu0
        %v652 = vpop.f32.mrb[0].mxu0
        %653 = vdwg.mxu0
        %v654 = vpack.c.bf16 %v649, %v649
        %vm655 = vcmask 27648
        %656 = vst.msk [vmem:[#allocation3] sm:$0xf] %vm655, %v654
        %v657 = vld [vmem:[#allocation2] sm:$0xf]
        %v659 = vunpack.c.l.b16 %v657
        %v660 = vpack.c.b16 %v659, %v659
        %661 = vrot.lane.b32.xlu0 %v660, 124
        %v662 = vpop.permute.xlu0 %661
        %663 = vrot.lane.b32.xlu0 %v660, 92
        %v664 = vpop.permute.xlu0 %663
        %v666 = vsel %vm545, %v662, 0
        %v669 = vsel %vm545, %v664, 0
        %671 = vmatprep.subr.bf16.mxu0 0
        %672 = vmatpush1.bf16.xpose.msra.mxu0 %v669
        %673 = vmatprep.subr.bf16.mxu0 0
        %674 = vmatpush1.bf16.xpose.msra.mxu0 0
        %675 = vmatprep.subr.bf16.mxu0 0
        %676 = vmatpush1.bf16.xpose.msra.mxu0 0
        %677 = vmatprep.subr.bf16.mxu0 0
        %678 = vmatpush1.bf16.xpose.msra.mxu0 0
        %679 = vmatprep.subr.bf16.mxu0 0
        %680 = vmatpush1.bf16.xpose.msra.mxu0 0
        %681 = vmatprep.subr.bf16.mxu0 0
        %682 = vmatpush1.bf16.xpose.msra.mxu0 0
        %683 = vmatprep.subr.bf16.mxu0 0
        %684 = vmatpush1.bf16.xpose.msra.mxu0 0
        %685 = vmatprep.subr.bf16.mxu0 0
        %686 = vmatpush1.bf16.xpose.msra.mxu0 0
        %687 = vmatprep.subr.bf16.mxu0 0
        %688 = vmatpush1.bf16.xpose.msra.mxu0 0
        %689 = vmatprep.subr.bf16.mxu0 0
        %690 = vmatpush1.bf16.xpose.msra.mxu0 0
        %691 = vmatprep.subr.bf16.mxu0 0
        %692 = vmatpush1.bf16.xpose.msra.mxu0 0
        %693 = vmatprep.subr.bf16.mxu0 0
        %694 = vmatpush1.bf16.xpose.msra.mxu0 0
        %695 = vmatprep.subr.bf16.mxu0 0
        %696 = vmatpush1.bf16.xpose.msra.mxu0 0
        %697 = vmatprep.subr.bf16.mxu0 0
        %698 = vmatpush1.bf16.xpose.msra.mxu0 0
        %699 = vmatprep.subr.bf16.mxu0 0
        %700 = vmatpush1.bf16.xpose.msra.mxu0 0
        %701 = vmatprep.subr.bf16.mxu0 0
        %702 = vmatpush1.bf16.xpose.msra.mxu0 0
        %703 = vmatprep.mubr.bf16.mxu0 0
        %704 = vmatmul.mubr.bf16.gmra.mrb[0].mxu0 %v666
        %v705 = vpop.f32.mrb[0].mxu0
        %v706 = vadd.f32 0.0, %v705
        %v707 = vpop.f32.mrb[0].mxu0
        %v708 = vpop.f32.mrb[0].mxu0
        %v709 = vpop.f32.mrb[0].mxu0
        %710 = vdwg.mxu0
        %v711 = vsel %vm592, %v706, -inf
        %712 = vmax.xlane.f32.xlu0 %v711
        %v713 = vpop.xlane.xlu0 %712
        %v714 = vsub.f32 %v706, %v713
        %v715 = vmul.f32 %v714, 1.442695
        %v716 = vpow.pop %v715
        %v717 = vsel %vm592, %v716, 0.0
        %718 = vadd.xlane.f32.xlu0 %v717
        %v719 = vpop.xlane.xlu0 %718
        %v720 = vrcp.pop %v719
        %v721 = vmul.f32 %v716, %v720
        %v722 = vpack.c.bf16 %v721, %v721
        %723 = vrot.lane.b32.xlu0 %v660, 60
        %v724 = vpop.permute.xlu0 %723
        %v726 = vsel %vm592, %v722, 0
        %v729 = vsel %vm610, %v724, 0
        %731 = vmatprep.subr.bf16.mxu0 0
        %732 = vmatpush1.bf16.msra.mxu0 %v729
        %733 = vmatprep.subr.bf16.mxu0 0
        %734 = vmatpush1.bf16.msra.mxu0 0
        %735 = vmatprep.subr.bf16.mxu0 0
        %736 = vmatpush1.bf16.msra.mxu0 0
        %737 = vmatprep.subr.bf16.mxu0 0
        %738 = vmatpush1.bf16.msra.mxu0 0
        %739 = vmatprep.subr.bf16.mxu0 0
        %740 = vmatpush1.bf16.msra.mxu0 0
        %741 = vmatprep.subr.bf16.mxu0 0
        %742 = vmatpush1.bf16.msra.mxu0 0
        %743 = vmatprep.subr.bf16.mxu0 0
        %744 = vmatpush1.bf16.msra.mxu0 0
        %745 = vmatprep.subr.bf16.mxu0 0
        %746 = vmatpush1.bf16.msra.mxu0 0
        %747 = vmatprep.subr.bf16.mxu0 0
        %748 = vmatpush1.bf16.msra.mxu0 0
        %749 = vmatprep.subr.bf16.mxu0 0
        %750 = vmatpush1.bf16.msra.mxu0 0
        %751 = vmatprep.subr.bf16.mxu0 0
        %752 = vmatpush1.bf16.msra.mxu0 0
        %753 = vmatprep.subr.bf16.mxu0 0
        %754 = vmatpush1.bf16.msra.mxu0 0
        %755 = vmatprep.subr.bf16.mxu0 0
        %756 = vmatpush1.bf16.msra.mxu0 0
        %757 = vmatprep.subr.bf16.mxu0 0
        %758 = vmatpush1.bf16.msra.mxu0 0
        %759 = vmatprep.subr.bf16.mxu0 0
        %760 = vmatpush1.bf16.msra.mxu0 0
        %761 = vmatprep.subr.bf16.mxu0 0
        %762 = vmatpush1.bf16.msra.mxu0 0
        %763 = vmatprep.mubr.bf16.mxu0 0
        %764 = vmatmul.mubr.bf16.gmra.mrb[0].mxu0 %v726
        %v765 = vpop.f32.mrb[0].mxu0
        %v766 = vadd.f32 0.0, %v765
        %v767 = vpop.f32.mrb[0].mxu0
        %v768 = vpop.f32.mrb[0].mxu0
        %v769 = vpop.f32.mrb[0].mxu0
        %770 = vdwg.mxu0
        %v771 = vpack.c.bf16 %v766, %v766
        %v773 = vunpack.c.l.b16 %v771
        %v774 = vpack.c.b16 %v773, %v773
        %775 = vrot.lane.b32.xlu0 %v774, 4
        %v776 = vpop.permute.xlu0 %775
        %vm778 = vcmask 60448
        %779 = vst.msk [vmem:[#allocation3] sm:$0xf] %vm778, %v776
        %v780 = vld [vmem:[#allocation2] sm:$0xf]
        %v782 = vunpack.c.l.b16 %v780
        %v783 = vpack.c.b16 %v782, %v782
        %784 = vrot.lane.b32.xlu0 %v783, 120
        %v785 = vpop.permute.xlu0 %784
        %786 = vrot.lane.b32.xlu0 %v783, 88
        %v787 = vpop.permute.xlu0 %786
        %v789 = vsel %vm545, %v785, 0
        %v792 = vsel %vm545, %v787, 0
        %794 = vmatprep.subr.bf16.mxu0 0
        %795 = vmatpush1.bf16.xpose.msra.mxu0 %v792
        %796 = vmatprep.subr.bf16.mxu0 0
        %797 = vmatpush1.bf16.xpose.msra.mxu0 0
        %798 = vmatprep.subr.bf16.mxu0 0
        %799 = vmatpush1.bf16.xpose.msra.mxu0 0
        %800 = vmatprep.subr.bf16.mxu0 0
        %801 = vmatpush1.bf16.xpose.msra.mxu0 0
        %802 = vmatprep.subr.bf16.mxu0 0
        %803 = vmatpush1.bf16.xpose.msra.mxu0 0
        %804 = vmatprep.subr.bf16.mxu0 0
        %805 = vmatpush1.bf16.xpose.msra.mxu0 0
        %806 = vmatprep.subr.bf16.mxu0 0
        %807 = vmatpush1.bf16.xpose.msra.mxu0 0
        %808 = vmatprep.subr.bf16.mxu0 0
        %809 = vmatpush1.bf16.xpose.msra.mxu0 0
        %810 = vmatprep.subr.bf16.mxu0 0
        %811 = vmatpush1.bf16.xpose.msra.mxu0 0
        %812 = vmatprep.subr.bf16.mxu0 0
        %813 = vmatpush1.bf16.xpose.msra.mxu0 0
        %814 = vmatprep.subr.bf16.mxu0 0
        %815 = vmatpush1.bf16.xpose.msra.mxu0 0
        %816 = vmatprep.subr.bf16.mxu0 0
        %817 = vmatpush1.bf16.xpose.msra.mxu0 0
        %818 = vmatprep.subr.bf16.mxu0 0
        %819 = vmatpush1.bf16.xpose.msra.mxu0 0
        %820 = vmatprep.subr.bf16.mxu0 0
        %821 = vmatpush1.bf16.xpose.msra.mxu0 0
        %822 = vmatprep.subr.bf16.mxu0 0
        %823 = vmatpush1.bf16.xpose.msra.mxu0 0
        %824 = vmatprep.subr.bf16.mxu0 0
        %825 = vmatpush1.bf16.xpose.msra.mxu0 0
        %826 = vmatprep.mubr.bf16.mxu0 0
        %827 = vmatmul.mubr.bf16.gmra.mrb[0].mxu0 %v789
        %v828 = vpop.f32.mrb[0].mxu0
        %v829 = vadd.f32 0.0, %v828
        %v830 = vpop.f32.mrb[0].mxu0
        %v831 = vpop.f32.mrb[0].mxu0
        %v832 = vpop.f32.mrb[0].mxu0
        %833 = vdwg.mxu0
        %v834 = vsel %vm592, %v829, -inf
        %835 = vmax.xlane.f32.xlu0 %v834
        %v836 = vpop.xlane.xlu0 %835
        %v837 = vsub.f32 %v829, %v836
        %v838 = vmul.f32 %v837, 1.442695
        %v839 = vpow.pop %v838
        %v840 = vsel %vm592, %v839, 0.0
        %841 = vadd.xlane.f32.xlu0 %v840
        %v842 = vpop.xlane.xlu0 %841
        %v843 = vrcp.pop %v842
        %v844 = vmul.f32 %v839, %v843
        %v845 = vpack.c.bf16 %v844, %v844
        %846 = vrot.lane.b32.xlu0 %v783, 56
        %v847 = vpop.permute.xlu0 %846
        %v849 = vsel %vm592, %v845, 0
        %v852 = vsel %vm610, %v847, 0
        %854 = vmatprep.subr.bf16.mxu0 0
        %855 = vmatpush1.bf16.msra.mxu0 %v852
        %856 = vmatprep.subr.bf16.mxu0 0
        %857 = vmatpush1.bf16.msra.mxu0 0
        %858 = vmatprep.subr.bf16.mxu0 0
        %859 = vmatpush1.bf16.msra.mxu0 0
        %860 = vmatprep.subr.bf16.mxu0 0
        %861 = vmatpush1.bf16.msra.mxu0 0
        %862 = vmatprep.subr.bf16.mxu0 0
        %863 = vmatpush1.bf16.msra.mxu0 0
        %864 = vmatprep.subr.bf16.mxu0 0
        %865 = vmatpush1.bf16.msra.mxu0 0
        %866 = vmatprep.subr.bf16.mxu0 0
        %867 = vmatpush1.bf16.msra.mxu0 0
        %868 = vmatprep.subr.bf16.mxu0 0
        %869 = vmatpush1.bf16.msra.mxu0 0
        %870 = vmatprep.subr.bf16.mxu0 0
        %871 = vmatpush1.bf16.msra.mxu0 0
        %872 = vmatprep.subr.bf16.mxu0 0
        %873 = vmatpush1.bf16.msra.mxu0 0
        %874 = vmatprep.subr.bf16.mxu0 0
        %875 = vmatpush1.bf16.msra.mxu0 0
        %876 = vmatprep.subr.bf16.mxu0 0
        %877 = vmatpush1.bf16.msra.mxu0 0
        %878 = vmatprep.subr.bf16.mxu0 0
        %879 = vmatpush1.bf16.msra.mxu0 0
        %880 = vmatprep.subr.bf16.mxu0 0
        %881 = vmatpush1.bf16.msra.mxu0 0
        %882 = vmatprep.subr.bf16.mxu0 0
        %883 = vmatpush1.bf16.msra.mxu0 0
        %884 = vmatprep.subr.bf16.mxu0 0
        %885 = vmatpush1.bf16.msra.mxu0 0
        %886 = vmatprep.mubr.bf16.mxu0 0
        %887 = vmatmul.mubr.bf16.gmra.mrb[0].mxu0 %v849
        %v888 = vpop.f32.mrb[0].mxu0
        %v889 = vadd.f32 0.0, %v888
        %v890 = vpop.f32.mrb[0].mxu0
        %v891 = vpop.f32.mrb[0].mxu0
        %v892 = vpop.f32.mrb[0].mxu0
        %893 = vdwg.mxu0
        %v894 = vpack.c.bf16 %v889, %v889
        %v896 = vunpack.c.l.b16 %v894
        %v897 = vpack.c.b16 %v896, %v896
        %898 = vrot.lane.b32.xlu0 %v897, 8
        %v899 = vpop.permute.xlu0 %898
        %vm901 = vcmask 93248
        %902 = vst.msk [vmem:[#allocation3] sm:$0xf] %vm901, %v899
        %v903 = vld [vmem:[#allocation2] sm:$0xf]
        %v905 = vunpack.c.l.b16 %v903
        %v906 = vpack.c.b16 %v905, %v905
        %907 = vrot.lane.b32.xlu0 %v906, 116
        %v908 = vpop.permute.xlu0 %907
        %909 = vrot.lane.b32.xlu0 %v906, 84
        %v910 = vpop.permute.xlu0 %909
        %v912 = vsel %vm545, %v908, 0
        %v915 = vsel %vm545, %v910, 0
        %917 = vmatprep.subr.bf16.mxu0 0
        %918 = vmatpush1.bf16.xpose.msra.mxu0 %v915
        %919 = vmatprep.subr.bf16.mxu0 0
        %920 = vmatpush1.bf16.xpose.msra.mxu0 0
        %921 = vmatprep.subr.bf16.mxu0 0
        %922 = vmatpush1.bf16.xpose.msra.mxu0 0
        %923 = vmatprep.subr.bf16.mxu0 0
        %924 = vmatpush1.bf16.xpose.msra.mxu0 0
        %925 = vmatprep.subr.bf16.mxu0 0
        %926 = vmatpush1.bf16.xpose.msra.mxu0 0
        %927 = vmatprep.subr.bf16.mxu0 0
        %928 = vmatpush1.bf16.xpose.msra.mxu0 0
        %929 = vmatprep.subr.bf16.mxu0 0
        %930 = vmatpush1.bf16.xpose.msra.mxu0 0
        %931 = vmatprep.subr.bf16.mxu0 0
        %932 = vmatpush1.bf16.xpose.msra.mxu0 0
        %933 = vmatprep.subr.bf16.mxu0 0
        %934 = vmatpush1.bf16.xpose.msra.mxu0 0
        %935 = vmatprep.subr.bf16.mxu0 0
        %936 = vmatpush1.bf16.xpose.msra.mxu0 0
        %937 = vmatprep.subr.bf16.mxu0 0
        %938 = vmatpush1.bf16.xpose.msra.mxu0 0
        %939 = vmatprep.subr.bf16.mxu0 0
        %940 = vmatpush1.bf16.xpose.msra.mxu0 0
        %941 = vmatprep.subr.bf16.mxu0 0
        %942 = vmatpush1.bf16.xpose.msra.mxu0 0
        %943 = vmatprep.subr.bf16.mxu0 0
        %944 = vmatpush1.bf16.xpose.msra.mxu0 0
        %945 = vmatprep.subr.bf16.mxu0 0
        %946 = vmatpush1.bf16.xpose.msra.mxu0 0
        %947 = vmatprep.subr.bf16.mxu0 0
        %948 = vmatpush1.bf16.xpose.msra.mxu0 0
        %949 = vmatprep.mubr.bf16.mxu0 0
        %950 = vmatmul.mubr.bf16.gmra.mrb[0].mxu0 %v912
        %v951 = vpop.f32.mrb[0].mxu0
        %v952 = vadd.f32 0.0, %v951
        %v953 = vpop.f32.mrb[0].mxu0
        %v954 = vpop.f32.mrb[0].mxu0
        %v955 = vpop.f32.mrb[0].mxu0
        %956 = vdwg.mxu0
        %v957 = vsel %vm592, %v952, -inf
        %958 = vmax.xlane.f32.xlu0 %v957
        %v959 = vpop.xlane.xlu0 %958
        %v960 = vsub.f32 %v952, %v959
        %v961 = vmul.f32 %v960, 1.442695
        %v962 = vpow.pop %v961
        %v963 = vsel %vm592, %v962, 0.0
        %964 = vadd.xlane.f32.xlu0 %v963
        %v965 = vpop.xlane.xlu0 %964
        %v966 = vrcp.pop %v965
        %v967 = vmul.f32 %v962, %v966
        %v968 = vpack.c.bf16 %v967, %v967
        %969 = vrot.lane.b32.xlu0 %v906, 52
        %v970 = vpop.permute.xlu0 %969
        %v972 = vsel %vm592, %v968, 0
        %v975 = vsel %vm610, %v970, 0
        %977 = vmatprep.subr.bf16.mxu0 0
        %978 = vmatpush1.bf16.msra.mxu0 %v975
        %979 = vmatprep.subr.bf16.mxu0 0
        %980 = vmatpush1.bf16.msra.mxu0 0
        %981 = vmatprep.subr.bf16.mxu0 0
        %982 = vmatpush1.bf16.msra.mxu0 0
        %983 = vmatprep.subr.bf16.mxu0 0
        %984 = vmatpush1.bf16.msra.mxu0 0
        %985 = vmatprep.subr.bf16.mxu0 0
        %986 = vmatpush1.bf16.msra.mxu0 0
        %987 = vmatprep.subr.bf16.mxu0 0
        %988 = vmatpush1.bf16.msra.mxu0 0
        %989 = vmatprep.subr.bf16.mxu0 0
        %990 = vmatpush1.bf16.msra.mxu0 0
        %991 = vmatprep.subr.bf16.mxu0 0
        %992 = vmatpush1.bf16.msra.mxu0 0
        %993 = vmatprep.subr.bf16.mxu0 0
        %994 = vmatpush1.bf16.msra.mxu0 0
        %995 = vmatprep.subr.bf16.mxu0 0
        %996 = vmatpush1.bf16.msra.mxu0 0
        %997 = vmatprep.subr.bf16.mxu0 0
        %998 = vmatpush1.bf16.msra.mxu0 0
        %999 = vmatprep.subr.bf16.mxu0 0
        %1000 = vmatpush1.bf16.msra.mxu0 0
        %1001 = vmatprep.subr.bf16.mxu0 0
        %1002 = vmatpush1.bf16.msra.mxu0 0
        %1003 = vmatprep.subr.bf16.mxu0 0
        %1004 = vmatpush1.bf16.msra.mxu0 0
        %1005 = vmatprep.subr.bf16.mxu0 0
        %1006 = vmatpush1.bf16.msra.mxu0 0
        %1007 = vmatprep.subr.bf16.mxu0 0
        %1008 = vmatpush1.bf16.msra.mxu0 0
        %1009 = vmatprep.mubr.bf16.mxu0 0
        %1010 = vmatmul.mubr.bf16.gmra.mrb[0].mxu0 %v972
        %v1011 = vpop.f32.mrb[0].mxu0
        %v1012 = vadd.f32 0.0, %v1011
        %v1013 = vpop.f32.mrb[0].mxu0
        %v1014 = vpop.f32.mrb[0].mxu0
        %v1015 = vpop.f32.mrb[0].mxu0
        %1016 = vdwg.mxu0
        %v1017 = vpack.c.bf16 %v1012, %v1012
        %v1019 = vunpack.c.l.b16 %v1017
        %v1020 = vpack.c.b16 %v1019, %v1019
        %1021 = vrot.lane.b32.xlu0 %v1020, 12
        %v1022 = vpop.permute.xlu0 %1021
        %vm1024 = vcmask 126048
        %1025 = vst.msk [vmem:[#allocation3] sm:$0xf] %vm1024, %v1022
        %v1026 = vld [vmem:[#allocation2] sm:$0xf]
        %v1028 = vunpack.c.l.b16 %v1026
        %v1029 = vpack.c.b16 %v1028, %v1028
        %1030 = vrot.lane.b32.xlu0 %v1029, 112
        %v1031 = vpop.permute.xlu0 %1030
        %1032 = vrot.lane.b32.xlu0 %v1029, 80
        %v1033 = vpop.permute.xlu0 %1032
        %v1035 = vsel %vm545, %v1031, 0
        %v1038 = vsel %vm545, %v1033, 0
        %1040 = vmatprep.subr.bf16.mxu0 0
        %1041 = vmatpush1.bf16.xpose.msra.mxu0 %v1038
        %1042 = vmatprep.subr.bf16.mxu0 0
        %1043 = vmatpush1.bf16.xpose.msra.mxu0 0
        %1044 = vmatprep.subr.bf16.mxu0 0
        %1045 = vmatpush1.bf16.xpose.msra.mxu0 0
        %1046 = vmatprep.subr.bf16.mxu0 0
        %1047 = vmatpush1.bf16.xpose.msra.mxu0 0
        %1048 = vmatprep.subr.bf16.mxu0 0
        %1049 = vmatpush1.bf16.xpose.msra.mxu0 0
        %1050 = vmatprep.subr.bf16.mxu0 0
        %1051 = vmatpush1.bf16.xpose.msra.mxu0 0
        %1052 = vmatprep.subr.bf16.mxu0 0
        %1053 = vmatpush1.bf16.xpose.msra.mxu0 0
        %1054 = vmatprep.subr.bf16.mxu0 0
        %1055 = vmatpush1.bf16.xpose.msra.mxu0 0
        %1056 = vmatprep.subr.bf16.mxu0 0
        %1057 = vmatpush1.bf16.xpose.msra.mxu0 0
        %1058 = vmatprep.subr.bf16.mxu0 0
        %1059 = vmatpush1.bf16.xpose.msra.mxu0 0
        %1060 = vmatprep.subr.bf16.mxu0 0
        %1061 = vmatpush1.bf16.xpose.msra.mxu0 0
        %1062 = vmatprep.subr.bf16.mxu0 0
        %1063 = vmatpush1.bf16.xpose.msra.mxu0 0
        %1064 = vmatprep.subr.bf16.mxu0 0
        %1065 = vmatpush1.bf16.xpose.msra.mxu0 0
        %1066 = vmatprep.subr.bf16.mxu0 0
        %1067 = vmatpush1.bf16.xpose.msra.mxu0 0
        %1068 = vmatprep.subr.bf16.mxu0 0
        %1069 = vmatpush1.bf16.xpose.msra.mxu0 0
        %1070 = vmatprep.subr.bf16.mxu0 0
        %1071 = vmatpush1.bf16.xpose.msra.mxu0 0
        %1072 = vmatprep.mubr.bf16.mxu0 0
        %1073 = vmatmul.mubr.bf16.gmra.mrb[0].mxu0 %v1035
        %v1074 = vpop.f32.mrb[0].mxu0
        %v1075 = vadd.f32 0.0, %v1074
        %v1076 = vpop.f32.mrb[0].mxu0
        %v1077 = vpop.f32.mrb[0].mxu0
        %v1078 = vpop.f32.mrb[0].mxu0
        %1079 = vdwg.mxu0
        %v1080 = vsel %vm592, %v1075, -inf
        %1081 = vmax.xlane.f32.xlu0 %v1080
        %v1082 = vpop.xlane.xlu0 %1081
        %v1083 = vsub.f32 %v1075, %v1082
        %v1084 = vmul.f32 %v1083, 1.442695
        %v1085 = vpow.pop %v1084
        %v1086 = vsel %vm592, %v1085, 0.0
        %1087 = vadd.xlane.f32.xlu0 %v1086
        %v1088 = vpop.xlane.xlu0 %1087
        %v1089 = vrcp.pop %v1088
        %v1090 = vmul.f32 %v1085, %v1089
        %v1091 = vpack.c.bf16 %v1090, %v1090
        %1092 = vrot.lane.b32.xlu0 %v1029, 48
        %v1093 = vpop.permute.xlu0 %1092
        %v1095 = vsel %vm592, %v1091, 0
        %v1098 = vsel %vm610, %v1093, 0
        %1100 = vmatprep.subr.bf16.mxu0 0
        %1101 = vmatpush1.bf16.msra.mxu0 %v1098
        %1102 = vmatprep.subr.bf16.mxu0 0
        %1103 = vmatpush1.bf16.msra.mxu0 0
        %1104 = vmatprep.subr.bf16.mxu0 0
        %1105 = vmatpush1.bf16.msra.mxu0 0
        %1106 = vmatprep.subr.bf16.mxu0 0
        %1107 = vmatpush1.bf16.msra.mxu0 0
        %1108 = vmatprep.subr.bf16.mxu0 0
        %1109 = vmatpush1.bf16.msra.mxu0 0
        %1110 = vmatprep.subr.bf16.mxu0 0
        %1111 = vmatpush1.bf16.msra.mxu0 0
        %1112 = vmatprep.subr.bf16.mxu0 0
        %1113 = vmatpush1.bf16.msra.mxu0 0
        %1114 = vmatprep.subr.bf16.mxu0 0
        %1115 = vmatpush1.bf16.msra.mxu0 0
        %1116 = vmatprep.subr.bf16.mxu0 0
        %1117 = vmatpush1.bf16.msra.mxu0 0
        %1118 = vmatprep.subr.bf16.mxu0 0
        %1119 = vmatpush1.bf16.msra.mxu0 0
        %1120 = vmatprep.subr.bf16.mxu0 0
        %1121 = vmatpush1.bf16.msra.mxu0 0
        %1122 = vmatprep.subr.bf16.mxu0 0
        %1123 = vmatpush1.bf16.msra.mxu0 0
        %1124 = vmatprep.subr.bf16.mxu0 0
        %1125 = vmatpush1.bf16.msra.mxu0 0
        %1126 = vmatprep.subr.bf16.mxu0 0
        %1127 = vmatpush1.bf16.msra.mxu0 0
        %1128 = vmatprep.subr.bf16.mxu0 0
        %1129 = vmatpush1.bf16.msra.mxu0 0
        %1130 = vmatprep.subr.bf16.mxu0 0
        %1131 = vmatpush1.bf16.msra.mxu0 0
        %1132 = vmatprep.mubr.bf16.mxu0 0
        %1133 = vmatmul.mubr.bf16.gmra.mrb[0].mxu0 %v1095
        %v1134 = vpop.f32.mrb[0].mxu0
        %v1135 = vadd.f32 0.0, %v1134
        %v1136 = vpop.f32.mrb[0].mxu0
        %v1137 = vpop.f32.mrb[0].mxu0
        %v1138 = vpop.f32.mrb[0].mxu0
        %1139 = vdwg.mxu0
        %v1140 = vpack.c.bf16 %v1135, %v1135
        %v1142 = vunpack.c.l.b16 %v1140
        %v1143 = vpack.c.b16 %v1142, %v1142
        %1144 = vrot.lane.b32.xlu0 %v1143, 16
        %v1145 = vpop.permute.xlu0 %1144
        %vm1147 = vcmask 158848
        %1148 = vst.msk [vmem:[#allocation3] sm:$0xf] %vm1147, %v1145
        %v1149 = vld [vmem:[#allocation2] sm:$0xf]
        %v1151 = vunpack.c.l.b16 %v1149
        %v1152 = vpack.c.b16 %v1151, %v1151
        %1153 = vrot.lane.b32.xlu0 %v1152, 108
        %v1154 = vpop.permute.xlu0 %1153
        %1155 = vrot.lane.b32.xlu0 %v1152, 76
        %v1156 = vpop.permute.xlu0 %1155
        %v1158 = vsel %vm545, %v1154, 0
        %v1161 = vsel %vm545, %v1156, 0
        %1163 = vmatprep.subr.bf16.mxu0 0
        %1164 = vmatpush1.bf16.xpose.msra.mxu0 %v1161
        %1165 = vmatprep.subr.bf16.mxu0 0
        %1166 = vmatpush1.bf16.xpose.msra.mxu0 0
        %1167 = vmatprep.subr.bf16.mxu0 0
        %1168 = vmatpush1.bf16.xpose.msra.mxu0 0
        %1169 = vmatprep.subr.bf16.mxu0 0
        %1170 = vmatpush1.bf16.xpose.msra.mxu0 0
        %1171 = vmatprep.subr.bf16.mxu0 0
        %1172 = vmatpush1.bf16.xpose.msra.mxu0 0
        %1173 = vmatprep.subr.bf16.mxu0 0
        %1174 = vmatpush1.bf16.xpose.msra.mxu0 0
        %1175 = vmatprep.subr.bf16.mxu0 0
        %1176 = vmatpush1.bf16.xpose.msra.mxu0 0
        %1177 = vmatprep.subr.bf16.mxu0 0
        %1178 = vmatpush1.bf16.xpose.msra.mxu0 0
        %1179 = vmatprep.subr.bf16.mxu0 0
        %1180 = vmatpush1.bf16.xpose.msra.mxu0 0
        %1181 = vmatprep.subr.bf16.mxu0 0
        %1182 = vmatpush1.bf16.xpose.msra.mxu0 0
        %1183 = vmatprep.subr.bf16.mxu0 0
        %1184 = vmatpush1.bf16.xpose.msra.mxu0 0
        %1185 = vmatprep.subr.bf16.mxu0 0
        %1186 = vmatpush1.bf16.xpose.msra.mxu0 0
        %1187 = vmatprep.subr.bf16.mxu0 0
        %1188 = vmatpush1.bf16.xpose.msra.mxu0 0
        %1189 = vmatprep.subr.bf16.mxu0 0
        %1190 = vmatpush1.bf16.xpose.msra.mxu0 0
        %1191 = vmatprep.subr.bf16.mxu0 0
        %1192 = vmatpush1.bf16.xpose.msra.mxu0 0
        %1193 = vmatprep.subr.bf16.mxu0 0
        %1194 = vmatpush1.bf16.xpose.msra.mxu0 0
        %1195 = vmatprep.mubr.bf16.mxu0 0
        %1196 = vmatmul.mubr.bf16.gmra.mrb[0].mxu0 %v1158
        %v1197 = vpop.f32.mrb[0].mxu0
        %v1198 = vadd.f32 0.0, %v1197
        %v1199 = vpop.f32.mrb[0].mxu0
        %v1200 = vpop.f32.mrb[0].mxu0
        %v1201 = vpop.f32.mrb[0].mxu0
        %1202 = vdwg.mxu0
        %v1203 = vsel %vm592, %v1198, -inf
        %1204 = vmax.xlane.f32.xlu0 %v1203
        %v1205 = vpop.xlane.xlu0 %1204
        %v1206 = vsub.f32 %v1198, %v1205
        %v1207 = vmul.f32 %v1206, 1.442695
        %v1208 = vpow.pop %v1207
        %v1209 = vsel %vm592, %v1208, 0.0
        %1210 = vadd.xlane.f32.xlu0 %v1209
        %v1211 = vpop.xlane.xlu0 %1210
        %v1212 = vrcp.pop %v1211
        %v1213 = vmul.f32 %v1208, %v1212
        %v1214 = vpack.c.bf16 %v1213, %v1213
        %1215 = vrot.lane.b32.xlu0 %v1152, 44
        %v1216 = vpop.permute.xlu0 %1215
        %v1218 = vsel %vm592, %v1214, 0
        %v1221 = vsel %vm610, %v1216, 0
        %1223 = vmatprep.subr.bf16.mxu0 0
        %1224 = vmatpush1.bf16.msra.mxu0 %v1221
        %1225 = vmatprep.subr.bf16.mxu0 0
        %1226 = vmatpush1.bf16.msra.mxu0 0
        %1227 = vmatprep.subr.bf16.mxu0 0
        %1228 = vmatpush1.bf16.msra.mxu0 0
        %1229 = vmatprep.subr.bf16.mxu0 0
        %1230 = vmatpush1.bf16.msra.mxu0 0
        %1231 = vmatprep.subr.bf16.mxu0 0
        %1232 = vmatpush1.bf16.msra.mxu0 0
        %1233 = vmatprep.subr.bf16.mxu0 0
        %1234 = vmatpush1.bf16.msra.mxu0 0
        %1235 = vmatprep.subr.bf16.mxu0 0
        %1236 = vmatpush1.bf16.msra.mxu0 0
        %1237 = vmatprep.subr.bf16.mxu0 0
        %1238 = vmatpush1.bf16.msra.mxu0 0
        %1239 = vmatprep.subr.bf16.mxu0 0
        %1240 = vmatpush1.bf16.msra.mxu0 0
        %1241 = vmatprep.subr.bf16.mxu0 0
        %1242 = vmatpush1.bf16.msra.mxu0 0
        %1243 = vmatprep.subr.bf16.mxu0 0
        %1244 = vmatpush1.bf16.msra.mxu0 0
        %1245 = vmatprep.subr.bf16.mxu0 0
        %1246 = vmatpush1.bf16.msra.mxu0 0
        %1247 = vmatprep.subr.bf16.mxu0 0
        %1248 = vmatpush1.bf16.msra.mxu0 0
        %1249 = vmatprep.subr.bf16.mxu0 0
        %1250 = vmatpush1.bf16.msra.mxu0 0
        %1251 = vmatprep.subr.bf16.mxu0 0
        %1252 = vmatpush1.bf16.msra.mxu0 0
        %1253 = vmatprep.subr.bf16.mxu0 0
        %1254 = vmatpush1.bf16.msra.mxu0 0
        %1255 = vmatprep.mubr.bf16.mxu0 0
        %1256 = vmatmul.mubr.bf16.gmra.mrb[0].mxu0 %v1218
        %v1257 = vpop.f32.mrb[0].mxu0
        %v1258 = vadd.f32 0.0, %v1257
        %v1259 = vpop.f32.mrb[0].mxu0
        %v1260 = vpop.f32.mrb[0].mxu0
        %v1261 = vpop.f32.mrb[0].mxu0
        %1262 = vdwg.mxu0
        %v1263 = vpack.c.bf16 %v1258, %v1258
        %v1265 = vunpack.c.l.b16 %v1263
        %v1266 = vpack.c.b16 %v1265, %v1265
        %1267 = vrot.lane.b32.xlu0 %v1266, 20
        %v1268 = vpop.permute.xlu0 %1267
        %vm1270 = vcmask 191648
        %1271 = vst.msk [vmem:[#allocation3] sm:$0xf] %vm1270, %v1268
        %v1272 = vld [vmem:[#allocation2] sm:$0xf]
        %v1274 = vunpack.c.l.b16 %v1272
        %v1275 = vpack.c.b16 %v1274, %v1274
        %1276 = vrot.lane.b32.xlu0 %v1275, 104
        %v1277 = vpop.permute.xlu0 %1276
        %1278 = vrot.lane.b32.xlu0 %v1275, 72
        %v1279 = vpop.permute.xlu0 %1278
        %v1281 = vsel %vm545, %v1277, 0
        %v1284 = vsel %vm545, %v1279, 0
        %1286 = vmatprep.subr.bf16.mxu0 0
        %1287 = vmatpush1.bf16.xpose.msra.mxu0 %v1284
        %1288 = vmatprep.subr.bf16.mxu0 0
        %1289 = vmatpush1.bf16.xpose.msra.mxu0 0
        %1290 = vmatprep.subr.bf16.mxu0 0
        %1291 = vmatpush1.bf16.xpose.msra.mxu0 0
        %1292 = vmatprep.subr.bf16.mxu0 0
        %1293 = vmatpush1.bf16.xpose.msra.mxu0 0
        %1294 = vmatprep.subr.bf16.mxu0 0
        %1295 = vmatpush1.bf16.xpose.msra.mxu0 0
        %1296 = vmatprep.subr.bf16.mxu0 0
        %1297 = vmatpush1.bf16.xpose.msra.mxu0 0
        %1298 = vmatprep.subr.bf16.mxu0 0
        %1299 = vmatpush1.bf16.xpose.msra.mxu0 0
        %1300 = vmatprep.subr.bf16.mxu0 0
        %1301 = vmatpush1.bf16.xpose.msra.mxu0 0
        %1302 = vmatprep.subr.bf16.mxu0 0
        %1303 = vmatpush1.bf16.xpose.msra.mxu0 0
        %1304 = vmatprep.subr.bf16.mxu0 0
        %1305 = vmatpush1.bf16.xpose.msra.mxu0 0
        %1306 = vmatprep.subr.bf16.mxu0 0
        %1307 = vmatpush1.bf16.xpose.msra.mxu0 0
        %1308 = vmatprep.subr.bf16.mxu0 0
        %1309 = vmatpush1.bf16.xpose.msra.mxu0 0
        %1310 = vmatprep.subr.bf16.mxu0 0
        %1311 = vmatpush1.bf16.xpose.msra.mxu0 0
        %1312 = vmatprep.subr.bf16.mxu0 0
        %1313 = vmatpush1.bf16.xpose.msra.mxu0 0
        %1314 = vmatprep.subr.bf16.mxu0 0
        %1315 = vmatpush1.bf16.xpose.msra.mxu0 0
        %1316 = vmatprep.subr.bf16.mxu0 0
        %1317 = vmatpush1.bf16.xpose.msra.mxu0 0
        %1318 = vmatprep.mubr.bf16.mxu0 0
        %1319 = vmatmul.mubr.bf16.gmra.mrb[0].mxu0 %v1281
        %v1320 = vpop.f32.mrb[0].mxu0
        %v1321 = vadd.f32 0.0, %v1320
        %v1322 = vpop.f32.mrb[0].mxu0
        %v1323 = vpop.f32.mrb[0].mxu0
        %v1324 = vpop.f32.mrb[0].mxu0
        %1325 = vdwg.mxu0
        %v1326 = vsel %vm592, %v1321, -inf
        %1327 = vmax.xlane.f32.xlu0 %v1326
        %v1328 = vpop.xlane.xlu0 %1327
        %v1329 = vsub.f32 %v1321, %v1328
        %v1330 = vmul.f32 %v1329, 1.442695
        %v1331 = vpow.pop %v1330
        %v1332 = vsel %vm592, %v1331, 0.0
        %1333 = vadd.xlane.f32.xlu0 %v1332
        %v1334 = vpop.xlane.xlu0 %1333
        %v1335 = vrcp.pop %v1334
        %v1336 = vmul.f32 %v1331, %v1335
        %v1337 = vpack.c.bf16 %v1336, %v1336
        %1338 = vrot.lane.b32.xlu0 %v1275, 40
        %v1339 = vpop.permute.xlu0 %1338
        %v1341 = vsel %vm592, %v1337, 0
        %v1344 = vsel %vm610, %v1339, 0
        %1346 = vmatprep.subr.bf16.mxu0 0
        %1347 = vmatpush1.bf16.msra.mxu0 %v1344
        %1348 = vmatprep.subr.bf16.mxu0 0
        %1349 = vmatpush1.bf16.msra.mxu0 0
        %1350 = vmatprep.subr.bf16.mxu0 0
        %1351 = vmatpush1.bf16.msra.mxu0 0
        %1352 = vmatprep.subr.bf16.mxu0 0
        %1353 = vmatpush1.bf16.msra.mxu0 0
        %1354 = vmatprep.subr.bf16.mxu0 0
        %1355 = vmatpush1.bf16.msra.mxu0 0
        %1356 = vmatprep.subr.bf16.mxu0 0
        %1357 = vmatpush1.bf16.msra.mxu0 0
        %1358 = vmatprep.subr.bf16.mxu0 0
        %1359 = vmatpush1.bf16.msra.mxu0 0
        %1360 = vmatprep.subr.bf16.mxu0 0
        %1361 = vmatpush1.bf16.msra.mxu0 0
        %1362 = vmatprep.subr.bf16.mxu0 0
        %1363 = vmatpush1.bf16.msra.mxu0 0
        %1364 = vmatprep.subr.bf16.mxu0 0
        %1365 = vmatpush1.bf16.msra.mxu0 0
        %1366 = vmatprep.subr.bf16.mxu0 0
        %1367 = vmatpush1.bf16.msra.mxu0 0
        %1368 = vmatprep.subr.bf16.mxu0 0
        %1369 = vmatpush1.bf16.msra.mxu0 0
        %1370 = vmatprep.subr.bf16.mxu0 0
        %1371 = vmatpush1.bf16.msra.mxu0 0
        %1372 = vmatprep.subr.bf16.mxu0 0
        %1373 = vmatpush1.bf16.msra.mxu0 0
        %1374 = vmatprep.subr.bf16.mxu0 0
        %1375 = vmatpush1.bf16.msra.mxu0 0
        %1376 = vmatprep.subr.bf16.mxu0 0
        %1377 = vmatpush1.bf16.msra.mxu0 0
        %1378 = vmatprep.mubr.bf16.mxu0 0
        %1379 = vmatmul.mubr.bf16.gmra.mrb[0].mxu0 %v1341
        %v1380 = vpop.f32.mrb[0].mxu0
        %v1381 = vadd.f32 0.0, %v1380
        %v1382 = vpop.f32.mrb[0].mxu0
        %v1383 = vpop.f32.mrb[0].mxu0
        %v1384 = vpop.f32.mrb[0].mxu0
        %1385 = vdwg.mxu0
        %v1386 = vpack.c.bf16 %v1381, %v1381
        %v1388 = vunpack.c.l.b16 %v1386
        %v1389 = vpack.c.b16 %v1388, %v1388
        %1390 = vrot.lane.b32.xlu0 %v1389, 24
        %v1391 = vpop.permute.xlu0 %1390
        %vm1393 = vcmask 224448
        %1394 = vst.msk [vmem:[#allocation3] sm:$0xf] %vm1393, %v1391
        %v1395 = vld [vmem:[#allocation2] sm:$0xf]
        %v1397 = vunpack.c.l.b16 %v1395
        %v1398 = vpack.c.b16 %v1397, %v1397
        %1399 = vrot.lane.b32.xlu0 %v1398, 100
        %v1400 = vpop.permute.xlu0 %1399
        %1401 = vrot.lane.b32.xlu0 %v1398, 68
        %v1402 = vpop.permute.xlu0 %1401
        %v1404 = vsel %vm545, %v1400, 0
        %v1407 = vsel %vm545, %v1402, 0
        %1409 = vmatprep.subr.bf16.mxu0 0
        %1410 = vmatpush1.bf16.xpose.msra.mxu0 %v1407
        %1411 = vmatprep.subr.bf16.mxu0 0
        %1412 = vmatpush1.bf16.xpose.msra.mxu0 0
        %1413 = vmatprep.subr.bf16.mxu0 0
        %1414 = vmatpush1.bf16.xpose.msra.mxu0 0
        %1415 = vmatprep.subr.bf16.mxu0 0
        %1416 = vmatpush1.bf16.xpose.msra.mxu0 0
        %1417 = vmatprep.subr.bf16.mxu0 0
        %1418 = vmatpush1.bf16.xpose.msra.mxu0 0
        %1419 = vmatprep.subr.bf16.mxu0 0
        %1420 = vmatpush1.bf16.xpose.msra.mxu0 0
        %1421 = vmatprep.subr.bf16.mxu0 0
        %1422 = vmatpush1.bf16.xpose.msra.mxu0 0
        %1423 = vmatprep.subr.bf16.mxu0 0
        %1424 = vmatpush1.bf16.xpose.msra.mxu0 0
        %1425 = vmatprep.subr.bf16.mxu0 0
        %1426 = vmatpush1.bf16.xpose.msra.mxu0 0
        %1427 = vmatprep.subr.bf16.mxu0 0
        %1428 = vmatpush1.bf16.xpose.msra.mxu0 0
        %1429 = vmatprep.subr.bf16.mxu0 0
        %1430 = vmatpush1.bf16.xpose.msra.mxu0 0
        %1431 = vmatprep.subr.bf16.mxu0 0
        %1432 = vmatpush1.bf16.xpose.msra.mxu0 0
        %1433 = vmatprep.subr.bf16.mxu0 0
        %1434 = vmatpush1.bf16.xpose.msra.mxu0 0
        %1435 = vmatprep.subr.bf16.mxu0 0
        %1436 = vmatpush1.bf16.xpose.msra.mxu0 0
        %1437 = vmatprep.subr.bf16.mxu0 0
        %1438 = vmatpush1.bf16.xpose.msra.mxu0 0
        %1439 = vmatprep.subr.bf16.mxu0 0
        %1440 = vmatpush1.bf16.xpose.msra.mxu0 0
        %1441 = vmatprep.mubr.bf16.mxu0 0
        %1442 = vmatmul.mubr.bf16.gmra.mrb[0].mxu0 %v1404
        %v1443 = vpop.f32.mrb[0].mxu0
        %v1444 = vadd.f32 0.0, %v1443
        %v1445 = vpop.f32.mrb[0].mxu0
        %v1446 = vpop.f32.mrb[0].mxu0
        %v1447 = vpop.f32.mrb[0].mxu0
        %1448 = vdwg.mxu0
        %v1449 = vsel %vm592, %v1444, -inf
        %1450 = vmax.xlane.f32.xlu0 %v1449
        %v1451 = vpop.xlane.xlu0 %1450
        %v1452 = vsub.f32 %v1444, %v1451
        %v1453 = vmul.f32 %v1452, 1.442695
        %v1454 = vpow.pop %v1453
        %v1455 = vsel %vm592, %v1454, 0.0
        %1456 = vadd.xlane.f32.xlu0 %v1455
        %v1457 = vpop.xlane.xlu0 %1456
        %v1458 = vrcp.pop %v1457
        %v1459 = vmul.f32 %v1454, %v1458
        %v1460 = vpack.c.bf16 %v1459, %v1459
        %1461 = vrot.lane.b32.xlu0 %v1398, 36
        %v1462 = vpop.permute.xlu0 %1461
        %v1464 = vsel %vm592, %v1460, 0
        %v1467 = vsel %vm610, %v1462, 0
        %1469 = vmatprep.subr.bf16.mxu0 0
        %1470 = vmatpush1.bf16.msra.mxu0 %v1467
        %1471 = vmatprep.subr.bf16.mxu0 0
        %1472 = vmatpush1.bf16.msra.mxu0 0
        %1473 = vmatprep.subr.bf16.mxu0 0
        %1474 = vmatpush1.bf16.msra.mxu0 0
        %1475 = vmatprep.subr.bf16.mxu0 0
        %1476 = vmatpush1.bf16.msra.mxu0 0
        %1477 = vmatprep.subr.bf16.mxu0 0
        %1478 = vmatpush1.bf16.msra.mxu0 0
        %1479 = vmatprep.subr.bf16.mxu0 0
        %1480 = vmatpush1.bf16.msra.mxu0 0
        %1481 = vmatprep.subr.bf16.mxu0 0
        %1482 = vmatpush1.bf16.msra.mxu0 0
        %1483 = vmatprep.subr.bf16.mxu0 0
        %1484 = vmatpush1.bf16.msra.mxu0 0
        %1485 = vmatprep.subr.bf16.mxu0 0
        %1486 = vmatpush1.bf16.msra.mxu0 0
        %1487 = vmatprep.subr.bf16.mxu0 0
        %1488 = vmatpush1.bf16.msra.mxu0 0
        %1489 = vmatprep.subr.bf16.mxu0 0
        %1490 = vmatpush1.bf16.msra.mxu0 0
        %1491 = vmatprep.subr.bf16.mxu0 0
        %1492 = vmatpush1.bf16.msra.mxu0 0
        %1493 = vmatprep.subr.bf16.mxu0 0
        %1494 = vmatpush1.bf16.msra.mxu0 0
        %1495 = vmatprep.subr.bf16.mxu0 0
        %1496 = vmatpush1.bf16.msra.mxu0 0
        %1497 = vmatprep.subr.bf16.mxu0 0
        %1498 = vmatpush1.bf16.msra.mxu0 0
        %1499 = vmatprep.subr.bf16.mxu0 0
        %1500 = vmatpush1.bf16.msra.mxu0 0
        %1501 = vmatprep.mubr.bf16.mxu0 0
        %1502 = vmatmul.mubr.bf16.gmra.mrb[0].mxu0 %v1464
        %v1503 = vpop.f32.mrb[0].mxu0
        %v1504 = vadd.f32 0.0, %v1503
        %v1505 = vpop.f32.mrb[0].mxu0
        %v1506 = vpop.f32.mrb[0].mxu0
        %v1507 = vpop.f32.mrb[0].mxu0
        %1508 = vdwg.mxu0
        %v1509 = vpack.c.bf16 %v1504, %v1504
        %v1511 = vunpack.c.l.b16 %v1509
        %v1512 = vpack.c.b16 %v1511, %v1511
        %1513 = vrot.lane.b32.xlu0 %v1512, 28
        %v1514 = vpop.permute.xlu0 %1513
        %vm1516 = vcmask 257248
        %1517 = vst.msk [vmem:[#allocation3] sm:$0xf] %vm1516, %v1514
        %v1518 = vld [vmem:[#allocation3] sm:$0xf]
        %v1519 = vld [vmem:[%s5] sm:$0xf]
        %v1520 = vld [vmem:[%s5 + $0x4] sm:$0xf]
        %v1521 = vld [vmem:[%s5 + $0x8] sm:$0xf]
        %v1522 = vld [vmem:[%s5 + $0xc] sm:$0xf]
        %v1523 = vld [vmem:[%s6] sm:$0x1]
        %v1525 = vlaneseq
        %v1526 = vshrl.u32 %v1525, 7
        %v1527 = vsub.s32 0, %v1526
        %v1528 = vrot.slane %v1523, %v1527
        %v1534 = vunpack.c.l.b16 %v1519
        %v1535 = vunpack.c.l.b16 %v1520
        %v1536 = vunpack.c.l.b16 %v1521
        %v1537 = vunpack.c.l.b16 %v1522
        %v1538 = vpack.c.b16 %v1535, %v1534
        %v1539 = vpack.c.b16 %v1537, %v1536
        %v1543 = vsel %vm440, %v1518, 0
        %1545 = vmatprep.subr.bf16.mxu0 0
        %1546 = vmatpush1.bf16.msra.mxu0 %v1538
        %1547 = vmatprep.subr.bf16.mxu0 0
        %1548 = vmatpush1.bf16.msra.mxu0 %v1539
        %1549 = vmatprep.subr.bf16.mxu0 0
        %1550 = vmatpush1.bf16.msra.mxu0 0
        %1551 = vmatprep.subr.bf16.mxu0 0
        %1552 = vmatpush1.bf16.msra.mxu0 0
        %1553 = vmatprep.subr.bf16.mxu0 0
        %1554 = vmatpush1.bf16.msra.mxu0 0
        %1555 = vmatprep.subr.bf16.mxu0 0
        %1556 = vmatpush1.bf16.msra.mxu0 0
        %1557 = vmatprep.subr.bf16.mxu0 0
        %1558 = vmatpush1.bf16.msra.mxu0 0
        %1559 = vmatprep.subr.bf16.mxu0 0
        %1560 = vmatpush1.bf16.msra.mxu0 0
        %1561 = vmatprep.subr.bf16.mxu0 0
        %1562 = vmatpush1.bf16.msra.mxu0 0
        %1563 = vmatprep.subr.bf16.mxu0 0
        %1564 = vmatpush1.bf16.msra.mxu0 0
        %1565 = vmatprep.subr.bf16.mxu0 0
        %1566 = vmatpush1.bf16.msra.mxu0 0
        %1567 = vmatprep.subr.bf16.mxu0 0
        %1568 = vmatpush1.bf16.msra.mxu0 0
        %1569 = vmatprep.subr.bf16.mxu0 0
        %1570 = vmatpush1.bf16.msra.mxu0 0
        %1571 = vmatprep.subr.bf16.mxu0 0
        %1572 = vmatpush1.bf16.msra.mxu0 0
        %1573 = vmatprep.subr.bf16.mxu0 0
        %1574 = vmatpush1.bf16.msra.mxu0 0
        %1575 = vmatprep.subr.bf16.mxu0 0
        %1576 = vmatpush1.bf16.msra.mxu0 0
        %1577 = vmatprep.mubr.bf16.mxu0 0
        %1578 = vmatmul.mubr.bf16.gmra.mrb[0].mxu0 %v1543
        %v1579 = vpop.f32.mrb[0].mxu0
        %v1580 = vadd.f32 %v1528, %v1579
        %v1581 = vpop.f32.mrb[0].mxu0
        %v1582 = vpop.f32.mrb[0].mxu0
        %v1583 = vpop.f32.mrb[0].mxu0
        %1584 = vdwg.mxu0
        %v1585 = vadd.f32 %v437, %v1580
        %v1586 = vld [vmem:[%s7] sm:$0x1]
        %v1587 = vld [vmem:[%s8] sm:$0x1]
        %v1588 = vsel %vm440, %v1585, 0.0
        %1589 = vadd.xlane.f32.xlu0 %v1588
        %v1590 = vpop.xlane.xlu0 %1589
        %v1591 = vmul.f32 %v1590, %v444
        %v1592 = vsub.f32 %v1585, %v1591
        %v1593 = vmul.f32 %v1592, %v1592
        %v1594 = vsel %vm440, %v1593, 0.0
        %1595 = vadd.xlane.f32.xlu0 %v1594
        %v1596 = vpop.xlane.xlu0 %1595
        %v1597 = vmul.f32 %v1596, %v444
        %v1598 = vadd.f32 %v1597, 1e-06
        %v1599 = vrsqrt.pop %v1598
        %v1600 = vmul.f32 %v1592, %v1599
        %v1602 = vlaneseq
        %v1603 = vshrl.u32 %v1602, 7
        %v1604 = vsub.s32 0, %v1603
        %v1605 = vrot.slane %v1586, %v1604
        %v1607 = vmul.f32 %v1600, %v1605
        %v1609 = vlaneseq
        %v1610 = vshrl.u32 %v1609, 7
        %v1611 = vsub.s32 0, %v1610
        %v1612 = vrot.slane %v1587, %v1611
        %v1614 = vadd.f32 %v1607, %v1612
        %v1615 = vpack.c.bf16 %v1614, %v1614
        %v1616 = vld [vmem:[%s9] sm:$0xf]
        %v1617 = vld [vmem:[%s9 + $0x4] sm:$0xf]
        %v1618 = vld [vmem:[%s9 + $0x8] sm:$0xf]
        %v1619 = vld [vmem:[%s9 + $0xc] sm:$0xf]
        %v1620 = vld [vmem:[%s10] sm:$0x1]
        %v1622 = vlaneseq
        %v1623 = vshrl.u32 %v1622, 7
        %v1624 = vsub.s32 0, %v1623
        %v1625 = vrot.slane %v1620, %v1624
        %v1631 = vunpack.c.l.b16 %v1616
        %v1632 = vunpack.c.l.b16 %v1617
        %v1633 = vunpack.c.l.b16 %v1618
        %v1634 = vunpack.c.l.b16 %v1619
        %v1635 = vpack.c.b16 %v1632, %v1631
        %v1636 = vpack.c.b16 %v1634, %v1633
        %v1640 = vsel %vm440, %v1615, 0
        %1642 = vmatprep.subr.bf16.mxu0 0
        %1643 = vmatpush1.bf16.msra.mxu0 %v1635
        %1644 = vmatprep.subr.bf16.mxu0 0
        %1645 = vmatpush1.bf16.msra.mxu0 %v1636
        %1646 = vmatprep.subr.bf16.mxu0 0
        %1647 = vmatpush1.bf16.msra.mxu0 0
        %1648 = vmatprep.subr.bf16.mxu0 0
        %1649 = vmatpush1.bf16.msra.mxu0 0
        %1650 = vmatprep.subr.bf16.mxu0 0
        %1651 = vmatpush1.bf16.msra.mxu0 0
        %1652 = vmatprep.subr.bf16.mxu0 0
        %1653 = vmatpush1.bf16.msra.mxu0 0
        %1654 = vmatprep.subr.bf16.mxu0 0
        %1655 = vmatpush1.bf16.msra.mxu0 0
        %1656 = vmatprep.subr.bf16.mxu0 0
        %1657 = vmatpush1.bf16.msra.mxu0 0
        %1658 = vmatprep.subr.bf16.mxu0 0
        %1659 = vmatpush1.bf16.msra.mxu0 0
        %1660 = vmatprep.subr.bf16.mxu0 0
        %1661 = vmatpush1.bf16.msra.mxu0 0
        %1662 = vmatprep.subr.bf16.mxu0 0
        %1663 = vmatpush1.bf16.msra.mxu0 0
        %1664 = vmatprep.subr.bf16.mxu0 0
        %1665 = vmatpush1.bf16.msra.mxu0 0
        %1666 = vmatprep.subr.bf16.mxu0 0
        %1667 = vmatpush1.bf16.msra.mxu0 0
        %1668 = vmatprep.subr.bf16.mxu0 0
        %1669 = vmatpush1.bf16.msra.mxu0 0
        %1670 = vmatprep.subr.bf16.mxu0 0
        %1671 = vmatpush1.bf16.msra.mxu0 0
        %1672 = vmatprep.subr.bf16.mxu0 0
        %1673 = vmatpush1.bf16.msra.mxu0 0
        %1674 = vmatprep.mubr.bf16.mxu0 0
        %1675 = vmatmul.mubr.bf16.gmra.mrb[0].mxu0 %v1640
        %v1676 = vpop.f32.mrb[0].mxu0
        %v1677 = vadd.f32 %v1625, %v1676
        %v1678 = vpop.f32.mrb[0].mxu0
        %v1679 = vpop.f32.mrb[0].mxu0
        %v1680 = vpop.f32.mrb[0].mxu0
        %1681 = vdwg.mxu0
        %v1682 = vmul.f32 %v1677, 0.5
        %v1683 = vmul.f32 %v1677, 0.044715
        %v1684 = vmul.f32 %v1683, %v1677
        %v1685 = vmul.f32 %v1684, %v1677
        %v1686 = vadd.f32 %v1677, %v1685
        %v1687 = vmul.f32 %v1686, 0.7978846
        %v1688 = vtanh.pop %v1687
        %v1689 = vadd.f32 %v1688, 1.0
        %v1690 = vmul.f32 %v1682, %v1689
        %v1691 = vpack.c.bf16 %v1690, %v1690
        %v1692 = vld [vmem:[%s11] sm:$0xf]
        %v1693 = vld [vmem:[%s11 + $0x4] sm:$0xf]
        %v1694 = vld [vmem:[%s11 + $0x8] sm:$0xf]
        %v1695 = vld [vmem:[%s11 + $0xc] sm:$0xf]
        %v1696 = vld [vmem:[%s11 + $0x10] sm:$0xf]
        %v1697 = vld [vmem:[%s11 + $0x14] sm:$0xf]
        %v1698 = vld [vmem:[%s11 + $0x18] sm:$0xf]
        %v1699 = vld [vmem:[%s11 + $0x1c] sm:$0xf]
        %v1700 = vld [vmem:[%s11 + $0x20] sm:$0xf]
        %v1701 = vld [vmem:[%s11 + $0x24] sm:$0xf]
        %v1702 = vld [vmem:[%s11 + $0x28] sm:$0xf]
        %v1703 = vld [vmem:[%s11 + $0x2c] sm:$0xf]
        %v1704 = vld [vmem:[%s11 + $0x30] sm:$0xf]
        %v1705 = vld [vmem:[%s11 + $0x34] sm:$0xf]
        %v1706 = vld [vmem:[%s11 + $0x38] sm:$0xf]
        %v1707 = vld [vmem:[%s11 + $0x3c] sm:$0xf]
        %v1708 = vld [vmem:[%s12] sm:$0x1]
        %v1710 = vlaneseq
        %v1711 = vshrl.u32 %v1710, 7
        %v1712 = vsub.s32 0, %v1711
        %v1713 = vrot.slane %v1708, %v1712
        %v1731 = vunpack.c.l.b16 %v1692
        %v1732 = vunpack.c.l.b16 %v1693
        %v1733 = vunpack.c.l.b16 %v1694
        %v1734 = vunpack.c.l.b16 %v1695
        %v1735 = vunpack.c.l.b16 %v1696
        %v1736 = vunpack.c.l.b16 %v1697
        %v1737 = vunpack.c.l.b16 %v1698
        %v1738 = vunpack.c.l.b16 %v1699
        %v1739 = vunpack.c.l.b16 %v1700
        %v1740 = vunpack.c.l.b16 %v1701
        %v1741 = vunpack.c.l.b16 %v1702
        %v1742 = vunpack.c.l.b16 %v1703
        %v1743 = vunpack.c.l.b16 %v1704
        %v1744 = vunpack.c.l.b16 %v1705
        %v1745 = vunpack.c.l.b16 %v1706
        %v1746 = vunpack.c.l.b16 %v1707
        %v1747 = vpack.c.b16 %v1732, %v1731
        %v1748 = vpack.c.b16 %v1734, %v1733
        %v1749 = vpack.c.b16 %v1736, %v1735
        %v1750 = vpack.c.b16 %v1738, %v1737
        %v1751 = vpack.c.b16 %v1740, %v1739
        %v1752 = vpack.c.b16 %v1742, %v1741
        %v1753 = vpack.c.b16 %v1744, %v1743
        %v1754 = vpack.c.b16 %v1746, %v1745
        %1763 = vmatprep.subr.bf16.mxu0 0
        %1764 = vmatpush1.bf16.msra.mxu0 %v1747
        %1765 = vmatprep.subr.bf16.mxu0 0
        %1766 = vmatpush1.bf16.msra.mxu0 %v1748
        %1767 = vmatprep.subr.bf16.mxu0 0
        %1768 = vmatpush1.bf16.msra.mxu0 %v1749
        %1769 = vmatprep.subr.bf16.mxu0 0
        %1770 = vmatpush1.bf16.msra.mxu0 %v1750
        %1771 = vmatprep.subr.bf16.mxu0 0
        %1772 = vmatpush1.bf16.msra.mxu0 %v1751
        %1773 = vmatprep.subr.bf16.mxu0 0
        %1774 = vmatpush1.bf16.msra.mxu0 %v1752
        %1775 = vmatprep.subr.bf16.mxu0 0
        %1776 = vmatpush1.bf16.msra.mxu0 %v1753
        %1777 = vmatprep.subr.bf16.mxu0 0
        %1778 = vmatpush1.bf16.msra.mxu0 %v1754
        %1779 = vmatprep.subr.bf16.mxu0 0
        %1780 = vmatpush1.bf16.msra.mxu0 0
        %1781 = vmatprep.subr.bf16.mxu0 0
        %1782 = vmatpush1.bf16.msra.mxu0 0
        %1783 = vmatprep.subr.bf16.mxu0 0
        %1784 = vmatpush1.bf16.msra.mxu0 0
        %1785 = vmatprep.subr.bf16.mxu0 0
        %1786 = vmatpush1.bf16.msra.mxu0 0
        %1787 = vmatprep.subr.bf16.mxu0 0
        %1788 = vmatpush1.bf16.msra.mxu0 0
        %1789 = vmatprep.subr.bf16.mxu0 0
        %1790 = vmatpush1.bf16.msra.mxu0 0
        %1791 = vmatprep.subr.bf16.mxu0 0
        %1792 = vmatpush1.bf16.msra.mxu0 0
        %1793 = vmatprep.subr.bf16.mxu0 0
        %1794 = vmatpush1.bf16.msra.mxu0 0
        %1795 = vmatprep.mubr.bf16.mxu0 0
        %1796 = vmatmul.mubr.bf16.gmra.mrb[0].mxu0 %v1691
        %v1797 = vpop.f32.mrb[0].mxu0
        %v1798 = vadd.f32 %v1713, %v1797
        %v1799 = vpop.f32.mrb[0].mxu0
        %v1800 = vpop.f32.mrb[0].mxu0
        %v1801 = vpop.f32.mrb[0].mxu0
        %1802 = vdwg.mxu0
        %v1803 = vadd.f32 %v1585, %v1798
        %1804 = vst.msk [vmem:[%s431] sm:$0xff] %vm440, %v1803
        %s1805 = sand.u32 %s313, 1
        %s1806 = scalar_lea.sflag [#allocation5], %s1805
        %s1807 = sand.u32 %s313, 1
        %s1808 = smul.addr %s1807, 8
        %s1809 = scalar_lea.vmem [#allocation4], %s1808
        // Predicated region
        $region73: #{tpu_custom_call.1} parent=71 // pred_check
          %p1810 = pneg %p323
        $region74: #{tpu_custom_call.1} parent=71 // pred_check_branch
          %1812 = sbr.rel (%p1810) target = $region76
        $region75: #{tpu_custom_call.1} parent=71 // pred_region
          %s1814 = ssub.s32 128, 128
          %1815 = vsyncadd %s1806, %s1814
          %s1816 = smul.addr %s27, 128
          %s1817 = scalar_lea.hbm %s13, %s1816
          %s1819 = sshll.u32 %s1809, 4
          %s1820 = int_to_ptr.vmem [resolvable:$true] %s1819
          %1822 = dma.vmem_to_hbm [thread:$0]  %s1820, 128, %s1817, %s1806
        $region76: #{tpu_custom_call.1} parent=71 // pred_fallthru
          _
      $region72: #{tpu_custom_call.1} parent=5 // pred_fallthru
        _
      %p1823 = scmp.le.s32.totalorder 2, %s22
      // Predicated region
      $region77: #{tpu_custom_call.1} parent=5 // pred_check
        %p1824 = pneg %p1823
      $region78: #{tpu_custom_call.1} parent=5 // pred_check_branch
        %1826 = sbr.rel (%p1824) target = $region80
      $region79: #{tpu_custom_call.1} parent=5 // pred_region
        %s1827 = ssub.s32 %s22, 2
        // Predicated region
        $region81: #{tpu_custom_call.1} parent=79 // pred_check
          %p1828 = pneg %p329
        $region82: #{tpu_custom_call.1} parent=79 // pred_check_branch
          %1830 = sbr.rel (%p1828) target = $region84
        $region83: #{tpu_custom_call.1} parent=79 // pred_region
          %s1831 = sand.u32 %s314, 1
          %s1832 = scalar_lea.sflag [#allocation5], %s1831
          %s1833 = sand.u32 %s314, 1
          %s1834 = smul.addr %s1833, 8
          %s1835 = scalar_lea.vmem [#allocation4], %s1834
          %1836 = dma.done %s1832, 128
        $region84: #{tpu_custom_call.1} parent=79 // pred_fallthru
          _
      $region80: #{tpu_custom_call.1} parent=5 // pred_fallthru
        _
    $region6: #{tpu_custom_call.1} parent=1 // loop_footer
      %s26 = sadd.s32 1, %s22
    $region7: #{tpu_custom_call.1} parent=1 // loop_footer_branch
      %21 = sbr.rel target = $region3
    $region8: #{tpu_custom_call.1} parent=1 // loop_exit
      _
    %1837 = vsyncpa [#allocation5], 1
    %s1838 = scalar_lea.sflag [#allocation5], 1
    %1839 = vsyncpa %s1838, 1

</llo_original>
